<compile_context>
chip_gen: v5e
topology: v5e:2x2
jax: 0.10.0
libtpu: 0.0.40
codegen_flags: <defaults>
</compile_context>

<pallas_src>
import functools

import jax
import jax.numpy as jnp
from jax.experimental import pallas as pl
from jax.experimental.pallas import tpu as pltpu


def _sigmoid(z):
    # exp -> EUP, approx reciprocal -> EUP (vrcp): keeps the gate epilogue off the VALU.
    return pl.reciprocal(1.0 + jnp.exp(-z), approx=True)


def _bilstm_kernel(
    # inputs
    xf_ref, xb_ref, len_ref,
    w_f_ref, b_f_ref, w_b_ref, b_b_ref,
    init_ref, wfc_ref,
    # output
    out_ref,
    # scratch (persists across grid steps -> recurrence carry)
    *scratch,
    hidden_dim, time_block, return_seq,
):
    D = hidden_dim
    TT = time_block
    g = pl.program_id(0)

    if return_seq:
        h_f, c_f, h_b, c_b = scratch
    else:
        h_f, c_f, h_b, c_b, last_f, last_b = scratch

    @pl.when(g == 0)
    def _init():
        h_f[...] = jnp.broadcast_to(init_ref[0:1, :], h_f.shape)
        c_f[...] = jnp.broadcast_to(init_ref[1:2, :], c_f.shape)
        h_b[...] = jnp.broadcast_to(init_ref[2:3, :], h_b.shape)
        c_b[...] = jnp.broadcast_to(init_ref[3:4, :], c_b.shape)
        if not return_seq:
            last_f[...] = jnp.zeros_like(last_f)
            last_b[...] = jnp.zeros_like(last_b)

    # VMEM-resident weights (constant index_maps -> DMA'd once for the whole run).
    w_f = w_f_ref[...]          # [2D, 4D] compute dtype (bf16 by default)
    w_b = w_b_ref[...]
    b_f = b_f_ref[...]          # [1, 4D]  f32
    b_b = b_b_ref[...]
    wfc = wfc_ref[...]          # [2D, D]  compute dtype

    def lstm_step(x_t, h_prev, c_prev, w, b):
        # Fused [x_t ; h_prev] @ [W_ih^T ; W_hh^T]: single K=2D MXU pass per step,
        # PyTorch gate order (i | f | g | o), f32 accumulation.
        xin = jnp.concatenate([x_t, h_prev.astype(x_t.dtype)], axis=-1)
        gates = jnp.dot(xin, w, preferred_element_type=jnp.float32) + b
        i_g = _sigmoid(gates[:, 0:D])
        f_g = _sigmoid(gates[:, D:2 * D])
        g_g = jnp.tanh(gates[:, 2 * D:3 * D])
        o_g = _sigmoid(gates[:, 3 * D:4 * D])
        c_new = f_g * c_prev + i_g * g_g
        h_new = o_g * jnp.tanh(c_new)
        return h_new, c_new

    hf, cf = h_f[...], c_f[...]
    hb, cb = h_b[...], c_b[...]
    if not return_seq:
        lf, lb = last_f[...], last_b[...]
        lens = len_ref[...]                          # [B, 1] int32

    for k in range(TT):                              # unrolled inner time loop
        hf, cf = lstm_step(xf_ref[k], hf, cf, w_f, b_f)
        hb, cb = lstm_step(xb_ref[k], hb, cb, w_b, b_b)
        if return_seq:
            # Fused cat([h_f, h_b], -1) @ fc_w.T : one K=2D matmul, no concat in HBM.
            h_cat = jnp.concatenate([hf, hb], axis=-1).astype(wfc.dtype)
            out_ref[k] = jnp.dot(
                h_cat, wfc, preferred_element_type=jnp.float32
            ).astype(out_ref.dtype)
        else:
            # Keep the hidden states seen at global step t == length for each row.
            # (Rows with length == 0 keep the zero init -- degenerate case.)
            t_global = g * TT + (k + 1)
            is_last = lens == t_global               # [B, 1] bool
            lf = jnp.where(is_last, hf, lf)
            lb = jnp.where(is_last, hb, lb)

    h_f[...] = hf
    c_f[...] = cf
    h_b[...] = hb
    c_b[...] = cb

    if not return_seq:
        last_f[...] = lf
        last_b[...] = lb

        @pl.when(g == pl.num_programs(0) - 1)
        def _finalize():
            h_cat = jnp.concatenate([lf, lb], axis=-1).astype(wfc.dtype)
            out_ref[...] = jnp.dot(
                h_cat, wfc, preferred_element_type=jnp.float32
            ).astype(out_ref.dtype)


@functools.partial(jax.jit, static_argnames=("return_seq", "time_block"))
def bilstm_forward(x, lengths, params, return_seq=False, time_block=8):
    """x: [B, T, D] (batch_first); lengths: [B] int32; params: prepare_kernel_params()."""
    B, T, D = x.shape
    out_dtype = x.dtype
    cdt = params["w_f"].dtype                        # MXU operand dtype (bf16 by default)

    TT = max(1, min(int(time_block), T))
    G = -(-T // TT)                                  # cdiv
    T_pad = G * TT

    lengths = lengths.astype(jnp.int32)
    x_p = jnp.pad(x, ((0, 0), (0, T_pad - T), (0, 0))) if T_pad != T else x

    # Forward stream, time-major [T_pad, B, D] (one relayout copy).
    xf_tm = jnp.transpose(x_p, (1, 0, 2)).astype(cdt)

    # Backward stream: per-row reversal FUSED with the time-major relayout into a
    # single gather: xb_tm[t, i] = x[i, L_i - 1 - t] for t < L_i, else 0.
    t_idx = jnp.arange(T_pad, dtype=jnp.int32)[:, None]            # [T_pad, 1]
    rev = lengths[None, :] - 1 - t_idx                             # [T_pad, B]
    valid = rev >= 0
    gidx = jnp.where(valid, rev, 0)
    xb_tm = x_p[jnp.arange(B, dtype=jnp.int32)[None, :], gidx]     # [T_pad, B, D]
    xb_tm = jnp.where(valid[:, :, None], xb_tm, jnp.zeros((), x.dtype)).astype(cdt)

    len2d = lengths.reshape(B, 1)

    kernel = functools.partial(
        _bilstm_kernel, hidden_dim=D, time_block=TT, return_seq=return_seq)

    const = lambda g: (0, 0)
    step = lambda g: (g, 0, 0)

    if return_seq:
        out_shape = jax.ShapeDtypeStruct((T_pad, B, D), out_dtype)
        out_spec = pl.BlockSpec((TT, B, D), step)
        n_scratch = 4                                # no last_f/last_b needed
    else:
        out_shape = jax.ShapeDtypeStruct((B, D), out_dtype)
        out_spec = pl.BlockSpec((B, D), const)       # VMEM-resident, written once
        n_scratch = 6

    out = pl.pallas_call(
        kernel,
        out_shape=out_shape,
        grid_spec=pltpu.PrefetchScalarGridSpec(
            num_scalar_prefetch=0,
            grid=(G,),
            in_specs=[
                pl.BlockSpec((TT, B, D), step),        # forward x, TT time steps
                pl.BlockSpec((TT, B, D), step),        # backward x, TT time steps
                pl.BlockSpec((B, 1), const),           # lengths (resident)
                pl.BlockSpec((2 * D, 4 * D), const),   # fwd [W_ih^T ; W_hh^T]
                pl.BlockSpec((1, 4 * D), const),       # fwd bias (b_ih + b_hh)
                pl.BlockSpec((2 * D, 4 * D), const),   # bwd [W_ih^T ; W_hh^T]
                pl.BlockSpec((1, 4 * D), const),       # bwd bias
                pl.BlockSpec((4, D), const),           # [h0_f; c0_f; h0_b; c0_b]
                pl.BlockSpec((2 * D, D), const),       # fc weight (pre-transposed)
            ],
            out_specs=out_spec,
            scratch_shapes=[pltpu.VMEM((B, D), jnp.float32)
                            for _ in range(n_scratch)],
        ),
        compiler_params=pltpu.CompilerParams(
            dimension_semantics=("arbitrary",),        # time recurrence is sequential
            vmem_limit_bytes=32 * 1024 * 1024,
        ),
    )(
        xf_tm, xb_tm, len2d,
        params["w_f"], params["b_f"], params["w_b"], params["b_b"],
        params["init"], params["wfc"],
    )

    if return_seq:
        return jnp.transpose(out[:T], (1, 0, 2))       # back to batch-first [B, T, D]
    return out


def init_bilstm_params(key, dim, dtype=jnp.float32):
    """Raw parameters in torch layout (nn.LSTM / nn.Linear conventions)."""
    ks = jax.random.split(key, 13)
    n = lambda k, shape, s: s * jax.random.normal(k, shape, dtype=dtype)
    return dict(
        h_init_f=n(ks[0], (1, dim), 0.01),
        c_init_f=n(ks[1], (1, dim), 0.01),
        h_init_b=n(ks[2], (1, dim), 0.01),
        c_init_b=n(ks[3], (1, dim), 0.01),
        w_ih_f=n(ks[4], (4 * dim, dim), 0.1),
        w_hh_f=n(ks[5], (4 * dim, dim), 0.1),
        b_ih_f=n(ks[6], (4 * dim,), 0.1),
        b_hh_f=n(ks[7], (4 * dim,), 0.1),
        w_ih_b=n(ks[8], (4 * dim, dim), 0.1),
        w_hh_b=n(ks[9], (4 * dim, dim), 0.1),
        b_ih_b=n(ks[10], (4 * dim,), 0.1),
        b_hh_b=n(ks[11], (4 * dim,), 0.1),
        fc_w=n(ks[12], (dim, 2 * dim), 0.1),           # Linear(2D -> D, bias=False)
    )


def prepare_kernel_params(raw, compute_dtype=jnp.bfloat16):
    """One-time layout prep OUTSIDE jit: stack + transpose weights, fold biases.

    compute_dtype is the MXU-operand dtype (bf16 default); biases / init states
    and all in-kernel gate math / accumulation stay f32.
    """
    dim = raw["h_init_f"].shape[-1]

    def stack(w_ih, w_hh):                             # [2D, 4D] = [W_ih^T ; W_hh^T]
        return jnp.concatenate([w_ih.T, w_hh.T], axis=0).astype(compute_dtype)

    return dict(
        w_f=stack(raw["w_ih_f"], raw["w_hh_f"]),
        b_f=(raw["b_ih_f"] + raw["b_hh_f"]).reshape(1, 4 * dim).astype(jnp.float32),
        w_b=stack(raw["w_ih_b"], raw["w_hh_b"]),
        b_b=(raw["b_ih_b"] + raw["b_hh_b"]).reshape(1, 4 * dim).astype(jnp.float32),
        init=jnp.concatenate(
            [raw["h_init_f"], raw["c_init_f"], raw["h_init_b"], raw["c_init_b"]],
            axis=0).astype(jnp.float32),               # [4, D]
        wfc=raw["fc_w"].T.astype(compute_dtype),       # [2D, D]
    )


def _make_x_back(x, lengths):
    """x_back[i, t] = x[i, L_i-1-t] for t < L_i, else 0 (matches the torch loop)."""
    B, T, D = x.shape
    t_idx = jnp.arange(T, dtype=jnp.int32)[None, :]
    rev_idx = lengths[:, None].astype(jnp.int32) - 1 - t_idx
    valid = rev_idx >= 0
    gather_idx = jnp.where(valid, rev_idx, 0)
    x_rev = jnp.take_along_axis(x, gather_idx[:, :, None], axis=1)
    return jnp.where(valid[:, :, None], x_rev, jnp.zeros((), x.dtype))


def bilstm_ref(x, lengths, raw, return_seq=False):
    """Pure-JAX f32 reference mirroring the PyTorch module."""
    B, T, D = x.shape
    x_back = _make_x_back(x, lengths)

    def run_lstm(x_btd, w_ih, w_hh, b_ih, b_hh, h0, c0):
        def step(carry, x_t):
            h, c = carry
            gates = x_t @ w_ih.T + h @ w_hh.T + b_ih + b_hh
            i = jax.nn.sigmoid(gates[:, 0:D])
            f = jax.nn.sigmoid(gates[:, D:2 * D])
            g = jnp.tanh(gates[:, 2 * D:3 * D])
            o = jax.nn.sigmoid(gates[:, 3 * D:4 * D])
            c = f * c + i * g
            h = o * jnp.tanh(c)
            return (h, c), h
        _, ys = jax.lax.scan(step, (h0, c0), jnp.transpose(x_btd, (1, 0, 2)))
        return jnp.transpose(ys, (1, 0, 2))            # [B, T, D]

    h0f = jnp.tile(raw["h_init_f"], (B, 1)); c0f = jnp.tile(raw["c_init_f"], (B, 1))
    h0b = jnp.tile(raw["h_init_b"], (B, 1)); c0b = jnp.tile(raw["c_init_b"], (B, 1))
    y_f = run_lstm(x, raw["w_ih_f"], raw["w_hh_f"], raw["b_ih_f"], raw["b_hh_f"], h0f, c0f)
    y_b = run_lstm(x_back, raw["w_ih_b"], raw["w_hh_b"], raw["b_ih_b"], raw["b_hh_b"], h0b, c0b)
    y = jnp.concatenate([y_f, y_b], axis=-1)           # [B, T, 2D]
    if return_seq:
        return jnp.einsum("btk,hk->bth", y, raw["fc_w"])
    y_last = y[jnp.arange(B), lengths - 1]             # [B, 2D]
    return y_last @ raw["fc_w"].T


if __name__ == "__main__":
    key = jax.random.PRNGKey(0)
    B, T, D = 8, 10, 128          # D multiple of 128 -> lane-dense gate/output tiles
    k_param, k_x = jax.random.split(key)

    raw = init_bilstm_params(k_param, D)
    x = jax.random.normal(k_x, (B, T, D), dtype=jnp.float32)
    lengths = jnp.array([10, 7, 3, 10, 1, 8, 5, 6], dtype=jnp.int32)

    ref_last = bilstm_ref(x, lengths, raw, return_seq=False)
    ref_seq = bilstm_ref(x, lengths, raw, return_seq=True)

    # --- f32 MXU operands: tight semantics check (approx-reciprocal sigmoid). ---
    p32 = prepare_kernel_params(raw, compute_dtype=jnp.float32)
    out_last = jax.block_until_ready(bilstm_forward(x, lengths, p32, return_seq=False))
    out_seq = jax.block_until_ready(bilstm_forward(x, lengths, p32, return_seq=True))
    assert out_last.shape == (B, D), out_last.shape
    assert out_seq.shape == (B, T, D), out_seq.shape
    assert jnp.allclose(out_last, ref_last, atol=5e-3, rtol=5e-3), (
        float(jnp.max(jnp.abs(out_last - ref_last))))
    assert jnp.allclose(out_seq, ref_seq, atol=5e-3, rtol=5e-3), (
        float(jnp.max(jnp.abs(out_seq - ref_seq))))

    # --- bf16 MXU operands (perf default): looser check vs the f32 reference. ---
    p16 = prepare_kernel_params(raw, compute_dtype=jnp.bfloat16)
    out_last16 = jax.block_until_ready(bilstm_forward(x, lengths, p16, return_seq=False))
    out_seq16 = jax.block_until_ready(bilstm_forward(x, lengths, p16, return_seq=True))
    assert out_last16.shape == (B, D)
    assert out_seq16.shape == (B, T, D)
    assert jnp.allclose(out_last16, ref_last, atol=8e-2, rtol=8e-2), (
        float(jnp.max(jnp.abs(out_last16 - ref_last))))
    assert jnp.allclose(out_seq16, ref_seq, atol=8e-2, rtol=8e-2), (
        float(jnp.max(jnp.abs(out_seq16 - ref_seq))))

    print("KERNEL_OK")
</pallas_src>

<mosaic_0001>
module attributes {stable_mosaic.version = 11 : i64} {
  func.func @_bilstm_kernel(%arg0: i32, %arg1: memref<8x8x128xf32, #tpu.memory_space<vmem>>, %arg2: memref<8x8x128xf32, #tpu.memory_space<vmem>>, %arg3: memref<8x1xi32, #tpu.memory_space<vmem>>, %arg4: memref<256x512xf32, #tpu.memory_space<vmem>>, %arg5: memref<1x512xf32, #tpu.memory_space<vmem>>, %arg6: memref<256x512xf32, #tpu.memory_space<vmem>>, %arg7: memref<1x512xf32, #tpu.memory_space<vmem>>, %arg8: memref<4x128xf32, #tpu.memory_space<vmem>>, %arg9: memref<256x128xf32, #tpu.memory_space<vmem>>, %arg10: memref<8x128xf32, #tpu.memory_space<vmem>>, %arg11: memref<8x128xf32, #tpu.memory_space<vmem>>, %arg12: memref<8x128xf32, #tpu.memory_space<vmem>>, %arg13: memref<8x128xf32, #tpu.memory_space<vmem>>, %arg14: memref<8x128xf32, #tpu.memory_space<vmem>>, %arg15: memref<8x128xf32, #tpu.memory_space<vmem>>, %arg16: memref<8x128xf32, #tpu.memory_space<vmem>>) attributes {dimension_semantics = [#tpu.dimension_semantics<arbitrary>], iteration_bounds = array<i64: 2>, scalar_prefetch = 0 : i64, scratch_operands = 6 : i64, tpu.core_type = #tpu.core_type<tc>, window_params = [{transform_indices = @transform_0, window_bounds = array<i64: 8, 8, 128>}, {transform_indices = @transform_1, window_bounds = array<i64: 8, 8, 128>}, {pipeline_mode = #tpu.pipeline_mode<synchronous>, transform_indices = @transform_2, window_bounds = array<i64: 8, 1>}, {pipeline_mode = #tpu.pipeline_mode<synchronous>, transform_indices = @transform_3, window_bounds = array<i64: 256, 512>}, {pipeline_mode = #tpu.pipeline_mode<synchronous>, transform_indices = @transform_4, window_bounds = array<i64: 1, 512>}, {pipeline_mode = #tpu.pipeline_mode<synchronous>, transform_indices = @transform_5, window_bounds = array<i64: 256, 512>}, {pipeline_mode = #tpu.pipeline_mode<synchronous>, transform_indices = @transform_6, window_bounds = array<i64: 1, 512>}, {pipeline_mode = #tpu.pipeline_mode<synchronous>, transform_indices = @transform_7, window_bounds = array<i64: 4, 128>}, {pipeline_mode = #tpu.pipeline_mode<synchronous>, transform_indices = @transform_8, window_bounds = array<i64: 256, 128>}, {pipeline_mode = #tpu.pipeline_mode<synchronous>, transform_indices = @transform_9, window_bounds = array<i64: 8, 128>}]} {
    %c0_i32 = arith.constant 0 : i32
    %0 = arith.cmpi eq, %arg0, %c0_i32 : i32
    %1 = arith.extui %0 : i1 to i32
    %c0_i32_0 = arith.constant 0 : i32
    %2 = arith.cmpi ne, %1, %c0_i32_0 : i32
    scf.if %2 {
      %c0_198 = arith.constant 0 : index
      %c0_199 = arith.constant 0 : index
      %648 = vector.load %arg8[%c0_198, %c0_199] : memref<4x128xf32, #tpu.memory_space<vmem>>, vector<1x128xf32>
      %649 = vector.shape_cast %648 : vector<1x128xf32> to vector<1x128xf32>
      %650 = vector.broadcast %649 : vector<1x128xf32> to vector<8x128xf32>
      %c0_200 = arith.constant 0 : index
      %c0_201 = arith.constant 0 : index
      %651 = vector.load %arg11[%c0_200, %c0_201] : memref<8x128xf32, #tpu.memory_space<vmem>>, vector<8x128xf32>
      tpu.vector_store %arg11[%c0_200, %c0_201], %650 {strides = array<i32>} : memref<8x128xf32, #tpu.memory_space<vmem>>, vector<8x128xf32>,
      %c1_202 = arith.constant 1 : index
      %c0_203 = arith.constant 0 : index
      %652 = vector.load %arg8[%c1_202, %c0_203] : memref<4x128xf32, #tpu.memory_space<vmem>>, vector<1x128xf32>
      %653 = vector.shape_cast %652 : vector<1x128xf32> to vector<1x128xf32>
      %654 = vector.broadcast %653 : vector<1x128xf32> to vector<8x128xf32>
      %c0_204 = arith.constant 0 : index
      %c0_205 = arith.constant 0 : index
      %655 = vector.load %arg12[%c0_204, %c0_205] : memref<8x128xf32, #tpu.memory_space<vmem>>, vector<8x128xf32>
      tpu.vector_store %arg12[%c0_204, %c0_205], %654 {strides = array<i32>} : memref<8x128xf32, #tpu.memory_space<vmem>>, vector<8x128xf32>,
      %c2_206 = arith.constant 2 : index
      %c0_207 = arith.constant 0 : index
      %656 = vector.load %arg8[%c2_206, %c0_207] : memref<4x128xf32, #tpu.memory_space<vmem>>, vector<1x128xf32>
      %657 = vector.shape_cast %656 : vector<1x128xf32> to vector<1x128xf32>
      %658 = vector.broadcast %657 : vector<1x128xf32> to vector<8x128xf32>
      %c0_208 = arith.constant 0 : index
      %c0_209 = arith.constant 0 : index
      %659 = vector.load %arg13[%c0_208, %c0_209] : memref<8x128xf32, #tpu.memory_space<vmem>>, vector<8x128xf32>
      tpu.vector_store %arg13[%c0_208, %c0_209], %658 {strides = array<i32>} : memref<8x128xf32, #tpu.memory_space<vmem>>, vector<8x128xf32>,
      %c3_210 = arith.constant 3 : index
      %c0_211 = arith.constant 0 : index
      %660 = vector.load %arg8[%c3_210, %c0_211] : memref<4x128xf32, #tpu.memory_space<vmem>>, vector<1x128xf32>
      %661 = vector.shape_cast %660 : vector<1x128xf32> to vector<1x128xf32>
      %662 = vector.broadcast %661 : vector<1x128xf32> to vector<8x128xf32>
      %c0_212 = arith.constant 0 : index
      %c0_213 = arith.constant 0 : index
      %663 = vector.load %arg14[%c0_212, %c0_213] : memref<8x128xf32, #tpu.memory_space<vmem>>, vector<8x128xf32>
      tpu.vector_store %arg14[%c0_212, %c0_213], %662 {strides = array<i32>} : memref<8x128xf32, #tpu.memory_space<vmem>>, vector<8x128xf32>,
      %cst_214 = arith.constant 0.000000e+00 : f32
      %664 = vector.broadcast %cst_214 : f32 to vector<8x128xf32>
      %c0_215 = arith.constant 0 : index
      %c0_216 = arith.constant 0 : index
      %665 = vector.load %arg15[%c0_215, %c0_216] : memref<8x128xf32, #tpu.memory_space<vmem>>, vector<8x128xf32>
      tpu.vector_store %arg15[%c0_215, %c0_216], %664 {strides = array<i32>} : memref<8x128xf32, #tpu.memory_space<vmem>>, vector<8x128xf32>,
      %cst_217 = arith.constant 0.000000e+00 : f32
      %666 = vector.broadcast %cst_217 : f32 to vector<8x128xf32>
      %c0_218 = arith.constant 0 : index
      %c0_219 = arith.constant 0 : index
      %667 = vector.load %arg16[%c0_218, %c0_219] : memref<8x128xf32, #tpu.memory_space<vmem>>, vector<8x128xf32>
      tpu.vector_store %arg16[%c0_218, %c0_219], %666 {strides = array<i32>} : memref<8x128xf32, #tpu.memory_space<vmem>>, vector<8x128xf32>,
    } else {
    }
    %c0 = arith.constant 0 : index
    %c0_1 = arith.constant 0 : index
    %3 = vector.load %arg4[%c0, %c0_1] : memref<256x512xf32, #tpu.memory_space<vmem>>, vector<256x512xf32>
    %c0_2 = arith.constant 0 : index
    %c0_3 = arith.constant 0 : index
    %4 = vector.load %arg6[%c0_2, %c0_3] : memref<256x512xf32, #tpu.memory_space<vmem>>, vector<256x512xf32>
    %c0_4 = arith.constant 0 : index
    %c0_5 = arith.constant 0 : index
    %5 = vector.load %arg5[%c0_4, %c0_5] : memref<1x512xf32, #tpu.memory_space<vmem>>, vector<1x512xf32>
    %c0_6 = arith.constant 0 : index
    %c0_7 = arith.constant 0 : index
    %6 = vector.load %arg7[%c0_6, %c0_7] : memref<1x512xf32, #tpu.memory_space<vmem>>, vector<1x512xf32>
    %c0_8 = arith.constant 0 : index
    %c0_9 = arith.constant 0 : index
    %7 = vector.load %arg9[%c0_8, %c0_9] : memref<256x128xf32, #tpu.memory_space<vmem>>, vector<256x128xf32>
    %c0_10 = arith.constant 0 : index
    %c0_11 = arith.constant 0 : index
    %8 = vector.load %arg11[%c0_10, %c0_11] : memref<8x128xf32, #tpu.memory_space<vmem>>, vector<8x128xf32>
    %c0_12 = arith.constant 0 : index
    %c0_13 = arith.constant 0 : index
    %9 = vector.load %arg12[%c0_12, %c0_13] : memref<8x128xf32, #tpu.memory_space<vmem>>, vector<8x128xf32>
    %c0_14 = arith.constant 0 : index
    %c0_15 = arith.constant 0 : index
    %10 = vector.load %arg13[%c0_14, %c0_15] : memref<8x128xf32, #tpu.memory_space<vmem>>, vector<8x128xf32>
    %c0_16 = arith.constant 0 : index
    %c0_17 = arith.constant 0 : index
    %11 = vector.load %arg14[%c0_16, %c0_17] : memref<8x128xf32, #tpu.memory_space<vmem>>, vector<8x128xf32>
    %c0_18 = arith.constant 0 : index
    %c0_19 = arith.constant 0 : index
    %12 = vector.load %arg15[%c0_18, %c0_19] : memref<8x128xf32, #tpu.memory_space<vmem>>, vector<8x128xf32>
    %c0_20 = arith.constant 0 : index
    %c0_21 = arith.constant 0 : index
    %13 = vector.load %arg16[%c0_20, %c0_21] : memref<8x128xf32, #tpu.memory_space<vmem>>, vector<8x128xf32>
    %c0_22 = arith.constant 0 : index
    %c0_23 = arith.constant 0 : index
    %14 = vector.load %arg3[%c0_22, %c0_23] : memref<8x1xi32, #tpu.memory_space<vmem>>, vector<8x1xi32>
    %c0_24 = arith.constant 0 : index
    %c0_25 = arith.constant 0 : index
    %c0_26 = arith.constant 0 : index
    %15 = vector.load %arg1[%c0_24, %c0_25, %c0_26] : memref<8x8x128xf32, #tpu.memory_space<vmem>>, vector<1x8x128xf32>
    %16 = vector.shape_cast %15 : vector<1x8x128xf32> to vector<8x128xf32>
    %17 = tpu.concatenate %16, %8 in 1 : vector<8x128xf32>, vector<8x128xf32> -> vector<8x256xf32>
    %cst = arith.constant dense<0.000000e+00> : vector<8x512xf32>
    %18 = tpu.matmul %17, %3, %cst {dimension_numbers = #tpu.dot_dimension_numbers<[1], [0], [0], [1], [0, 0, 1, 1], [], []>} : vector<8x256xf32>, vector<256x512xf32>, vector<8x512xf32> -> vector<8x512xf32>
    %19 = vector.broadcast %5 : vector<1x512xf32> to vector<8x512xf32>
    %20 = arith.addf %18, %19 : vector<8x512xf32>
    %21 = vector.extract_strided_slice %20 {offsets = [0, 0], sizes = [8, 128], strides = [1, 1]} : vector<8x512xf32> to vector<8x128xf32>
    %cst_27 = arith.constant 0.000000e+00 : f32
    %22 = vector.broadcast %cst_27 : f32 to vector<8x128xf32>
    %23 = arith.subf %22, %21 : vector<8x128xf32>
    %24 = math.exp %23 : vector<8x128xf32>
    %cst_28 = arith.constant 1.000000e+00 : f32
    %25 = vector.broadcast %cst_28 : f32 to vector<8x128xf32>
    %26 = arith.addf %25, %24 : vector<8x128xf32>
    %27 = tpu.reciprocal %26 {approx = true} : vector<8x128xf32> -> vector<8x128xf32>
    %28 = vector.extract_strided_slice %20 {offsets = [0, 128], sizes = [8, 128], strides = [1, 1]} : vector<8x512xf32> to vector<8x128xf32>
    %cst_29 = arith.constant 0.000000e+00 : f32
    %29 = vector.broadcast %cst_29 : f32 to vector<8x128xf32>
    %30 = arith.subf %29, %28 : vector<8x128xf32>
    %31 = math.exp %30 : vector<8x128xf32>
    %cst_30 = arith.constant 1.000000e+00 : f32
    %32 = vector.broadcast %cst_30 : f32 to vector<8x128xf32>
    %33 = arith.addf %32, %31 : vector<8x128xf32>
    %34 = tpu.reciprocal %33 {approx = true} : vector<8x128xf32> -> vector<8x128xf32>
    %35 = vector.extract_strided_slice %20 {offsets = [0, 256], sizes = [8, 128], strides = [1, 1]} : vector<8x512xf32> to vector<8x128xf32>
    %36 = math.tanh %35 : vector<8x128xf32>
    %37 = vector.extract_strided_slice %20 {offsets = [0, 384], sizes = [8, 128], strides = [1, 1]} : vector<8x512xf32> to vector<8x128xf32>
    %cst_31 = arith.constant 0.000000e+00 : f32
    %38 = vector.broadcast %cst_31 : f32 to vector<8x128xf32>
    %39 = arith.subf %38, %37 : vector<8x128xf32>
    %40 = math.exp %39 : vector<8x128xf32>
    %cst_32 = arith.constant 1.000000e+00 : f32
    %41 = vector.broadcast %cst_32 : f32 to vector<8x128xf32>
    %42 = arith.addf %41, %40 : vector<8x128xf32>
    %43 = tpu.reciprocal %42 {approx = true} : vector<8x128xf32> -> vector<8x128xf32>
    %44 = arith.mulf %34, %9 : vector<8x128xf32>
    %45 = arith.mulf %27, %36 : vector<8x128xf32>
    %46 = arith.addf %44, %45 : vector<8x128xf32>
    %47 = math.tanh %46 : vector<8x128xf32>
    %48 = arith.mulf %43, %47 : vector<8x128xf32>
    %c0_33 = arith.constant 0 : index
    %c0_34 = arith.constant 0 : index
    %c0_35 = arith.constant 0 : index
    %49 = vector.load %arg2[%c0_33, %c0_34, %c0_35] : memref<8x8x128xf32, #tpu.memory_space<vmem>>, vector<1x8x128xf32>
    %50 = vector.shape_cast %49 : vector<1x8x128xf32> to vector<8x128xf32>
    %51 = tpu.concatenate %50, %10 in 1 : vector<8x128xf32>, vector<8x128xf32> -> vector<8x256xf32>
    %cst_36 = arith.constant dense<0.000000e+00> : vector<8x512xf32>
    %52 = tpu.matmul %51, %4, %cst_36 {dimension_numbers = #tpu.dot_dimension_numbers<[1], [0], [0], [1], [0, 0, 1, 1], [], []>} : vector<8x256xf32>, vector<256x512xf32>, vector<8x512xf32> -> vector<8x512xf32>
    %53 = vector.broadcast %6 : vector<1x512xf32> to vector<8x512xf32>
    %54 = arith.addf %52, %53 : vector<8x512xf32>
    %55 = vector.extract_strided_slice %54 {offsets = [0, 0], sizes = [8, 128], strides = [1, 1]} : vector<8x512xf32> to vector<8x128xf32>
    %cst_37 = arith.constant 0.000000e+00 : f32
    %56 = vector.broadcast %cst_37 : f32 to vector<8x128xf32>
    %57 = arith.subf %56, %55 : vector<8x128xf32>
    %58 = math.exp %57 : vector<8x128xf32>
    %cst_38 = arith.constant 1.000000e+00 : f32
    %59 = vector.broadcast %cst_38 : f32 to vector<8x128xf32>
    %60 = arith.addf %59, %58 : vector<8x128xf32>
    %61 = tpu.reciprocal %60 {approx = true} : vector<8x128xf32> -> vector<8x128xf32>
    %62 = vector.extract_strided_slice %54 {offsets = [0, 128], sizes = [8, 128], strides = [1, 1]} : vector<8x512xf32> to vector<8x128xf32>
    %cst_39 = arith.constant 0.000000e+00 : f32
    %63 = vector.broadcast %cst_39 : f32 to vector<8x128xf32>
    %64 = arith.subf %63, %62 : vector<8x128xf32>
    %65 = math.exp %64 : vector<8x128xf32>
    %cst_40 = arith.constant 1.000000e+00 : f32
    %66 = vector.broadcast %cst_40 : f32 to vector<8x128xf32>
    %67 = arith.addf %66, %65 : vector<8x128xf32>
    %68 = tpu.reciprocal %67 {approx = true} : vector<8x128xf32> -> vector<8x128xf32>
    %69 = vector.extract_strided_slice %54 {offsets = [0, 256], sizes = [8, 128], strides = [1, 1]} : vector<8x512xf32> to vector<8x128xf32>
    %70 = math.tanh %69 : vector<8x128xf32>
    %71 = vector.extract_strided_slice %54 {offsets = [0, 384], sizes = [8, 128], strides = [1, 1]} : vector<8x512xf32> to vector<8x128xf32>
    %cst_41 = arith.constant 0.000000e+00 : f32
    %72 = vector.broadcast %cst_41 : f32 to vector<8x128xf32>
    %73 = arith.subf %72, %71 : vector<8x128xf32>
    %74 = math.exp %73 : vector<8x128xf32>
    %cst_42 = arith.constant 1.000000e+00 : f32
    %75 = vector.broadcast %cst_42 : f32 to vector<8x128xf32>
    %76 = arith.addf %75, %74 : vector<8x128xf32>
    %77 = tpu.reciprocal %76 {approx = true} : vector<8x128xf32> -> vector<8x128xf32>
    %78 = arith.mulf %68, %11 : vector<8x128xf32>
    %79 = arith.mulf %61, %70 : vector<8x128xf32>
    %80 = arith.addf %78, %79 : vector<8x128xf32>
    %81 = math.tanh %80 : vector<8x128xf32>
    %82 = arith.mulf %77, %81 : vector<8x128xf32>
    %c8_i32 = arith.constant 8 : i32
    %83 = arith.muli %arg0, %c8_i32 : i32
    %c1_i32 = arith.constant 1 : i32
    %84 = arith.addi %83, %c1_i32 : i32
    %85 = vector.broadcast %84 : i32 to vector<8x1xi32>
    %86 = arith.cmpi eq, %14, %85 : vector<8x1xi32>
    %87 = vector.shape_cast %86 : vector<8x1xi1> to vector<8x1xi1>
    %88 = vector.broadcast %87 : vector<8x1xi1> to vector<8x128xi1>
    %89 = arith.select %88, %48, %12 : vector<8x128xi1>, vector<8x128xf32>
    %90 = vector.shape_cast %86 : vector<8x1xi1> to vector<8x1xi1>
    %91 = vector.broadcast %90 : vector<8x1xi1> to vector<8x128xi1>
    %92 = arith.select %91, %82, %13 : vector<8x128xi1>, vector<8x128xf32>
    %c1 = arith.constant 1 : index
    %c0_43 = arith.constant 0 : index
    %c0_44 = arith.constant 0 : index
    %93 = vector.load %arg1[%c1, %c0_43, %c0_44] : memref<8x8x128xf32, #tpu.memory_space<vmem>>, vector<1x8x128xf32>
    %94 = vector.shape_cast %93 : vector<1x8x128xf32> to vector<8x128xf32>
    %95 = tpu.concatenate %94, %48 in 1 : vector<8x128xf32>, vector<8x128xf32> -> vector<8x256xf32>
    %cst_45 = arith.constant dense<0.000000e+00> : vector<8x512xf32>
    %96 = tpu.matmul %95, %3, %cst_45 {dimension_numbers = #tpu.dot_dimension_numbers<[1], [0], [0], [1], [0, 0, 1, 1], [], []>} : vector<8x256xf32>, vector<256x512xf32>, vector<8x512xf32> -> vector<8x512xf32>
    %97 = vector.broadcast %5 : vector<1x512xf32> to vector<8x512xf32>
    %98 = arith.addf %96, %97 : vector<8x512xf32>
    %99 = vector.extract_strided_slice %98 {offsets = [0, 0], sizes = [8, 128], strides = [1, 1]} : vector<8x512xf32> to vector<8x128xf32>
    %cst_46 = arith.constant 0.000000e+00 : f32
    %100 = vector.broadcast %cst_46 : f32 to vector<8x128xf32>
    %101 = arith.subf %100, %99 : vector<8x128xf32>
    %102 = math.exp %101 : vector<8x128xf32>
    %cst_47 = arith.constant 1.000000e+00 : f32
    %103 = vector.broadcast %cst_47 : f32 to vector<8x128xf32>
    %104 = arith.addf %103, %102 : vector<8x128xf32>
    %105 = tpu.reciprocal %104 {approx = true} : vector<8x128xf32> -> vector<8x128xf32>
    %106 = vector.extract_strided_slice %98 {offsets = [0, 128], sizes = [8, 128], strides = [1, 1]} : vector<8x512xf32> to vector<8x128xf32>
    %cst_48 = arith.constant 0.000000e+00 : f32
    %107 = vector.broadcast %cst_48 : f32 to vector<8x128xf32>
    %108 = arith.subf %107, %106 : vector<8x128xf32>
    %109 = math.exp %108 : vector<8x128xf32>
    %cst_49 = arith.constant 1.000000e+00 : f32
    %110 = vector.broadcast %cst_49 : f32 to vector<8x128xf32>
    %111 = arith.addf %110, %109 : vector<8x128xf32>
    %112 = tpu.reciprocal %111 {approx = true} : vector<8x128xf32> -> vector<8x128xf32>
    %113 = vector.extract_strided_slice %98 {offsets = [0, 256], sizes = [8, 128], strides = [1, 1]} : vector<8x512xf32> to vector<8x128xf32>
    %114 = math.tanh %113 : vector<8x128xf32>
    %115 = vector.extract_strided_slice %98 {offsets = [0, 384], sizes = [8, 128], strides = [1, 1]} : vector<8x512xf32> to vector<8x128xf32>
    %cst_50 = arith.constant 0.000000e+00 : f32
    %116 = vector.broadcast %cst_50 : f32 to vector<8x128xf32>
    %117 = arith.subf %116, %115 : vector<8x128xf32>
    %118 = math.exp %117 : vector<8x128xf32>
    %cst_51 = arith.constant 1.000000e+00 : f32
    %119 = vector.broadcast %cst_51 : f32 to vector<8x128xf32>
    %120 = arith.addf %119, %118 : vector<8x128xf32>
    %121 = tpu.reciprocal %120 {approx = true} : vector<8x128xf32> -> vector<8x128xf32>
    %122 = arith.mulf %112, %46 : vector<8x128xf32>
    %123 = arith.mulf %105, %114 : vector<8x128xf32>
    %124 = arith.addf %122, %123 : vector<8x128xf32>
    %125 = math.tanh %124 : vector<8x128xf32>
    %126 = arith.mulf %121, %125 : vector<8x128xf32>
    %c1_52 = arith.constant 1 : index
    %c0_53 = arith.constant 0 : index
    %c0_54 = arith.constant 0 : index
    %127 = vector.load %arg2[%c1_52, %c0_53, %c0_54] : memref<8x8x128xf32, #tpu.memory_space<vmem>>, vector<1x8x128xf32>
    %128 = vector.shape_cast %127 : vector<1x8x128xf32> to vector<8x128xf32>
    %129 = tpu.concatenate %128, %82 in 1 : vector<8x128xf32>, vector<8x128xf32> -> vector<8x256xf32>
    %cst_55 = arith.constant dense<0.000000e+00> : vector<8x512xf32>
    %130 = tpu.matmul %129, %4, %cst_55 {dimension_numbers = #tpu.dot_dimension_numbers<[1], [0], [0], [1], [0, 0, 1, 1], [], []>} : vector<8x256xf32>, vector<256x512xf32>, vector<8x512xf32> -> vector<8x512xf32>
    %131 = vector.broadcast %6 : vector<1x512xf32> to vector<8x512xf32>
    %132 = arith.addf %130, %131 : vector<8x512xf32>
    %133 = vector.extract_strided_slice %132 {offsets = [0, 0], sizes = [8, 128], strides = [1, 1]} : vector<8x512xf32> to vector<8x128xf32>
    %cst_56 = arith.constant 0.000000e+00 : f32
    %134 = vector.broadcast %cst_56 : f32 to vector<8x128xf32>
    %135 = arith.subf %134, %133 : vector<8x128xf32>
    %136 = math.exp %135 : vector<8x128xf32>
    %cst_57 = arith.constant 1.000000e+00 : f32
    %137 = vector.broadcast %cst_57 : f32 to vector<8x128xf32>
    %138 = arith.addf %137, %136 : vector<8x128xf32>
    %139 = tpu.reciprocal %138 {approx = true} : vector<8x128xf32> -> vector<8x128xf32>
    %140 = vector.extract_strided_slice %132 {offsets = [0, 128], sizes = [8, 128], strides = [1, 1]} : vector<8x512xf32> to vector<8x128xf32>
    %cst_58 = arith.constant 0.000000e+00 : f32
    %141 = vector.broadcast %cst_58 : f32 to vector<8x128xf32>
    %142 = arith.subf %141, %140 : vector<8x128xf32>
    %143 = math.exp %142 : vector<8x128xf32>
    %cst_59 = arith.constant 1.000000e+00 : f32
    %144 = vector.broadcast %cst_59 : f32 to vector<8x128xf32>
    %145 = arith.addf %144, %143 : vector<8x128xf32>
    %146 = tpu.reciprocal %145 {approx = true} : vector<8x128xf32> -> vector<8x128xf32>
    %147 = vector.extract_strided_slice %132 {offsets = [0, 256], sizes = [8, 128], strides = [1, 1]} : vector<8x512xf32> to vector<8x128xf32>
    %148 = math.tanh %147 : vector<8x128xf32>
    %149 = vector.extract_strided_slice %132 {offsets = [0, 384], sizes = [8, 128], strides = [1, 1]} : vector<8x512xf32> to vector<8x128xf32>
    %cst_60 = arith.constant 0.000000e+00 : f32
    %150 = vector.broadcast %cst_60 : f32 to vector<8x128xf32>
    %151 = arith.subf %150, %149 : vector<8x128xf32>
    %152 = math.exp %151 : vector<8x128xf32>
    %cst_61 = arith.constant 1.000000e+00 : f32
    %153 = vector.broadcast %cst_61 : f32 to vector<8x128xf32>
    %154 = arith.addf %153, %152 : vector<8x128xf32>
    %155 = tpu.reciprocal %154 {approx = true} : vector<8x128xf32> -> vector<8x128xf32>
    %156 = arith.mulf %146, %80 : vector<8x128xf32>
    %157 = arith.mulf %139, %148 : vector<8x128xf32>
    %158 = arith.addf %156, %157 : vector<8x128xf32>
    %159 = math.tanh %158 : vector<8x128xf32>
    %160 = arith.mulf %155, %159 : vector<8x128xf32>
    %c8_i32_62 = arith.constant 8 : i32
    %161 = arith.muli %arg0, %c8_i32_62 : i32
    %c2_i32 = arith.constant 2 : i32
    %162 = arith.addi %161, %c2_i32 : i32
    %163 = vector.broadcast %162 : i32 to vector<8x1xi32>
    %164 = arith.cmpi eq, %14, %163 : vector<8x1xi32>
    %165 = vector.shape_cast %164 : vector<8x1xi1> to vector<8x1xi1>
    %166 = vector.broadcast %165 : vector<8x1xi1> to vector<8x128xi1>
    %167 = arith.select %166, %126, %89 : vector<8x128xi1>, vector<8x128xf32>
    %168 = vector.shape_cast %164 : vector<8x1xi1> to vector<8x1xi1>
    %169 = vector.broadcast %168 : vector<8x1xi1> to vector<8x128xi1>
    %170 = arith.select %169, %160, %92 : vector<8x128xi1>, vector<8x128xf32>
    %c2 = arith.constant 2 : index
    %c0_63 = arith.constant 0 : index
    %c0_64 = arith.constant 0 : index
    %171 = vector.load %arg1[%c2, %c0_63, %c0_64] : memref<8x8x128xf32, #tpu.memory_space<vmem>>, vector<1x8x128xf32>
    %172 = vector.shape_cast %171 : vector<1x8x128xf32> to vector<8x128xf32>
    %173 = tpu.concatenate %172, %126 in 1 : vector<8x128xf32>, vector<8x128xf32> -> vector<8x256xf32>
    %cst_65 = arith.constant dense<0.000000e+00> : vector<8x512xf32>
    %174 = tpu.matmul %173, %3, %cst_65 {dimension_numbers = #tpu.dot_dimension_numbers<[1], [0], [0], [1], [0, 0, 1, 1], [], []>} : vector<8x256xf32>, vector<256x512xf32>, vector<8x512xf32> -> vector<8x512xf32>
    %175 = vector.broadcast %5 : vector<1x512xf32> to vector<8x512xf32>
    %176 = arith.addf %174, %175 : vector<8x512xf32>
    %177 = vector.extract_strided_slice %176 {offsets = [0, 0], sizes = [8, 128], strides = [1, 1]} : vector<8x512xf32> to vector<8x128xf32>
    %cst_66 = arith.constant 0.000000e+00 : f32
    %178 = vector.broadcast %cst_66 : f32 to vector<8x128xf32>
    %179 = arith.subf %178, %177 : vector<8x128xf32>
    %180 = math.exp %179 : vector<8x128xf32>
    %cst_67 = arith.constant 1.000000e+00 : f32
    %181 = vector.broadcast %cst_67 : f32 to vector<8x128xf32>
    %182 = arith.addf %181, %180 : vector<8x128xf32>
    %183 = tpu.reciprocal %182 {approx = true} : vector<8x128xf32> -> vector<8x128xf32>
    %184 = vector.extract_strided_slice %176 {offsets = [0, 128], sizes = [8, 128], strides = [1, 1]} : vector<8x512xf32> to vector<8x128xf32>
    %cst_68 = arith.constant 0.000000e+00 : f32
    %185 = vector.broadcast %cst_68 : f32 to vector<8x128xf32>
    %186 = arith.subf %185, %184 : vector<8x128xf32>
    %187 = math.exp %186 : vector<8x128xf32>
    %cst_69 = arith.constant 1.000000e+00 : f32
    %188 = vector.broadcast %cst_69 : f32 to vector<8x128xf32>
    %189 = arith.addf %188, %187 : vector<8x128xf32>
    %190 = tpu.reciprocal %189 {approx = true} : vector<8x128xf32> -> vector<8x128xf32>
    %191 = vector.extract_strided_slice %176 {offsets = [0, 256], sizes = [8, 128], strides = [1, 1]} : vector<8x512xf32> to vector<8x128xf32>
    %192 = math.tanh %191 : vector<8x128xf32>
    %193 = vector.extract_strided_slice %176 {offsets = [0, 384], sizes = [8, 128], strides = [1, 1]} : vector<8x512xf32> to vector<8x128xf32>
    %cst_70 = arith.constant 0.000000e+00 : f32
    %194 = vector.broadcast %cst_70 : f32 to vector<8x128xf32>
    %195 = arith.subf %194, %193 : vector<8x128xf32>
    %196 = math.exp %195 : vector<8x128xf32>
    %cst_71 = arith.constant 1.000000e+00 : f32
    %197 = vector.broadcast %cst_71 : f32 to vector<8x128xf32>
    %198 = arith.addf %197, %196 : vector<8x128xf32>
    %199 = tpu.reciprocal %198 {approx = true} : vector<8x128xf32> -> vector<8x128xf32>
    %200 = arith.mulf %190, %124 : vector<8x128xf32>
    %201 = arith.mulf %183, %192 : vector<8x128xf32>
    %202 = arith.addf %200, %201 : vector<8x128xf32>
    %203 = math.tanh %202 : vector<8x128xf32>
    %204 = arith.mulf %199, %203 : vector<8x128xf32>
    %c2_72 = arith.constant 2 : index
    %c0_73 = arith.constant 0 : index
    %c0_74 = arith.constant 0 : index
    %205 = vector.load %arg2[%c2_72, %c0_73, %c0_74] : memref<8x8x128xf32, #tpu.memory_space<vmem>>, vector<1x8x128xf32>
    %206 = vector.shape_cast %205 : vector<1x8x128xf32> to vector<8x128xf32>
    %207 = tpu.concatenate %206, %160 in 1 : vector<8x128xf32>, vector<8x128xf32> -> vector<8x256xf32>
    %cst_75 = arith.constant dense<0.000000e+00> : vector<8x512xf32>
    %208 = tpu.matmul %207, %4, %cst_75 {dimension_numbers = #tpu.dot_dimension_numbers<[1], [0], [0], [1], [0, 0, 1, 1], [], []>} : vector<8x256xf32>, vector<256x512xf32>, vector<8x512xf32> -> vector<8x512xf32>
    %209 = vector.broadcast %6 : vector<1x512xf32> to vector<8x512xf32>
    %210 = arith.addf %208, %209 : vector<8x512xf32>
    %211 = vector.extract_strided_slice %210 {offsets = [0, 0], sizes = [8, 128], strides = [1, 1]} : vector<8x512xf32> to vector<8x128xf32>
    %cst_76 = arith.constant 0.000000e+00 : f32
    %212 = vector.broadcast %cst_76 : f32 to vector<8x128xf32>
    %213 = arith.subf %212, %211 : vector<8x128xf32>
    %214 = math.exp %213 : vector<8x128xf32>
    %cst_77 = arith.constant 1.000000e+00 : f32
    %215 = vector.broadcast %cst_77 : f32 to vector<8x128xf32>
    %216 = arith.addf %215, %214 : vector<8x128xf32>
    %217 = tpu.reciprocal %216 {approx = true} : vector<8x128xf32> -> vector<8x128xf32>
    %218 = vector.extract_strided_slice %210 {offsets = [0, 128], sizes = [8, 128], strides = [1, 1]} : vector<8x512xf32> to vector<8x128xf32>
    %cst_78 = arith.constant 0.000000e+00 : f32
    %219 = vector.broadcast %cst_78 : f32 to vector<8x128xf32>
    %220 = arith.subf %219, %218 : vector<8x128xf32>
    %221 = math.exp %220 : vector<8x128xf32>
    %cst_79 = arith.constant 1.000000e+00 : f32
    %222 = vector.broadcast %cst_79 : f32 to vector<8x128xf32>
    %223 = arith.addf %222, %221 : vector<8x128xf32>
    %224 = tpu.reciprocal %223 {approx = true} : vector<8x128xf32> -> vector<8x128xf32>
    %225 = vector.extract_strided_slice %210 {offsets = [0, 256], sizes = [8, 128], strides = [1, 1]} : vector<8x512xf32> to vector<8x128xf32>
    %226 = math.tanh %225 : vector<8x128xf32>
    %227 = vector.extract_strided_slice %210 {offsets = [0, 384], sizes = [8, 128], strides = [1, 1]} : vector<8x512xf32> to vector<8x128xf32>
    %cst_80 = arith.constant 0.000000e+00 : f32
    %228 = vector.broadcast %cst_80 : f32 to vector<8x128xf32>
    %229 = arith.subf %228, %227 : vector<8x128xf32>
    %230 = math.exp %229 : vector<8x128xf32>
    %cst_81 = arith.constant 1.000000e+00 : f32
    %231 = vector.broadcast %cst_81 : f32 to vector<8x128xf32>
    %232 = arith.addf %231, %230 : vector<8x128xf32>
    %233 = tpu.reciprocal %232 {approx = true} : vector<8x128xf32> -> vector<8x128xf32>
    %234 = arith.mulf %224, %158 : vector<8x128xf32>
    %235 = arith.mulf %217, %226 : vector<8x128xf32>
    %236 = arith.addf %234, %235 : vector<8x128xf32>
    %237 = math.tanh %236 : vector<8x128xf32>
    %238 = arith.mulf %233, %237 : vector<8x128xf32>
    %c8_i32_82 = arith.constant 8 : i32
    %239 = arith.muli %arg0, %c8_i32_82 : i32
    %c3_i32 = arith.constant 3 : i32
    %240 = arith.addi %239, %c3_i32 : i32
    %241 = vector.broadcast %240 : i32 to vector<8x1xi32>
    %242 = arith.cmpi eq, %14, %241 : vector<8x1xi32>
    %243 = vector.shape_cast %242 : vector<8x1xi1> to vector<8x1xi1>
    %244 = vector.broadcast %243 : vector<8x1xi1> to vector<8x128xi1>
    %245 = arith.select %244, %204, %167 : vector<8x128xi1>, vector<8x128xf32>
    %246 = vector.shape_cast %242 : vector<8x1xi1> to vector<8x1xi1>
    %247 = vector.broadcast %246 : vector<8x1xi1> to vector<8x128xi1>
    %248 = arith.select %247, %238, %170 : vector<8x128xi1>, vector<8x128xf32>
    %c3 = arith.constant 3 : index
    %c0_83 = arith.constant 0 : index
    %c0_84 = arith.constant 0 : index
    %249 = vector.load %arg1[%c3, %c0_83, %c0_84] : memref<8x8x128xf32, #tpu.memory_space<vmem>>, vector<1x8x128xf32>
    %250 = vector.shape_cast %249 : vector<1x8x128xf32> to vector<8x128xf32>
    %251 = tpu.concatenate %250, %204 in 1 : vector<8x128xf32>, vector<8x128xf32> -> vector<8x256xf32>
    %cst_85 = arith.constant dense<0.000000e+00> : vector<8x512xf32>
    %252 = tpu.matmul %251, %3, %cst_85 {dimension_numbers = #tpu.dot_dimension_numbers<[1], [0], [0], [1], [0, 0, 1, 1], [], []>} : vector<8x256xf32>, vector<256x512xf32>, vector<8x512xf32> -> vector<8x512xf32>
    %253 = vector.broadcast %5 : vector<1x512xf32> to vector<8x512xf32>
    %254 = arith.addf %252, %253 : vector<8x512xf32>
    %255 = vector.extract_strided_slice %254 {offsets = [0, 0], sizes = [8, 128], strides = [1, 1]} : vector<8x512xf32> to vector<8x128xf32>
    %cst_86 = arith.constant 0.000000e+00 : f32
    %256 = vector.broadcast %cst_86 : f32 to vector<8x128xf32>
    %257 = arith.subf %256, %255 : vector<8x128xf32>
    %258 = math.exp %257 : vector<8x128xf32>
    %cst_87 = arith.constant 1.000000e+00 : f32
    %259 = vector.broadcast %cst_87 : f32 to vector<8x128xf32>
    %260 = arith.addf %259, %258 : vector<8x128xf32>
    %261 = tpu.reciprocal %260 {approx = true} : vector<8x128xf32> -> vector<8x128xf32>
    %262 = vector.extract_strided_slice %254 {offsets = [0, 128], sizes = [8, 128], strides = [1, 1]} : vector<8x512xf32> to vector<8x128xf32>
    %cst_88 = arith.constant 0.000000e+00 : f32
    %263 = vector.broadcast %cst_88 : f32 to vector<8x128xf32>
    %264 = arith.subf %263, %262 : vector<8x128xf32>
    %265 = math.exp %264 : vector<8x128xf32>
    %cst_89 = arith.constant 1.000000e+00 : f32
    %266 = vector.broadcast %cst_89 : f32 to vector<8x128xf32>
    %267 = arith.addf %266, %265 : vector<8x128xf32>
    %268 = tpu.reciprocal %267 {approx = true} : vector<8x128xf32> -> vector<8x128xf32>
    %269 = vector.extract_strided_slice %254 {offsets = [0, 256], sizes = [8, 128], strides = [1, 1]} : vector<8x512xf32> to vector<8x128xf32>
    %270 = math.tanh %269 : vector<8x128xf32>
    %271 = vector.extract_strided_slice %254 {offsets = [0, 384], sizes = [8, 128], strides = [1, 1]} : vector<8x512xf32> to vector<8x128xf32>
    %cst_90 = arith.constant 0.000000e+00 : f32
    %272 = vector.broadcast %cst_90 : f32 to vector<8x128xf32>
    %273 = arith.subf %272, %271 : vector<8x128xf32>
    %274 = math.exp %273 : vector<8x128xf32>
    %cst_91 = arith.constant 1.000000e+00 : f32
    %275 = vector.broadcast %cst_91 : f32 to vector<8x128xf32>
    %276 = arith.addf %275, %274 : vector<8x128xf32>
    %277 = tpu.reciprocal %276 {approx = true} : vector<8x128xf32> -> vector<8x128xf32>
    %278 = arith.mulf %268, %202 : vector<8x128xf32>
    %279 = arith.mulf %261, %270 : vector<8x128xf32>
    %280 = arith.addf %278, %279 : vector<8x128xf32>
    %281 = math.tanh %280 : vector<8x128xf32>
    %282 = arith.mulf %277, %281 : vector<8x128xf32>
    %c3_92 = arith.constant 3 : index
    %c0_93 = arith.constant 0 : index
    %c0_94 = arith.constant 0 : index
    %283 = vector.load %arg2[%c3_92, %c0_93, %c0_94] : memref<8x8x128xf32, #tpu.memory_space<vmem>>, vector<1x8x128xf32>
    %284 = vector.shape_cast %283 : vector<1x8x128xf32> to vector<8x128xf32>
    %285 = tpu.concatenate %284, %238 in 1 : vector<8x128xf32>, vector<8x128xf32> -> vector<8x256xf32>
    %cst_95 = arith.constant dense<0.000000e+00> : vector<8x512xf32>
    %286 = tpu.matmul %285, %4, %cst_95 {dimension_numbers = #tpu.dot_dimension_numbers<[1], [0], [0], [1], [0, 0, 1, 1], [], []>} : vector<8x256xf32>, vector<256x512xf32>, vector<8x512xf32> -> vector<8x512xf32>
    %287 = vector.broadcast %6 : vector<1x512xf32> to vector<8x512xf32>
    %288 = arith.addf %286, %287 : vector<8x512xf32>
    %289 = vector.extract_strided_slice %288 {offsets = [0, 0], sizes = [8, 128], strides = [1, 1]} : vector<8x512xf32> to vector<8x128xf32>
    %cst_96 = arith.constant 0.000000e+00 : f32
    %290 = vector.broadcast %cst_96 : f32 to vector<8x128xf32>
    %291 = arith.subf %290, %289 : vector<8x128xf32>
    %292 = math.exp %291 : vector<8x128xf32>
    %cst_97 = arith.constant 1.000000e+00 : f32
    %293 = vector.broadcast %cst_97 : f32 to vector<8x128xf32>
    %294 = arith.addf %293, %292 : vector<8x128xf32>
    %295 = tpu.reciprocal %294 {approx = true} : vector<8x128xf32> -> vector<8x128xf32>
    %296 = vector.extract_strided_slice %288 {offsets = [0, 128], sizes = [8, 128], strides = [1, 1]} : vector<8x512xf32> to vector<8x128xf32>
    %cst_98 = arith.constant 0.000000e+00 : f32
    %297 = vector.broadcast %cst_98 : f32 to vector<8x128xf32>
    %298 = arith.subf %297, %296 : vector<8x128xf32>
    %299 = math.exp %298 : vector<8x128xf32>
    %cst_99 = arith.constant 1.000000e+00 : f32
    %300 = vector.broadcast %cst_99 : f32 to vector<8x128xf32>
    %301 = arith.addf %300, %299 : vector<8x128xf32>
    %302 = tpu.reciprocal %301 {approx = true} : vector<8x128xf32> -> vector<8x128xf32>
    %303 = vector.extract_strided_slice %288 {offsets = [0, 256], sizes = [8, 128], strides = [1, 1]} : vector<8x512xf32> to vector<8x128xf32>
    %304 = math.tanh %303 : vector<8x128xf32>
    %305 = vector.extract_strided_slice %288 {offsets = [0, 384], sizes = [8, 128], strides = [1, 1]} : vector<8x512xf32> to vector<8x128xf32>
    %cst_100 = arith.constant 0.000000e+00 : f32
    %306 = vector.broadcast %cst_100 : f32 to vector<8x128xf32>
    %307 = arith.subf %306, %305 : vector<8x128xf32>
    %308 = math.exp %307 : vector<8x128xf32>
    %cst_101 = arith.constant 1.000000e+00 : f32
    %309 = vector.broadcast %cst_101 : f32 to vector<8x128xf32>
    %310 = arith.addf %309, %308 : vector<8x128xf32>
    %311 = tpu.reciprocal %310 {approx = true} : vector<8x128xf32> -> vector<8x128xf32>
    %312 = arith.mulf %302, %236 : vector<8x128xf32>
    %313 = arith.mulf %295, %304 : vector<8x128xf32>
    %314 = arith.addf %312, %313 : vector<8x128xf32>
    %315 = math.tanh %314 : vector<8x128xf32>
    %316 = arith.mulf %311, %315 : vector<8x128xf32>
    %c8_i32_102 = arith.constant 8 : i32
    %317 = arith.muli %arg0, %c8_i32_102 : i32
    %c4_i32 = arith.constant 4 : i32
    %318 = arith.addi %317, %c4_i32 : i32
    %319 = vector.broadcast %318 : i32 to vector<8x1xi32>
    %320 = arith.cmpi eq, %14, %319 : vector<8x1xi32>
    %321 = vector.shape_cast %320 : vector<8x1xi1> to vector<8x1xi1>
    %322 = vector.broadcast %321 : vector<8x1xi1> to vector<8x128xi1>
    %323 = arith.select %322, %282, %245 : vector<8x128xi1>, vector<8x128xf32>
    %324 = vector.shape_cast %320 : vector<8x1xi1> to vector<8x1xi1>
    %325 = vector.broadcast %324 : vector<8x1xi1> to vector<8x128xi1>
    %326 = arith.select %325, %316, %248 : vector<8x128xi1>, vector<8x128xf32>
    %c4 = arith.constant 4 : index
    %c0_103 = arith.constant 0 : index
    %c0_104 = arith.constant 0 : index
    %327 = vector.load %arg1[%c4, %c0_103, %c0_104] : memref<8x8x128xf32, #tpu.memory_space<vmem>>, vector<1x8x128xf32>
    %328 = vector.shape_cast %327 : vector<1x8x128xf32> to vector<8x128xf32>
    %329 = tpu.concatenate %328, %282 in 1 : vector<8x128xf32>, vector<8x128xf32> -> vector<8x256xf32>
    %cst_105 = arith.constant dense<0.000000e+00> : vector<8x512xf32>
    %330 = tpu.matmul %329, %3, %cst_105 {dimension_numbers = #tpu.dot_dimension_numbers<[1], [0], [0], [1], [0, 0, 1, 1], [], []>} : vector<8x256xf32>, vector<256x512xf32>, vector<8x512xf32> -> vector<8x512xf32>
    %331 = vector.broadcast %5 : vector<1x512xf32> to vector<8x512xf32>
    %332 = arith.addf %330, %331 : vector<8x512xf32>
    %333 = vector.extract_strided_slice %332 {offsets = [0, 0], sizes = [8, 128], strides = [1, 1]} : vector<8x512xf32> to vector<8x128xf32>
    %cst_106 = arith.constant 0.000000e+00 : f32
    %334 = vector.broadcast %cst_106 : f32 to vector<8x128xf32>
    %335 = arith.subf %334, %333 : vector<8x128xf32>
    %336 = math.exp %335 : vector<8x128xf32>
    %cst_107 = arith.constant 1.000000e+00 : f32
    %337 = vector.broadcast %cst_107 : f32 to vector<8x128xf32>
    %338 = arith.addf %337, %336 : vector<8x128xf32>
    %339 = tpu.reciprocal %338 {approx = true} : vector<8x128xf32> -> vector<8x128xf32>
    %340 = vector.extract_strided_slice %332 {offsets = [0, 128], sizes = [8, 128], strides = [1, 1]} : vector<8x512xf32> to vector<8x128xf32>
    %cst_108 = arith.constant 0.000000e+00 : f32
    %341 = vector.broadcast %cst_108 : f32 to vector<8x128xf32>
    %342 = arith.subf %341, %340 : vector<8x128xf32>
    %343 = math.exp %342 : vector<8x128xf32>
    %cst_109 = arith.constant 1.000000e+00 : f32
    %344 = vector.broadcast %cst_109 : f32 to vector<8x128xf32>
    %345 = arith.addf %344, %343 : vector<8x128xf32>
    %346 = tpu.reciprocal %345 {approx = true} : vector<8x128xf32> -> vector<8x128xf32>
    %347 = vector.extract_strided_slice %332 {offsets = [0, 256], sizes = [8, 128], strides = [1, 1]} : vector<8x512xf32> to vector<8x128xf32>
    %348 = math.tanh %347 : vector<8x128xf32>
    %349 = vector.extract_strided_slice %332 {offsets = [0, 384], sizes = [8, 128], strides = [1, 1]} : vector<8x512xf32> to vector<8x128xf32>
    %cst_110 = arith.constant 0.000000e+00 : f32
    %350 = vector.broadcast %cst_110 : f32 to vector<8x128xf32>
    %351 = arith.subf %350, %349 : vector<8x128xf32>
    %352 = math.exp %351 : vector<8x128xf32>
    %cst_111 = arith.constant 1.000000e+00 : f32
    %353 = vector.broadcast %cst_111 : f32 to vector<8x128xf32>
    %354 = arith.addf %353, %352 : vector<8x128xf32>
    %355 = tpu.reciprocal %354 {approx = true} : vector<8x128xf32> -> vector<8x128xf32>
    %356 = arith.mulf %346, %280 : vector<8x128xf32>
    %357 = arith.mulf %339, %348 : vector<8x128xf32>
    %358 = arith.addf %356, %357 : vector<8x128xf32>
    %359 = math.tanh %358 : vector<8x128xf32>
    %360 = arith.mulf %355, %359 : vector<8x128xf32>
    %c4_112 = arith.constant 4 : index
    %c0_113 = arith.constant 0 : index
    %c0_114 = arith.constant 0 : index
    %361 = vector.load %arg2[%c4_112, %c0_113, %c0_114] : memref<8x8x128xf32, #tpu.memory_space<vmem>>, vector<1x8x128xf32>
    %362 = vector.shape_cast %361 : vector<1x8x128xf32> to vector<8x128xf32>
    %363 = tpu.concatenate %362, %316 in 1 : vector<8x128xf32>, vector<8x128xf32> -> vector<8x256xf32>
    %cst_115 = arith.constant dense<0.000000e+00> : vector<8x512xf32>
    %364 = tpu.matmul %363, %4, %cst_115 {dimension_numbers = #tpu.dot_dimension_numbers<[1], [0], [0], [1], [0, 0, 1, 1], [], []>} : vector<8x256xf32>, vector<256x512xf32>, vector<8x512xf32> -> vector<8x512xf32>
    %365 = vector.broadcast %6 : vector<1x512xf32> to vector<8x512xf32>
    %366 = arith.addf %364, %365 : vector<8x512xf32>
    %367 = vector.extract_strided_slice %366 {offsets = [0, 0], sizes = [8, 128], strides = [1, 1]} : vector<8x512xf32> to vector<8x128xf32>
    %cst_116 = arith.constant 0.000000e+00 : f32
    %368 = vector.broadcast %cst_116 : f32 to vector<8x128xf32>
    %369 = arith.subf %368, %367 : vector<8x128xf32>
    %370 = math.exp %369 : vector<8x128xf32>
    %cst_117 = arith.constant 1.000000e+00 : f32
    %371 = vector.broadcast %cst_117 : f32 to vector<8x128xf32>
    %372 = arith.addf %371, %370 : vector<8x128xf32>
    %373 = tpu.reciprocal %372 {approx = true} : vector<8x128xf32> -> vector<8x128xf32>
    %374 = vector.extract_strided_slice %366 {offsets = [0, 128], sizes = [8, 128], strides = [1, 1]} : vector<8x512xf32> to vector<8x128xf32>
    %cst_118 = arith.constant 0.000000e+00 : f32
    %375 = vector.broadcast %cst_118 : f32 to vector<8x128xf32>
    %376 = arith.subf %375, %374 : vector<8x128xf32>
    %377 = math.exp %376 : vector<8x128xf32>
    %cst_119 = arith.constant 1.000000e+00 : f32
    %378 = vector.broadcast %cst_119 : f32 to vector<8x128xf32>
    %379 = arith.addf %378, %377 : vector<8x128xf32>
    %380 = tpu.reciprocal %379 {approx = true} : vector<8x128xf32> -> vector<8x128xf32>
    %381 = vector.extract_strided_slice %366 {offsets = [0, 256], sizes = [8, 128], strides = [1, 1]} : vector<8x512xf32> to vector<8x128xf32>
    %382 = math.tanh %381 : vector<8x128xf32>
    %383 = vector.extract_strided_slice %366 {offsets = [0, 384], sizes = [8, 128], strides = [1, 1]} : vector<8x512xf32> to vector<8x128xf32>
    %cst_120 = arith.constant 0.000000e+00 : f32
    %384 = vector.broadcast %cst_120 : f32 to vector<8x128xf32>
    %385 = arith.subf %384, %383 : vector<8x128xf32>
    %386 = math.exp %385 : vector<8x128xf32>
    %cst_121 = arith.constant 1.000000e+00 : f32
    %387 = vector.broadcast %cst_121 : f32 to vector<8x128xf32>
    %388 = arith.addf %387, %386 : vector<8x128xf32>
    %389 = tpu.reciprocal %388 {approx = true} : vector<8x128xf32> -> vector<8x128xf32>
    %390 = arith.mulf %380, %314 : vector<8x128xf32>
    %391 = arith.mulf %373, %382 : vector<8x128xf32>
    %392 = arith.addf %390, %391 : vector<8x128xf32>
    %393 = math.tanh %392 : vector<8x128xf32>
    %394 = arith.mulf %389, %393 : vector<8x128xf32>
    %c8_i32_122 = arith.constant 8 : i32
    %395 = arith.muli %arg0, %c8_i32_122 : i32
    %c5_i32 = arith.constant 5 : i32
    %396 = arith.addi %395, %c5_i32 : i32
    %397 = vector.broadcast %396 : i32 to vector<8x1xi32>
    %398 = arith.cmpi eq, %14, %397 : vector<8x1xi32>
    %399 = vector.shape_cast %398 : vector<8x1xi1> to vector<8x1xi1>
    %400 = vector.broadcast %399 : vector<8x1xi1> to vector<8x128xi1>
    %401 = arith.select %400, %360, %323 : vector<8x128xi1>, vector<8x128xf32>
    %402 = vector.shape_cast %398 : vector<8x1xi1> to vector<8x1xi1>
    %403 = vector.broadcast %402 : vector<8x1xi1> to vector<8x128xi1>
    %404 = arith.select %403, %394, %326 : vector<8x128xi1>, vector<8x128xf32>
    %c5 = arith.constant 5 : index
    %c0_123 = arith.constant 0 : index
    %c0_124 = arith.constant 0 : index
    %405 = vector.load %arg1[%c5, %c0_123, %c0_124] : memref<8x8x128xf32, #tpu.memory_space<vmem>>, vector<1x8x128xf32>
    %406 = vector.shape_cast %405 : vector<1x8x128xf32> to vector<8x128xf32>
    %407 = tpu.concatenate %406, %360 in 1 : vector<8x128xf32>, vector<8x128xf32> -> vector<8x256xf32>
    %cst_125 = arith.constant dense<0.000000e+00> : vector<8x512xf32>
    %408 = tpu.matmul %407, %3, %cst_125 {dimension_numbers = #tpu.dot_dimension_numbers<[1], [0], [0], [1], [0, 0, 1, 1], [], []>} : vector<8x256xf32>, vector<256x512xf32>, vector<8x512xf32> -> vector<8x512xf32>
    %409 = vector.broadcast %5 : vector<1x512xf32> to vector<8x512xf32>
    %410 = arith.addf %408, %409 : vector<8x512xf32>
    %411 = vector.extract_strided_slice %410 {offsets = [0, 0], sizes = [8, 128], strides = [1, 1]} : vector<8x512xf32> to vector<8x128xf32>
    %cst_126 = arith.constant 0.000000e+00 : f32
    %412 = vector.broadcast %cst_126 : f32 to vector<8x128xf32>
    %413 = arith.subf %412, %411 : vector<8x128xf32>
    %414 = math.exp %413 : vector<8x128xf32>
    %cst_127 = arith.constant 1.000000e+00 : f32
    %415 = vector.broadcast %cst_127 : f32 to vector<8x128xf32>
    %416 = arith.addf %415, %414 : vector<8x128xf32>
    %417 = tpu.reciprocal %416 {approx = true} : vector<8x128xf32> -> vector<8x128xf32>
    %418 = vector.extract_strided_slice %410 {offsets = [0, 128], sizes = [8, 128], strides = [1, 1]} : vector<8x512xf32> to vector<8x128xf32>
    %cst_128 = arith.constant 0.000000e+00 : f32
    %419 = vector.broadcast %cst_128 : f32 to vector<8x128xf32>
    %420 = arith.subf %419, %418 : vector<8x128xf32>
    %421 = math.exp %420 : vector<8x128xf32>
    %cst_129 = arith.constant 1.000000e+00 : f32
    %422 = vector.broadcast %cst_129 : f32 to vector<8x128xf32>
    %423 = arith.addf %422, %421 : vector<8x128xf32>
    %424 = tpu.reciprocal %423 {approx = true} : vector<8x128xf32> -> vector<8x128xf32>
    %425 = vector.extract_strided_slice %410 {offsets = [0, 256], sizes = [8, 128], strides = [1, 1]} : vector<8x512xf32> to vector<8x128xf32>
    %426 = math.tanh %425 : vector<8x128xf32>
    %427 = vector.extract_strided_slice %410 {offsets = [0, 384], sizes = [8, 128], strides = [1, 1]} : vector<8x512xf32> to vector<8x128xf32>
    %cst_130 = arith.constant 0.000000e+00 : f32
    %428 = vector.broadcast %cst_130 : f32 to vector<8x128xf32>
    %429 = arith.subf %428, %427 : vector<8x128xf32>
    %430 = math.exp %429 : vector<8x128xf32>
    %cst_131 = arith.constant 1.000000e+00 : f32
    %431 = vector.broadcast %cst_131 : f32 to vector<8x128xf32>
    %432 = arith.addf %431, %430 : vector<8x128xf32>
    %433 = tpu.reciprocal %432 {approx = true} : vector<8x128xf32> -> vector<8x128xf32>
    %434 = arith.mulf %424, %358 : vector<8x128xf32>
    %435 = arith.mulf %417, %426 : vector<8x128xf32>
    %436 = arith.addf %434, %435 : vector<8x128xf32>
    %437 = math.tanh %436 : vector<8x128xf32>
    %438 = arith.mulf %433, %437 : vector<8x128xf32>
    %c5_132 = arith.constant 5 : index
    %c0_133 = arith.constant 0 : index
    %c0_134 = arith.constant 0 : index
    %439 = vector.load %arg2[%c5_132, %c0_133, %c0_134] : memref<8x8x128xf32, #tpu.memory_space<vmem>>, vector<1x8x128xf32>
    %440 = vector.shape_cast %439 : vector<1x8x128xf32> to vector<8x128xf32>
    %441 = tpu.concatenate %440, %394 in 1 : vector<8x128xf32>, vector<8x128xf32> -> vector<8x256xf32>
    %cst_135 = arith.constant dense<0.000000e+00> : vector<8x512xf32>
    %442 = tpu.matmul %441, %4, %cst_135 {dimension_numbers = #tpu.dot_dimension_numbers<[1], [0], [0], [1], [0, 0, 1, 1], [], []>} : vector<8x256xf32>, vector<256x512xf32>, vector<8x512xf32> -> vector<8x512xf32>
    %443 = vector.broadcast %6 : vector<1x512xf32> to vector<8x512xf32>
    %444 = arith.addf %442, %443 : vector<8x512xf32>
    %445 = vector.extract_strided_slice %444 {offsets = [0, 0], sizes = [8, 128], strides = [1, 1]} : vector<8x512xf32> to vector<8x128xf32>
    %cst_136 = arith.constant 0.000000e+00 : f32
    %446 = vector.broadcast %cst_136 : f32 to vector<8x128xf32>
    %447 = arith.subf %446, %445 : vector<8x128xf32>
    %448 = math.exp %447 : vector<8x128xf32>
    %cst_137 = arith.constant 1.000000e+00 : f32
    %449 = vector.broadcast %cst_137 : f32 to vector<8x128xf32>
    %450 = arith.addf %449, %448 : vector<8x128xf32>
    %451 = tpu.reciprocal %450 {approx = true} : vector<8x128xf32> -> vector<8x128xf32>
    %452 = vector.extract_strided_slice %444 {offsets = [0, 128], sizes = [8, 128], strides = [1, 1]} : vector<8x512xf32> to vector<8x128xf32>
    %cst_138 = arith.constant 0.000000e+00 : f32
    %453 = vector.broadcast %cst_138 : f32 to vector<8x128xf32>
    %454 = arith.subf %453, %452 : vector<8x128xf32>
    %455 = math.exp %454 : vector<8x128xf32>
    %cst_139 = arith.constant 1.000000e+00 : f32
    %456 = vector.broadcast %cst_139 : f32 to vector<8x128xf32>
    %457 = arith.addf %456, %455 : vector<8x128xf32>
    %458 = tpu.reciprocal %457 {approx = true} : vector<8x128xf32> -> vector<8x128xf32>
    %459 = vector.extract_strided_slice %444 {offsets = [0, 256], sizes = [8, 128], strides = [1, 1]} : vector<8x512xf32> to vector<8x128xf32>
    %460 = math.tanh %459 : vector<8x128xf32>
    %461 = vector.extract_strided_slice %444 {offsets = [0, 384], sizes = [8, 128], strides = [1, 1]} : vector<8x512xf32> to vector<8x128xf32>
    %cst_140 = arith.constant 0.000000e+00 : f32
    %462 = vector.broadcast %cst_140 : f32 to vector<8x128xf32>
    %463 = arith.subf %462, %461 : vector<8x128xf32>
    %464 = math.exp %463 : vector<8x128xf32>
    %cst_141 = arith.constant 1.000000e+00 : f32
    %465 = vector.broadcast %cst_141 : f32 to vector<8x128xf32>
    %466 = arith.addf %465, %464 : vector<8x128xf32>
    %467 = tpu.reciprocal %466 {approx = true} : vector<8x128xf32> -> vector<8x128xf32>
    %468 = arith.mulf %458, %392 : vector<8x128xf32>
    %469 = arith.mulf %451, %460 : vector<8x128xf32>
    %470 = arith.addf %468, %469 : vector<8x128xf32>
    %471 = math.tanh %470 : vector<8x128xf32>
    %472 = arith.mulf %467, %471 : vector<8x128xf32>
    %c8_i32_142 = arith.constant 8 : i32
    %473 = arith.muli %arg0, %c8_i32_142 : i32
    %c6_i32 = arith.constant 6 : i32
    %474 = arith.addi %473, %c6_i32 : i32
    %475 = vector.broadcast %474 : i32 to vector<8x1xi32>
    %476 = arith.cmpi eq, %14, %475 : vector<8x1xi32>
    %477 = vector.shape_cast %476 : vector<8x1xi1> to vector<8x1xi1>
    %478 = vector.broadcast %477 : vector<8x1xi1> to vector<8x128xi1>
    %479 = arith.select %478, %438, %401 : vector<8x128xi1>, vector<8x128xf32>
    %480 = vector.shape_cast %476 : vector<8x1xi1> to vector<8x1xi1>
    %481 = vector.broadcast %480 : vector<8x1xi1> to vector<8x128xi1>
    %482 = arith.select %481, %472, %404 : vector<8x128xi1>, vector<8x128xf32>
    %c6 = arith.constant 6 : index
    %c0_143 = arith.constant 0 : index
    %c0_144 = arith.constant 0 : index
    %483 = vector.load %arg1[%c6, %c0_143, %c0_144] : memref<8x8x128xf32, #tpu.memory_space<vmem>>, vector<1x8x128xf32>
    %484 = vector.shape_cast %483 : vector<1x8x128xf32> to vector<8x128xf32>
    %485 = tpu.concatenate %484, %438 in 1 : vector<8x128xf32>, vector<8x128xf32> -> vector<8x256xf32>
    %cst_145 = arith.constant dense<0.000000e+00> : vector<8x512xf32>
    %486 = tpu.matmul %485, %3, %cst_145 {dimension_numbers = #tpu.dot_dimension_numbers<[1], [0], [0], [1], [0, 0, 1, 1], [], []>} : vector<8x256xf32>, vector<256x512xf32>, vector<8x512xf32> -> vector<8x512xf32>
    %487 = vector.broadcast %5 : vector<1x512xf32> to vector<8x512xf32>
    %488 = arith.addf %486, %487 : vector<8x512xf32>
    %489 = vector.extract_strided_slice %488 {offsets = [0, 0], sizes = [8, 128], strides = [1, 1]} : vector<8x512xf32> to vector<8x128xf32>
    %cst_146 = arith.constant 0.000000e+00 : f32
    %490 = vector.broadcast %cst_146 : f32 to vector<8x128xf32>
    %491 = arith.subf %490, %489 : vector<8x128xf32>
    %492 = math.exp %491 : vector<8x128xf32>
    %cst_147 = arith.constant 1.000000e+00 : f32
    %493 = vector.broadcast %cst_147 : f32 to vector<8x128xf32>
    %494 = arith.addf %493, %492 : vector<8x128xf32>
    %495 = tpu.reciprocal %494 {approx = true} : vector<8x128xf32> -> vector<8x128xf32>
    %496 = vector.extract_strided_slice %488 {offsets = [0, 128], sizes = [8, 128], strides = [1, 1]} : vector<8x512xf32> to vector<8x128xf32>
    %cst_148 = arith.constant 0.000000e+00 : f32
    %497 = vector.broadcast %cst_148 : f32 to vector<8x128xf32>
    %498 = arith.subf %497, %496 : vector<8x128xf32>
    %499 = math.exp %498 : vector<8x128xf32>
    %cst_149 = arith.constant 1.000000e+00 : f32
    %500 = vector.broadcast %cst_149 : f32 to vector<8x128xf32>
    %501 = arith.addf %500, %499 : vector<8x128xf32>
    %502 = tpu.reciprocal %501 {approx = true} : vector<8x128xf32> -> vector<8x128xf32>
    %503 = vector.extract_strided_slice %488 {offsets = [0, 256], sizes = [8, 128], strides = [1, 1]} : vector<8x512xf32> to vector<8x128xf32>
    %504 = math.tanh %503 : vector<8x128xf32>
    %505 = vector.extract_strided_slice %488 {offsets = [0, 384], sizes = [8, 128], strides = [1, 1]} : vector<8x512xf32> to vector<8x128xf32>
    %cst_150 = arith.constant 0.000000e+00 : f32
    %506 = vector.broadcast %cst_150 : f32 to vector<8x128xf32>
    %507 = arith.subf %506, %505 : vector<8x128xf32>
    %508 = math.exp %507 : vector<8x128xf32>
    %cst_151 = arith.constant 1.000000e+00 : f32
    %509 = vector.broadcast %cst_151 : f32 to vector<8x128xf32>
    %510 = arith.addf %509, %508 : vector<8x128xf32>
    %511 = tpu.reciprocal %510 {approx = true} : vector<8x128xf32> -> vector<8x128xf32>
    %512 = arith.mulf %502, %436 : vector<8x128xf32>
    %513 = arith.mulf %495, %504 : vector<8x128xf32>
    %514 = arith.addf %512, %513 : vector<8x128xf32>
    %515 = math.tanh %514 : vector<8x128xf32>
    %516 = arith.mulf %511, %515 : vector<8x128xf32>
    %c6_152 = arith.constant 6 : index
    %c0_153 = arith.constant 0 : index
    %c0_154 = arith.constant 0 : index
    %517 = vector.load %arg2[%c6_152, %c0_153, %c0_154] : memref<8x8x128xf32, #tpu.memory_space<vmem>>, vector<1x8x128xf32>
    %518 = vector.shape_cast %517 : vector<1x8x128xf32> to vector<8x128xf32>
    %519 = tpu.concatenate %518, %472 in 1 : vector<8x128xf32>, vector<8x128xf32> -> vector<8x256xf32>
    %cst_155 = arith.constant dense<0.000000e+00> : vector<8x512xf32>
    %520 = tpu.matmul %519, %4, %cst_155 {dimension_numbers = #tpu.dot_dimension_numbers<[1], [0], [0], [1], [0, 0, 1, 1], [], []>} : vector<8x256xf32>, vector<256x512xf32>, vector<8x512xf32> -> vector<8x512xf32>
    %521 = vector.broadcast %6 : vector<1x512xf32> to vector<8x512xf32>
    %522 = arith.addf %520, %521 : vector<8x512xf32>
    %523 = vector.extract_strided_slice %522 {offsets = [0, 0], sizes = [8, 128], strides = [1, 1]} : vector<8x512xf32> to vector<8x128xf32>
    %cst_156 = arith.constant 0.000000e+00 : f32
    %524 = vector.broadcast %cst_156 : f32 to vector<8x128xf32>
    %525 = arith.subf %524, %523 : vector<8x128xf32>
    %526 = math.exp %525 : vector<8x128xf32>
    %cst_157 = arith.constant 1.000000e+00 : f32
    %527 = vector.broadcast %cst_157 : f32 to vector<8x128xf32>
    %528 = arith.addf %527, %526 : vector<8x128xf32>
    %529 = tpu.reciprocal %528 {approx = true} : vector<8x128xf32> -> vector<8x128xf32>
    %530 = vector.extract_strided_slice %522 {offsets = [0, 128], sizes = [8, 128], strides = [1, 1]} : vector<8x512xf32> to vector<8x128xf32>
    %cst_158 = arith.constant 0.000000e+00 : f32
    %531 = vector.broadcast %cst_158 : f32 to vector<8x128xf32>
    %532 = arith.subf %531, %530 : vector<8x128xf32>
    %533 = math.exp %532 : vector<8x128xf32>
    %cst_159 = arith.constant 1.000000e+00 : f32
    %534 = vector.broadcast %cst_159 : f32 to vector<8x128xf32>
    %535 = arith.addf %534, %533 : vector<8x128xf32>
    %536 = tpu.reciprocal %535 {approx = true} : vector<8x128xf32> -> vector<8x128xf32>
    %537 = vector.extract_strided_slice %522 {offsets = [0, 256], sizes = [8, 128], strides = [1, 1]} : vector<8x512xf32> to vector<8x128xf32>
    %538 = math.tanh %537 : vector<8x128xf32>
    %539 = vector.extract_strided_slice %522 {offsets = [0, 384], sizes = [8, 128], strides = [1, 1]} : vector<8x512xf32> to vector<8x128xf32>
    %cst_160 = arith.constant 0.000000e+00 : f32
    %540 = vector.broadcast %cst_160 : f32 to vector<8x128xf32>
    %541 = arith.subf %540, %539 : vector<8x128xf32>
    %542 = math.exp %541 : vector<8x128xf32>
    %cst_161 = arith.constant 1.000000e+00 : f32
    %543 = vector.broadcast %cst_161 : f32 to vector<8x128xf32>
    %544 = arith.addf %543, %542 : vector<8x128xf32>
    %545 = tpu.reciprocal %544 {approx = true} : vector<8x128xf32> -> vector<8x128xf32>
    %546 = arith.mulf %536, %470 : vector<8x128xf32>
    %547 = arith.mulf %529, %538 : vector<8x128xf32>
    %548 = arith.addf %546, %547 : vector<8x128xf32>
    %549 = math.tanh %548 : vector<8x128xf32>
    %550 = arith.mulf %545, %549 : vector<8x128xf32>
    %c8_i32_162 = arith.constant 8 : i32
    %551 = arith.muli %arg0, %c8_i32_162 : i32
    %c7_i32 = arith.constant 7 : i32
    %552 = arith.addi %551, %c7_i32 : i32
    %553 = vector.broadcast %552 : i32 to vector<8x1xi32>
    %554 = arith.cmpi eq, %14, %553 : vector<8x1xi32>
    %555 = vector.shape_cast %554 : vector<8x1xi1> to vector<8x1xi1>
    %556 = vector.broadcast %555 : vector<8x1xi1> to vector<8x128xi1>
    %557 = arith.select %556, %516, %479 : vector<8x128xi1>, vector<8x128xf32>
    %558 = vector.shape_cast %554 : vector<8x1xi1> to vector<8x1xi1>
    %559 = vector.broadcast %558 : vector<8x1xi1> to vector<8x128xi1>
    %560 = arith.select %559, %550, %482 : vector<8x128xi1>, vector<8x128xf32>
    %c7 = arith.constant 7 : index
    %c0_163 = arith.constant 0 : index
    %c0_164 = arith.constant 0 : index
    %561 = vector.load %arg1[%c7, %c0_163, %c0_164] : memref<8x8x128xf32, #tpu.memory_space<vmem>>, vector<1x8x128xf32>
    %562 = vector.shape_cast %561 : vector<1x8x128xf32> to vector<8x128xf32>
    %563 = tpu.concatenate %562, %516 in 1 : vector<8x128xf32>, vector<8x128xf32> -> vector<8x256xf32>
    %cst_165 = arith.constant dense<0.000000e+00> : vector<8x512xf32>
    %564 = tpu.matmul %563, %3, %cst_165 {dimension_numbers = #tpu.dot_dimension_numbers<[1], [0], [0], [1], [0, 0, 1, 1], [], []>} : vector<8x256xf32>, vector<256x512xf32>, vector<8x512xf32> -> vector<8x512xf32>
    %565 = vector.broadcast %5 : vector<1x512xf32> to vector<8x512xf32>
    %566 = arith.addf %564, %565 : vector<8x512xf32>
    %567 = vector.extract_strided_slice %566 {offsets = [0, 0], sizes = [8, 128], strides = [1, 1]} : vector<8x512xf32> to vector<8x128xf32>
    %cst_166 = arith.constant 0.000000e+00 : f32
    %568 = vector.broadcast %cst_166 : f32 to vector<8x128xf32>
    %569 = arith.subf %568, %567 : vector<8x128xf32>
    %570 = math.exp %569 : vector<8x128xf32>
    %cst_167 = arith.constant 1.000000e+00 : f32
    %571 = vector.broadcast %cst_167 : f32 to vector<8x128xf32>
    %572 = arith.addf %571, %570 : vector<8x128xf32>
    %573 = tpu.reciprocal %572 {approx = true} : vector<8x128xf32> -> vector<8x128xf32>
    %574 = vector.extract_strided_slice %566 {offsets = [0, 128], sizes = [8, 128], strides = [1, 1]} : vector<8x512xf32> to vector<8x128xf32>
    %cst_168 = arith.constant 0.000000e+00 : f32
    %575 = vector.broadcast %cst_168 : f32 to vector<8x128xf32>
    %576 = arith.subf %575, %574 : vector<8x128xf32>
    %577 = math.exp %576 : vector<8x128xf32>
    %cst_169 = arith.constant 1.000000e+00 : f32
    %578 = vector.broadcast %cst_169 : f32 to vector<8x128xf32>
    %579 = arith.addf %578, %577 : vector<8x128xf32>
    %580 = tpu.reciprocal %579 {approx = true} : vector<8x128xf32> -> vector<8x128xf32>
    %581 = vector.extract_strided_slice %566 {offsets = [0, 256], sizes = [8, 128], strides = [1, 1]} : vector<8x512xf32> to vector<8x128xf32>
    %582 = math.tanh %581 : vector<8x128xf32>
    %583 = vector.extract_strided_slice %566 {offsets = [0, 384], sizes = [8, 128], strides = [1, 1]} : vector<8x512xf32> to vector<8x128xf32>
    %cst_170 = arith.constant 0.000000e+00 : f32
    %584 = vector.broadcast %cst_170 : f32 to vector<8x128xf32>
    %585 = arith.subf %584, %583 : vector<8x128xf32>
    %586 = math.exp %585 : vector<8x128xf32>
    %cst_171 = arith.constant 1.000000e+00 : f32
    %587 = vector.broadcast %cst_171 : f32 to vector<8x128xf32>
    %588 = arith.addf %587, %586 : vector<8x128xf32>
    %589 = tpu.reciprocal %588 {approx = true} : vector<8x128xf32> -> vector<8x128xf32>
    %590 = arith.mulf %580, %514 : vector<8x128xf32>
    %591 = arith.mulf %573, %582 : vector<8x128xf32>
    %592 = arith.addf %590, %591 : vector<8x128xf32>
    %593 = math.tanh %592 : vector<8x128xf32>
    %594 = arith.mulf %589, %593 : vector<8x128xf32>
    %c7_172 = arith.constant 7 : index
    %c0_173 = arith.constant 0 : index
    %c0_174 = arith.constant 0 : index
    %595 = vector.load %arg2[%c7_172, %c0_173, %c0_174] : memref<8x8x128xf32, #tpu.memory_space<vmem>>, vector<1x8x128xf32>
    %596 = vector.shape_cast %595 : vector<1x8x128xf32> to vector<8x128xf32>
    %597 = tpu.concatenate %596, %550 in 1 : vector<8x128xf32>, vector<8x128xf32> -> vector<8x256xf32>
    %cst_175 = arith.constant dense<0.000000e+00> : vector<8x512xf32>
    %598 = tpu.matmul %597, %4, %cst_175 {dimension_numbers = #tpu.dot_dimension_numbers<[1], [0], [0], [1], [0, 0, 1, 1], [], []>} : vector<8x256xf32>, vector<256x512xf32>, vector<8x512xf32> -> vector<8x512xf32>
    %599 = vector.broadcast %6 : vector<1x512xf32> to vector<8x512xf32>
    %600 = arith.addf %598, %599 : vector<8x512xf32>
    %601 = vector.extract_strided_slice %600 {offsets = [0, 0], sizes = [8, 128], strides = [1, 1]} : vector<8x512xf32> to vector<8x128xf32>
    %cst_176 = arith.constant 0.000000e+00 : f32
    %602 = vector.broadcast %cst_176 : f32 to vector<8x128xf32>
    %603 = arith.subf %602, %601 : vector<8x128xf32>
    %604 = math.exp %603 : vector<8x128xf32>
    %cst_177 = arith.constant 1.000000e+00 : f32
    %605 = vector.broadcast %cst_177 : f32 to vector<8x128xf32>
    %606 = arith.addf %605, %604 : vector<8x128xf32>
    %607 = tpu.reciprocal %606 {approx = true} : vector<8x128xf32> -> vector<8x128xf32>
    %608 = vector.extract_strided_slice %600 {offsets = [0, 128], sizes = [8, 128], strides = [1, 1]} : vector<8x512xf32> to vector<8x128xf32>
    %cst_178 = arith.constant 0.000000e+00 : f32
    %609 = vector.broadcast %cst_178 : f32 to vector<8x128xf32>
    %610 = arith.subf %609, %608 : vector<8x128xf32>
    %611 = math.exp %610 : vector<8x128xf32>
    %cst_179 = arith.constant 1.000000e+00 : f32
    %612 = vector.broadcast %cst_179 : f32 to vector<8x128xf32>
    %613 = arith.addf %612, %611 : vector<8x128xf32>
    %614 = tpu.reciprocal %613 {approx = true} : vector<8x128xf32> -> vector<8x128xf32>
    %615 = vector.extract_strided_slice %600 {offsets = [0, 256], sizes = [8, 128], strides = [1, 1]} : vector<8x512xf32> to vector<8x128xf32>
    %616 = math.tanh %615 : vector<8x128xf32>
    %617 = vector.extract_strided_slice %600 {offsets = [0, 384], sizes = [8, 128], strides = [1, 1]} : vector<8x512xf32> to vector<8x128xf32>
    %cst_180 = arith.constant 0.000000e+00 : f32
    %618 = vector.broadcast %cst_180 : f32 to vector<8x128xf32>
    %619 = arith.subf %618, %617 : vector<8x128xf32>
    %620 = math.exp %619 : vector<8x128xf32>
    %cst_181 = arith.constant 1.000000e+00 : f32
    %621 = vector.broadcast %cst_181 : f32 to vector<8x128xf32>
    %622 = arith.addf %621, %620 : vector<8x128xf32>
    %623 = tpu.reciprocal %622 {approx = true} : vector<8x128xf32> -> vector<8x128xf32>
    %624 = arith.mulf %614, %548 : vector<8x128xf32>
    %625 = arith.mulf %607, %616 : vector<8x128xf32>
    %626 = arith.addf %624, %625 : vector<8x128xf32>
    %627 = math.tanh %626 : vector<8x128xf32>
    %628 = arith.mulf %623, %627 : vector<8x128xf32>
    %c8_i32_182 = arith.constant 8 : i32
    %629 = arith.muli %arg0, %c8_i32_182 : i32
    %c8_i32_183 = arith.constant 8 : i32
    %630 = arith.addi %629, %c8_i32_183 : i32
    %631 = vector.broadcast %630 : i32 to vector<8x1xi32>
    %632 = arith.cmpi eq, %14, %631 : vector<8x1xi32>
    %633 = vector.shape_cast %632 : vector<8x1xi1> to vector<8x1xi1>
    %634 = vector.broadcast %633 : vector<8x1xi1> to vector<8x128xi1>
    %635 = arith.select %634, %594, %557 : vector<8x128xi1>, vector<8x128xf32>
    %636 = vector.shape_cast %632 : vector<8x1xi1> to vector<8x1xi1>
    %637 = vector.broadcast %636 : vector<8x1xi1> to vector<8x128xi1>
    %638 = arith.select %637, %628, %560 : vector<8x128xi1>, vector<8x128xf32>
    %c0_184 = arith.constant 0 : index
    %c0_185 = arith.constant 0 : index
    %639 = vector.load %arg11[%c0_184, %c0_185] : memref<8x128xf32, #tpu.memory_space<vmem>>, vector<8x128xf32>
    tpu.vector_store %arg11[%c0_184, %c0_185], %594 {strides = array<i32>} : memref<8x128xf32, #tpu.memory_space<vmem>>, vector<8x128xf32>,
    %c0_186 = arith.constant 0 : index
    %c0_187 = arith.constant 0 : index
    %640 = vector.load %arg12[%c0_186, %c0_187] : memref<8x128xf32, #tpu.memory_space<vmem>>, vector<8x128xf32>
    tpu.vector_store %arg12[%c0_186, %c0_187], %592 {strides = array<i32>} : memref<8x128xf32, #tpu.memory_space<vmem>>, vector<8x128xf32>,
    %c0_188 = arith.constant 0 : index
    %c0_189 = arith.constant 0 : index
    %641 = vector.load %arg13[%c0_188, %c0_189] : memref<8x128xf32, #tpu.memory_space<vmem>>, vector<8x128xf32>
    tpu.vector_store %arg13[%c0_188, %c0_189], %628 {strides = array<i32>} : memref<8x128xf32, #tpu.memory_space<vmem>>, vector<8x128xf32>,
    %c0_190 = arith.constant 0 : index
    %c0_191 = arith.constant 0 : index
    %642 = vector.load %arg14[%c0_190, %c0_191] : memref<8x128xf32, #tpu.memory_space<vmem>>, vector<8x128xf32>
    tpu.vector_store %arg14[%c0_190, %c0_191], %626 {strides = array<i32>} : memref<8x128xf32, #tpu.memory_space<vmem>>, vector<8x128xf32>,
    %c0_192 = arith.constant 0 : index
    %c0_193 = arith.constant 0 : index
    %643 = vector.load %arg15[%c0_192, %c0_193] : memref<8x128xf32, #tpu.memory_space<vmem>>, vector<8x128xf32>
    tpu.vector_store %arg15[%c0_192, %c0_193], %635 {strides = array<i32>} : memref<8x128xf32, #tpu.memory_space<vmem>>, vector<8x128xf32>,
    %c0_194 = arith.constant 0 : index
    %c0_195 = arith.constant 0 : index
    %644 = vector.load %arg16[%c0_194, %c0_195] : memref<8x128xf32, #tpu.memory_space<vmem>>, vector<8x128xf32>
    tpu.vector_store %arg16[%c0_194, %c0_195], %638 {strides = array<i32>} : memref<8x128xf32, #tpu.memory_space<vmem>>, vector<8x128xf32>,
    %c1_i32_196 = arith.constant 1 : i32
    %645 = arith.cmpi eq, %arg0, %c1_i32_196 : i32
    %646 = arith.extui %645 : i1 to i32
    %c0_i32_197 = arith.constant 0 : i32
    %647 = arith.cmpi ne, %646, %c0_i32_197 : i32
    scf.if %647 {
      %648 = tpu.concatenate %635, %638 in 1 : vector<8x128xf32>, vector<8x128xf32> -> vector<8x256xf32>
      %cst_198 = arith.constant dense<0.000000e+00> : vector<8x128xf32>
      %649 = tpu.matmul %648, %7, %cst_198 {dimension_numbers = #tpu.dot_dimension_numbers<[1], [0], [0], [1], [0, 0, 1, 1], [], []>} : vector<8x256xf32>, vector<256x128xf32>, vector<8x128xf32> -> vector<8x128xf32>
      %c0_199 = arith.constant 0 : index
      %c0_200 = arith.constant 0 : index
      %650 = vector.load %arg10[%c0_199, %c0_200] : memref<8x128xf32, #tpu.memory_space<vmem>>, vector<8x128xf32>
      tpu.vector_store %arg10[%c0_199, %c0_200], %649 {strides = array<i32>} : memref<8x128xf32, #tpu.memory_space<vmem>>, vector<8x128xf32>,
    } else {
    }
    return
  }
  func.func @transform_0(%arg0: i32) -> (i32, i32, i32) {
    %c0_i32 = arith.constant 0 : i32
    %c0_i32_0 = arith.constant 0 : i32
    %c0_i32_1 = arith.constant 0 : i32
    return %arg0, %c0_i32, %c0_i32_0 : i32, i32, i32
  }
  func.func @transform_1(%arg0: i32) -> (i32, i32, i32) {
    %c0_i32 = arith.constant 0 : i32
    %c0_i32_0 = arith.constant 0 : i32
    %c0_i32_1 = arith.constant 0 : i32
    return %arg0, %c0_i32, %c0_i32_0 : i32, i32, i32
  }
  func.func @transform_2(%arg0: i32) -> (i32, i32) {
    %c0_i32 = arith.constant 0 : i32
    %c0_i32_0 = arith.constant 0 : i32
    %c0_i32_1 = arith.constant 0 : i32
    return %c0_i32, %c0_i32_0 : i32, i32
  }
  func.func @transform_3(%arg0: i32) -> (i32, i32) {
    %c0_i32 = arith.constant 0 : i32
    %c0_i32_0 = arith.constant 0 : i32
    %c0_i32_1 = arith.constant 0 : i32
    return %c0_i32, %c0_i32_0 : i32, i32
  }
  func.func @transform_4(%arg0: i32) -> (i32, i32) {
    %c0_i32 = arith.constant 0 : i32
    %c0_i32_0 = arith.constant 0 : i32
    %c0_i32_1 = arith.constant 0 : i32
    return %c0_i32, %c0_i32_0 : i32, i32
  }
  func.func @transform_5(%arg0: i32) -> (i32, i32) {
    %c0_i32 = arith.constant 0 : i32
    %c0_i32_0 = arith.constant 0 : i32
    %c0_i32_1 = arith.constant 0 : i32
    return %c0_i32, %c0_i32_0 : i32, i32
  }
  func.func @transform_6(%arg0: i32) -> (i32, i32) {
    %c0_i32 = arith.constant 0 : i32
    %c0_i32_0 = arith.constant 0 : i32
    %c0_i32_1 = arith.constant 0 : i32
    return %c0_i32, %c0_i32_0 : i32, i32
  }
  func.func @transform_7(%arg0: i32) -> (i32, i32) {
    %c0_i32 = arith.constant 0 : i32
    %c0_i32_0 = arith.constant 0 : i32
    %c0_i32_1 = arith.constant 0 : i32
    return %c0_i32, %c0_i32_0 : i32, i32
  }
  func.func @transform_8(%arg0: i32) -> (i32, i32) {
    %c0_i32 = arith.constant 0 : i32
    %c0_i32_0 = arith.constant 0 : i32
    %c0_i32_1 = arith.constant 0 : i32
    return %c0_i32, %c0_i32_0 : i32, i32
  }
  func.func @transform_9(%arg0: i32) -> (i32, i32) {
    %c0_i32 = arith.constant 0 : i32
    %c0_i32_0 = arith.constant 0 : i32
    %c0_i32_1 = arith.constant 0 : i32
    return %c0_i32, %c0_i32_0 : i32, i32
  }
}

</mosaic_0001>

<llo_original>
// kernel: bilstm_forward.1
$region0: #{bilstm_forward.1}
  #allocation0 [shape = 'u32[]', space=smem, size = 0x4, offset = 0x4, fixed_abs, tag = 'smem constant byte address 0x4 - core index']
  #allocation1 [shape = 'u32[72,128]{1,0:T(1,128)}', space=vmem, size = 0x9000, scoped, tag = 'internal scratch']
  #allocation2 [shape = 'f32[8,128]{1,0:T(8,128)}', space=vmem, size = 0x1000, scoped, tag = 'scratch operand']
  #allocation3 [shape = 'f32[8,128]{1,0:T(8,128)}', space=vmem, size = 0x1000, scoped, tag = 'scratch operand']
  #allocation4 [shape = 'f32[8,128]{1,0:T(8,128)}', space=vmem, size = 0x1000, scoped, tag = 'scratch operand']
  #allocation5 [shape = 'f32[8,128]{1,0:T(8,128)}', space=vmem, size = 0x1000, scoped, tag = 'scratch operand']
  #allocation6 [shape = 'f32[8,128]{1,0:T(8,128)}', space=vmem, size = 0x1000, scoped, tag = 'scratch operand']
  #allocation7 [shape = 'f32[8,128]{1,0:T(8,128)}', space=vmem, size = 0x1000, scoped, tag = 'scratch operand']
  %s0 = inlined_call_operand.vmem [shape: f32[16,8,128], index: 0, kind: input, shape index: {}]
  %s1 = inlined_call_operand.vmem [shape: f32[16,8,128], index: 1, kind: input, shape index: {}]
  %s2 = inlined_call_operand.vmem [shape: s32[8,1], index: 2, kind: input, shape index: {}]
  %s3 = inlined_call_operand.vmem [shape: f32[256,512], index: 3, kind: input, shape index: {}]
  %s4 = inlined_call_operand.vmem [shape: f32[1,512], index: 4, kind: input, shape index: {}]
  %s5 = inlined_call_operand.hbm [shape: f32[256,512], index: 5, kind: input, shape index: {}]
  %s6 = inlined_call_operand.vmem [shape: f32[1,512], index: 6, kind: input, shape index: {}]
  %s7 = inlined_call_operand.vmem [shape: f32[4,128], index: 7, kind: input, shape index: {}]
  %s8 = inlined_call_operand.vmem [shape: f32[256,128], index: 8, kind: input, shape index: {}]
  %s9 = inlined_call_operand.hbm [shape: f32[8,128], index: 9, kind: output, shape index: {}]
  %s10 = sld [smem:[#allocation0]]
  $region81: #{bilstm_forward.1} parent=0
    _
  %s12 = ssub.s32 1, %s10
  %s13 = scalar_select 0, %s12, %s10
  $region1: #{bilstm_forward.1} parent=0
    #allocation8 [shape = 'u8[524288]{0}', space=vmem, size = 0x80000, scoped, tag = 'input window, operand 5, single buffered']
    #allocation9 [shape = 's32[2]{0}', space=sflag, size = 0x8, scoped, tag = 'scoped memory for bilstm_forward.1']
    #allocation10 [shape = 's32[2]{0}', space=sflag, size = 0x8, scoped, tag = 'scoped memory for bilstm_forward.1']
    #allocation11 [shape = 'u8[4096]{0}', space=vmem, size = 0x1000, scoped, tag = 'output window, operand 0, single buffered']
    %14 = vsyncpa [#allocation9], 0
    %15 = vsyncpa [#allocation10], 0
    loop: start=0, step=1, limit=4
    $region2: #{bilstm_forward.1} parent=1 // loop_pre_header
      _
    $region3: #{bilstm_forward.1} parent=1 // loop_header
      %s17 = sphi 0, %s21
      %p18 = scmp.ge.s32.totalorder %s17, 4
      %s27 = sphi 0, %s29
      %s30 = sphi 0, %s27
      %s31 = sphi 0, %s30
      %s47 = sphi 0, %s31
      %s53 = sphi 0, %s55
      %s56 = sphi 0, %s53
      %s57 = sphi 0, %s56
      %s73 = sphi 0, %s57
      %s77 = sphi 0, %s77
      %s79 = sphi 0, %s77
      %s80 = sphi 0, %s79
      %s94 = sphi 0, %s80
      %s98 = sphi 0, %s98
      %s100 = sphi 0, %s98
      %s101 = sphi 0, %s100
      %s115 = sphi 0, %s101
      %s119 = sphi 0, %s119
      %s121 = sphi 0, %s119
      %s122 = sphi 0, %s121
      %s136 = sphi 0, %s122
      %s140 = sphi 0, %s140
      %s142 = sphi 0, %s140
      %s143 = sphi 0, %s142
      %s157 = sphi 0, %s143
      %s161 = sphi 0, %s161
      %s163 = sphi 0, %s161
      %s164 = sphi 0, %s163
      %s178 = sphi 0, %s164
      %s182 = sphi 0, %s182
      %s184 = sphi 0, %s182
      %s185 = sphi 0, %s184
      %s199 = sphi 0, %s185
      %s203 = sphi 0, %s203
      %s205 = sphi 0, %s203
      %s206 = sphi 0, %s205
      %s220 = sphi 0, %s206
      %s224 = sphi 0, %s224
      %s226 = sphi 0, %s224
      %s227 = sphi 0, %s226
      %s241 = sphi 0, %s227
    $region4: #{bilstm_forward.1} parent=1 // loop_header_branch
      %20 = sbr.rel (%p18) target = $region8
    $region5: #{bilstm_forward.1} parent=1 // loop_body
      %s22 = ssub.s32 %s17, 1
      %s23 = ssub.s32 %s17, 2
      %s24 = sadd.s32 %s17, 1
      %s25 = ssub.s32 %s17, %s24
      %p26 = scmp.eq.s32.totalorder %s25, 0
      %s28 = sadd.s32 %s27, 1
      %s29 = scalar_select %p26, %s27, %s28
      %p32 = pneg %p26
      %p33 = scmp.eq.s32.totalorder %s17, 1
      %p34 = por %p32, %p33
      %p35 = scmp.ne.s32.totalorder %s27, %s30
      %p36 = scmp.eq.s32.totalorder %s17, 0
      %p37 = por %p35, %p36
      %p38 = scmp.ne.s32.totalorder %s27, %s30
      %p39 = scmp.eq.s32.totalorder %s22, 1
      %p40 = por %p38, %p39
      %p41 = scmp.ne.s32.totalorder %s30, %s31
      %p42 = scmp.eq.s32.totalorder %s22, 0
      %p43 = por %p41, %p42
      %p44 = scmp.ne.s32.totalorder %s30, %s31
      %p45 = scmp.eq.s32.totalorder %s23, 1
      %p46 = por %p44, %p45
      %p48 = scmp.ne.s32.totalorder %s31, %s47
      %p49 = scmp.eq.s32.totalorder %s23, 0
      %p50 = por %p48, %p49
      %s51 = ssub.s32 %s17, %s24
      %p52 = scmp.eq.s32.totalorder %s51, 0
      %s54 = sadd.s32 %s53, 1
      %s55 = scalar_select %p52, %s53, %s54
      %p58 = pneg %p52
      %p59 = scmp.eq.s32.totalorder %s17, 1
      %p60 = por %p58, %p59
      %p61 = scmp.ne.s32.totalorder %s53, %s56
      %p62 = scmp.eq.s32.totalorder %s17, 0
      %p63 = por %p61, %p62
      %p64 = scmp.ne.s32.totalorder %s53, %s56
      %p65 = scmp.eq.s32.totalorder %s22, 1
      %p66 = por %p64, %p65
      %p67 = scmp.ne.s32.totalorder %s56, %s57
      %p68 = scmp.eq.s32.totalorder %s22, 0
      %p69 = por %p67, %p68
      %p70 = scmp.ne.s32.totalorder %s56, %s57
      %p71 = scmp.eq.s32.totalorder %s23, 1
      %p72 = por %p70, %p71
      %p74 = scmp.ne.s32.totalorder %s57, %s73
      %p75 = scmp.eq.s32.totalorder %s23, 0
      %p76 = por %p74, %p75
      %s78 = sadd.s32 %s77, 1
      %p81 = scmp.eq.s32.totalorder %s17, 1
      %p82 = scmp.ne.s32.totalorder %s77, %s79
      %p83 = scmp.eq.s32.totalorder %s17, 0
      %p84 = por %p82, %p83
      %p85 = scmp.ne.s32.totalorder %s77, %s79
      %p86 = scmp.eq.s32.totalorder %s22, 1
      %p87 = por %p85, %p86
      %p88 = scmp.ne.s32.totalorder %s79, %s80
      %p89 = scmp.eq.s32.totalorder %s22, 0
      %p90 = por %p88, %p89
      %p91 = scmp.ne.s32.totalorder %s79, %s80
      %p92 = scmp.eq.s32.totalorder %s23, 1
      %p93 = por %p91, %p92
      %p95 = scmp.ne.s32.totalorder %s80, %s94
      %p96 = scmp.eq.s32.totalorder %s23, 0
      %p97 = por %p95, %p96
      %s99 = sadd.s32 %s98, 1
      %p102 = scmp.eq.s32.totalorder %s17, 1
      %p103 = scmp.ne.s32.totalorder %s98, %s100
      %p104 = scmp.eq.s32.totalorder %s17, 0
      %p105 = por %p103, %p104
      %p106 = scmp.ne.s32.totalorder %s98, %s100
      %p107 = scmp.eq.s32.totalorder %s22, 1
      %p108 = por %p106, %p107
      %p109 = scmp.ne.s32.totalorder %s100, %s101
      %p110 = scmp.eq.s32.totalorder %s22, 0
      %p111 = por %p109, %p110
      %p112 = scmp.ne.s32.totalorder %s100, %s101
      %p113 = scmp.eq.s32.totalorder %s23, 1
      %p114 = por %p112, %p113
      %p116 = scmp.ne.s32.totalorder %s101, %s115
      %p117 = scmp.eq.s32.totalorder %s23, 0
      %p118 = por %p116, %p117
      %s120 = sadd.s32 %s119, 1
      %p123 = scmp.eq.s32.totalorder %s17, 1
      %p124 = scmp.ne.s32.totalorder %s119, %s121
      %p125 = scmp.eq.s32.totalorder %s17, 0
      %p126 = por %p124, %p125
      %p127 = scmp.ne.s32.totalorder %s119, %s121
      %p128 = scmp.eq.s32.totalorder %s22, 1
      %p129 = por %p127, %p128
      %p130 = scmp.ne.s32.totalorder %s121, %s122
      %p131 = scmp.eq.s32.totalorder %s22, 0
      %p132 = por %p130, %p131
      %p133 = scmp.ne.s32.totalorder %s121, %s122
      %p134 = scmp.eq.s32.totalorder %s23, 1
      %p135 = por %p133, %p134
      %p137 = scmp.ne.s32.totalorder %s122, %s136
      %p138 = scmp.eq.s32.totalorder %s23, 0
      %p139 = por %p137, %p138
      %s141 = sadd.s32 %s140, 1
      %p144 = scmp.eq.s32.totalorder %s17, 1
      %p145 = scmp.ne.s32.totalorder %s140, %s142
      %p146 = scmp.eq.s32.totalorder %s17, 0
      %p147 = por %p145, %p146
      %p148 = scmp.ne.s32.totalorder %s140, %s142
      %p149 = scmp.eq.s32.totalorder %s22, 1
      %p150 = por %p148, %p149
      %p151 = scmp.ne.s32.totalorder %s142, %s143
      %p152 = scmp.eq.s32.totalorder %s22, 0
      %p153 = por %p151, %p152
      %p154 = scmp.ne.s32.totalorder %s142, %s143
      %p155 = scmp.eq.s32.totalorder %s23, 1
      %p156 = por %p154, %p155
      %p158 = scmp.ne.s32.totalorder %s143, %s157
      %p159 = scmp.eq.s32.totalorder %s23, 0
      %p160 = por %p158, %p159
      %s162 = sadd.s32 %s161, 1
      %p165 = scmp.eq.s32.totalorder %s17, 1
      %p166 = scmp.ne.s32.totalorder %s161, %s163
      %p167 = scmp.eq.s32.totalorder %s17, 0
      %p168 = por %p166, %p167
      %p169 = scmp.ne.s32.totalorder %s161, %s163
      %p170 = scmp.eq.s32.totalorder %s22, 1
      %p171 = por %p169, %p170
      %p172 = scmp.ne.s32.totalorder %s163, %s164
      %p173 = scmp.eq.s32.totalorder %s22, 0
      %p174 = por %p172, %p173
      %p175 = scmp.ne.s32.totalorder %s163, %s164
      %p176 = scmp.eq.s32.totalorder %s23, 1
      %p177 = por %p175, %p176
      %p179 = scmp.ne.s32.totalorder %s164, %s178
      %p180 = scmp.eq.s32.totalorder %s23, 0
      %p181 = por %p179, %p180
      %s183 = sadd.s32 %s182, 1
      %p186 = scmp.eq.s32.totalorder %s17, 1
      %p187 = scmp.ne.s32.totalorder %s182, %s184
      %p188 = scmp.eq.s32.totalorder %s17, 0
      %p189 = por %p187, %p188
      %p190 = scmp.ne.s32.totalorder %s182, %s184
      %p191 = scmp.eq.s32.totalorder %s22, 1
      %p192 = por %p190, %p191
      %p193 = scmp.ne.s32.totalorder %s184, %s185
      %p194 = scmp.eq.s32.totalorder %s22, 0
      %p195 = por %p193, %p194
      %p196 = scmp.ne.s32.totalorder %s184, %s185
      %p197 = scmp.eq.s32.totalorder %s23, 1
      %p198 = por %p196, %p197
      %p200 = scmp.ne.s32.totalorder %s185, %s199
      %p201 = scmp.eq.s32.totalorder %s23, 0
      %p202 = por %p200, %p201
      %s204 = sadd.s32 %s203, 1
      %p207 = scmp.eq.s32.totalorder %s17, 1
      %p208 = scmp.ne.s32.totalorder %s203, %s205
      %p209 = scmp.eq.s32.totalorder %s17, 0
      %p210 = por %p208, %p209
      %p211 = scmp.ne.s32.totalorder %s203, %s205
      %p212 = scmp.eq.s32.totalorder %s22, 1
      %p213 = por %p211, %p212
      %p214 = scmp.ne.s32.totalorder %s205, %s206
      %p215 = scmp.eq.s32.totalorder %s22, 0
      %p216 = por %p214, %p215
      %p217 = scmp.ne.s32.totalorder %s205, %s206
      %p218 = scmp.eq.s32.totalorder %s23, 1
      %p219 = por %p217, %p218
      %p221 = scmp.ne.s32.totalorder %s206, %s220
      %p222 = scmp.eq.s32.totalorder %s23, 0
      %p223 = por %p221, %p222
      %s225 = sadd.s32 %s224, 1
      %p228 = scmp.eq.s32.totalorder %s17, 1
      %p229 = scmp.ne.s32.totalorder %s224, %s226
      %p230 = scmp.eq.s32.totalorder %s17, 0
      %p231 = por %p229, %p230
      %p232 = scmp.ne.s32.totalorder %s224, %s226
      %p233 = scmp.eq.s32.totalorder %s22, 1
      %p234 = por %p232, %p233
      %p235 = scmp.ne.s32.totalorder %s226, %s227
      %p236 = scmp.eq.s32.totalorder %s22, 0
      %p237 = por %p235, %p236
      %p238 = scmp.ne.s32.totalorder %s226, %s227
      %p239 = scmp.eq.s32.totalorder %s23, 1
      %p240 = por %p238, %p239
      %p242 = scmp.ne.s32.totalorder %s227, %s241
      %p243 = scmp.eq.s32.totalorder %s23, 0
      %p244 = por %p242, %p243
      %p245 = scmp.le.s32.totalorder 1, %s17
      %p246 = scmp.lt.s32.totalorder %s17, 3
      %p247 = pnand %p245, %p246
      %p248 = pneg %p247
      // Predicated region
      $region9: #{bilstm_forward.1} parent=5 // pred_check
        _
      $region10: #{bilstm_forward.1} parent=5 // pred_check_branch
        %250 = sbr.rel (%p247) target = $region12
      $region11: #{bilstm_forward.1} parent=5 // pred_region
        %s251 = ssub.s32 %s17, 1
        // Predicated region
        $region13: #{bilstm_forward.1} parent=11 // pred_check
          %p252 = pneg %p90
        $region14: #{bilstm_forward.1} parent=11 // pred_check_branch
          %254 = sbr.rel (%p252) target = $region16
        $region15: #{bilstm_forward.1} parent=11 // pred_region
          _
        $region16: #{bilstm_forward.1} parent=11 // pred_fallthru
          _
        // Predicated region
        $region17: #{bilstm_forward.1} parent=11 // pred_check
          %p255 = pneg %p111
        $region18: #{bilstm_forward.1} parent=11 // pred_check_branch
          %257 = sbr.rel (%p255) target = $region20
        $region19: #{bilstm_forward.1} parent=11 // pred_region
          _
        $region20: #{bilstm_forward.1} parent=11 // pred_fallthru
          _
        // Predicated region
        $region21: #{bilstm_forward.1} parent=11 // pred_check
          %p258 = pneg %p132
        $region22: #{bilstm_forward.1} parent=11 // pred_check_branch
          %260 = sbr.rel (%p258) target = $region24
        $region23: #{bilstm_forward.1} parent=11 // pred_region
          _
        $region24: #{bilstm_forward.1} parent=11 // pred_fallthru
          _
        // Predicated region
        $region25: #{bilstm_forward.1} parent=11 // pred_check
          %p261 = pneg %p153
        $region26: #{bilstm_forward.1} parent=11 // pred_check_branch
          %263 = sbr.rel (%p261) target = $region28
        $region27: #{bilstm_forward.1} parent=11 // pred_region
          %265 = vsyncadd [#allocation9], 0
          %s266 = sshll.u32 %s5, 4
          %s267 = int_to_ptr.hbm [resolvable:$true] %s266
          %s268 = sshll.u32 [#allocation8], 4
          %s269 = int_to_ptr.vmem [resolvable:$true] %s268
          %274 = dma.hbm_to_vmem [thread:$0]  %s267, 16384, %s269, [#allocation9], 512, 512, 32
        $region28: #{bilstm_forward.1} parent=11 // pred_fallthru
          _
        // Predicated region
        $region29: #{bilstm_forward.1} parent=11 // pred_check
          %p275 = pneg %p174
        $region30: #{bilstm_forward.1} parent=11 // pred_check_branch
          %277 = sbr.rel (%p275) target = $region32
        $region31: #{bilstm_forward.1} parent=11 // pred_region
          _
        $region32: #{bilstm_forward.1} parent=11 // pred_fallthru
          _
        // Predicated region
        $region33: #{bilstm_forward.1} parent=11 // pred_check
          %p278 = pneg %p195
        $region34: #{bilstm_forward.1} parent=11 // pred_check_branch
          %280 = sbr.rel (%p278) target = $region36
        $region35: #{bilstm_forward.1} parent=11 // pred_region
          _
        $region36: #{bilstm_forward.1} parent=11 // pred_fallthru
          _
        // Predicated region
        $region37: #{bilstm_forward.1} parent=11 // pred_check
          %p281 = pneg %p216
        $region38: #{bilstm_forward.1} parent=11 // pred_check_branch
          %283 = sbr.rel (%p281) target = $region40
        $region39: #{bilstm_forward.1} parent=11 // pred_region
          _
        $region40: #{bilstm_forward.1} parent=11 // pred_fallthru
          _
      $region12: #{bilstm_forward.1} parent=5 // pred_fallthru
        _
      %p284 = scmp.lt.s32.totalorder %s17, 2
      // Predicated region
      $region41: #{bilstm_forward.1} parent=5 // pred_check
        %p285 = pneg %p284
      $region42: #{bilstm_forward.1} parent=5 // pred_check_branch
        %287 = sbr.rel (%p285) target = $region44
      $region43: #{bilstm_forward.1} parent=5 // pred_region
        // Predicated region
        $region45: #{bilstm_forward.1} parent=43 // pred_check
          %p288 = pneg %p37
        $region46: #{bilstm_forward.1} parent=43 // pred_check_branch
          %290 = sbr.rel (%p288) target = $region48
        $region47: #{bilstm_forward.1} parent=43 // pred_region
          %s291 = smul.u32 8, %s17
          %p292 = scmp.lt.s32.totalorder %s291, 15
          %s293 = scalar_select %p292, %s291, 15
          %s294 = smul.addr %s293, 8
          %s295 = scalar_lea.vmem %s0, %s294
          %s296 = smul.u32 8, %s17
        $region48: #{bilstm_forward.1} parent=43 // pred_fallthru
          _
        // Predicated region
        $region49: #{bilstm_forward.1} parent=43 // pred_check
          %p297 = pneg %p63
        $region50: #{bilstm_forward.1} parent=43 // pred_check_branch
          %299 = sbr.rel (%p297) target = $region52
        $region51: #{bilstm_forward.1} parent=43 // pred_region
          %s300 = smul.u32 8, %s17
          %p301 = scmp.lt.s32.totalorder %s300, 15
          %s302 = scalar_select %p301, %s300, 15
          %s303 = smul.addr %s302, 8
          %s304 = scalar_lea.vmem %s1, %s303
          %s305 = smul.u32 8, %s17
        $region52: #{bilstm_forward.1} parent=43 // pred_fallthru
          _
      $region44: #{bilstm_forward.1} parent=5 // pred_fallthru
        _
      %p306 = scmp.le.s32.totalorder 1, %s17
      %p307 = scmp.lt.s32.totalorder %s17, 3
      %p308 = pnand %p306, %p307
      %p309 = pneg %p308
      // Predicated region
      $region53: #{bilstm_forward.1} parent=5 // pred_check
        _
      $region54: #{bilstm_forward.1} parent=5 // pred_check_branch
        %311 = sbr.rel (%p308) target = $region56
      $region55: #{bilstm_forward.1} parent=5 // pred_region
        %s312 = ssub.s32 %s17, 1
        // Predicated region
        $region57: #{bilstm_forward.1} parent=55 // pred_check
          %p313 = pneg %p153
        $region58: #{bilstm_forward.1} parent=55 // pred_check_branch
          %315 = sbr.rel (%p313) target = $region60
        $region59: #{bilstm_forward.1} parent=55 // pred_region
          %317 = dma.done [#allocation9], 16384
        $region60: #{bilstm_forward.1} parent=55 // pred_fallthru
          _
        %s318 = smul.u32 8, %s22
        %p319 = scmp.lt.s32.totalorder %s318, 15
        %s320 = scalar_select %p319, %s318, 15
        %s321 = smul.addr %s320, 8
        %s322 = scalar_lea.vmem %s0, %s321
        %p323 = pneg %p43
        %p324 = pneg %p40
        %s325 = smul.u32 8, %s22
        %p326 = scmp.lt.s32.totalorder %s325, 15
        %s327 = scalar_select %p326, %s325, 15
        %s328 = smul.addr %s327, 8
        %s329 = scalar_lea.vmem %s1, %s328
        %p330 = pneg %p69
        %p331 = pneg %p66
        %p332 = pneg %p90
        %p333 = pneg %p87
        %p334 = pneg %p111
        %p335 = pneg %p108
        %p336 = pneg %p132
        %p337 = pneg %p129
        %p338 = pneg %p153
        %p339 = pneg %p150
        %p340 = pneg %p174
        %p341 = pneg %p171
        %p342 = pneg %p195
        %p343 = pneg %p192
        %p344 = pneg %p216
        %p345 = pneg %p213
        %p346 = pneg %p237
        %p347 = pneg %p234
        %s348 = smul.u32 8, %s22
        %p349 = scmp.lt.s32.totalorder %s348, 15
        %s350 = scalar_select %p349, %s348, 15
        %s351 = smul.addr %s350, 8
        %s352 = scalar_lea.vmem %s0, %s351
        %s353 = smul.u32 8, %s22
        %s354 = smul.u32 8, %s22
        %p355 = scmp.lt.s32.totalorder %s354, 15
        %s356 = scalar_select %p355, %s354, 15
        %s357 = smul.addr %s356, 8
        %s358 = scalar_lea.vmem %s1, %s357
        %s359 = smul.u32 8, %s22
        %p360 = scmp.eq.s32.totalorder %s22, 0
        // Predicated region
        $region61: #{bilstm_forward.1} parent=55 // pred_check
          %p361 = pneg %p360
        $region62: #{bilstm_forward.1} parent=55 // pred_check_branch
          %363 = sbr.rel (%p361) target = $region64
        $region63: #{bilstm_forward.1} parent=55 // pred_region
          %v364 = vld [vmem:[%s7] sm:$0x1]
          %v365 = vperm.slane %v364, 0
          %366 = vst [vmem:[#allocation2] sm:$0xff] %v365
          %v367 = vld [vmem:[%s7 + $0x1] sm:$0x1]
          %v368 = vperm.slane %v367, 0
          %369 = vst [vmem:[#allocation3] sm:$0xff] %v368
          %v370 = vld [vmem:[%s7 + $0x2] sm:$0x1]
          %v371 = vperm.slane %v370, 0
          %372 = vst [vmem:[#allocation4] sm:$0xff] %v371
          %v373 = vld [vmem:[%s7 + $0x3] sm:$0x1]
          %v374 = vperm.slane %v373, 0
          %375 = vst [vmem:[#allocation5] sm:$0xff] %v374
          %376 = vst [vmem:[#allocation6] sm:$0xff] 0.0
          %377 = vst [vmem:[#allocation7] sm:$0xff] 0.0
        $region64: #{bilstm_forward.1} parent=55 // pred_fallthru
          _
        %v378 = vld [vmem:[%s3] sm:$0xff]
        %v379 = vld [vmem:[%s3 + $0x8] sm:$0xff]
        %v380 = vld [vmem:[%s3 + $0x10] sm:$0xff]
        %v381 = vld [vmem:[%s3 + $0x18] sm:$0xff]
        %v382 = vld [vmem:[%s3 + $0x20] sm:$0xff]
        %v383 = vld [vmem:[%s3 + $0x28] sm:$0xff]
        %v384 = vld [vmem:[%s3 + $0x30] sm:$0xff]
        %v385 = vld [vmem:[%s3 + $0x38] sm:$0xff]
        %v386 = vld [vmem:[%s3 + $0x40] sm:$0xff]
        %v387 = vld [vmem:[%s3 + $0x48] sm:$0xff]
        %v388 = vld [vmem:[%s3 + $0x50] sm:$0xff]
        %v389 = vld [vmem:[%s3 + $0x58] sm:$0xff]
        %v390 = vld [vmem:[%s3 + $0x60] sm:$0xff]
        %v391 = vld [vmem:[%s3 + $0x68] sm:$0xff]
        %v392 = vld [vmem:[%s3 + $0x70] sm:$0xff]
        %v393 = vld [vmem:[%s3 + $0x78] sm:$0xff]
        %v394 = vld [vmem:[%s3 + $0x80] sm:$0xff]
        %v395 = vld [vmem:[%s3 + $0x88] sm:$0xff]
        %v396 = vld [vmem:[%s3 + $0x90] sm:$0xff]
        %v397 = vld [vmem:[%s3 + $0x98] sm:$0xff]
        %v398 = vld [vmem:[%s3 + $0xa0] sm:$0xff]
        %v399 = vld [vmem:[%s3 + $0xa8] sm:$0xff]
        %v400 = vld [vmem:[%s3 + $0xb0] sm:$0xff]
        %v401 = vld [vmem:[%s3 + $0xb8] sm:$0xff]
        %v402 = vld [vmem:[%s3 + $0xc0] sm:$0xff]
        %v403 = vld [vmem:[%s3 + $0xc8] sm:$0xff]
        %v404 = vld [vmem:[%s3 + $0xd0] sm:$0xff]
        %v405 = vld [vmem:[%s3 + $0xd8] sm:$0xff]
        %v406 = vld [vmem:[%s3 + $0xe0] sm:$0xff]
        %v407 = vld [vmem:[%s3 + $0xe8] sm:$0xff]
        %v408 = vld [vmem:[%s3 + $0xf0] sm:$0xff]
        %v409 = vld [vmem:[%s3 + $0xf8] sm:$0xff]
        %v410 = vld [vmem:[%s3 + $0x100] sm:$0xff]
        %v411 = vld [vmem:[%s3 + $0x108] sm:$0xff]
        %v412 = vld [vmem:[%s3 + $0x110] sm:$0xff]
        %v413 = vld [vmem:[%s3 + $0x118] sm:$0xff]
        %v414 = vld [vmem:[%s3 + $0x120] sm:$0xff]
        %v415 = vld [vmem:[%s3 + $0x128] sm:$0xff]
        %v416 = vld [vmem:[%s3 + $0x130] sm:$0xff]
        %v417 = vld [vmem:[%s3 + $0x138] sm:$0xff]
        %v418 = vld [vmem:[%s3 + $0x140] sm:$0xff]
        %v419 = vld [vmem:[%s3 + $0x148] sm:$0xff]
        %v420 = vld [vmem:[%s3 + $0x150] sm:$0xff]
        %v421 = vld [vmem:[%s3 + $0x158] sm:$0xff]
        %v422 = vld [vmem:[%s3 + $0x160] sm:$0xff]
        %v423 = vld [vmem:[%s3 + $0x168] sm:$0xff]
        %v424 = vld [vmem:[%s3 + $0x170] sm:$0xff]
        %v425 = vld [vmem:[%s3 + $0x178] sm:$0xff]
        %v426 = vld [vmem:[%s3 + $0x180] sm:$0xff]
        %v427 = vld [vmem:[%s3 + $0x188] sm:$0xff]
        %v428 = vld [vmem:[%s3 + $0x190] sm:$0xff]
        %v429 = vld [vmem:[%s3 + $0x198] sm:$0xff]
        %v430 = vld [vmem:[%s3 + $0x1a0] sm:$0xff]
        %v431 = vld [vmem:[%s3 + $0x1a8] sm:$0xff]
        %v432 = vld [vmem:[%s3 + $0x1b0] sm:$0xff]
        %v433 = vld [vmem:[%s3 + $0x1b8] sm:$0xff]
        %v434 = vld [vmem:[%s3 + $0x1c0] sm:$0xff]
        %v435 = vld [vmem:[%s3 + $0x1c8] sm:$0xff]
        %v436 = vld [vmem:[%s3 + $0x1d0] sm:$0xff]
        %v437 = vld [vmem:[%s3 + $0x1d8] sm:$0xff]
        %v438 = vld [vmem:[%s3 + $0x1e0] sm:$0xff]
        %v439 = vld [vmem:[%s3 + $0x1e8] sm:$0xff]
        %v440 = vld [vmem:[%s3 + $0x1f0] sm:$0xff]
        %v441 = vld [vmem:[%s3 + $0x1f8] sm:$0xff]
        %v442 = vld [vmem:[%s3 + $0x200] sm:$0xff]
        %v443 = vld [vmem:[%s3 + $0x208] sm:$0xff]
        %v444 = vld [vmem:[%s3 + $0x210] sm:$0xff]
        %v445 = vld [vmem:[%s3 + $0x218] sm:$0xff]
        %v446 = vld [vmem:[%s3 + $0x220] sm:$0xff]
        %v447 = vld [vmem:[%s3 + $0x228] sm:$0xff]
        %v448 = vld [vmem:[%s3 + $0x230] sm:$0xff]
        %v449 = vld [vmem:[%s3 + $0x238] sm:$0xff]
        %v450 = vld [vmem:[%s3 + $0x240] sm:$0xff]
        %v451 = vld [vmem:[%s3 + $0x248] sm:$0xff]
        %v452 = vld [vmem:[%s3 + $0x250] sm:$0xff]
        %v453 = vld [vmem:[%s3 + $0x258] sm:$0xff]
        %v454 = vld [vmem:[%s3 + $0x260] sm:$0xff]
        %v455 = vld [vmem:[%s3 + $0x268] sm:$0xff]
        %v456 = vld [vmem:[%s3 + $0x270] sm:$0xff]
        %v457 = vld [vmem:[%s3 + $0x278] sm:$0xff]
        %v458 = vld [vmem:[%s3 + $0x280] sm:$0xff]
        %v459 = vld [vmem:[%s3 + $0x288] sm:$0xff]
        %v460 = vld [vmem:[%s3 + $0x290] sm:$0xff]
        %v461 = vld [vmem:[%s3 + $0x298] sm:$0xff]
        %v462 = vld [vmem:[%s3 + $0x2a0] sm:$0xff]
        %v463 = vld [vmem:[%s3 + $0x2a8] sm:$0xff]
        %v464 = vld [vmem:[%s3 + $0x2b0] sm:$0xff]
        %v465 = vld [vmem:[%s3 + $0x2b8] sm:$0xff]
        %v466 = vld [vmem:[%s3 + $0x2c0] sm:$0xff]
        %v467 = vld [vmem:[%s3 + $0x2c8] sm:$0xff]
        %v468 = vld [vmem:[%s3 + $0x2d0] sm:$0xff]
        %v469 = vld [vmem:[%s3 + $0x2d8] sm:$0xff]
        %v470 = vld [vmem:[%s3 + $0x2e0] sm:$0xff]
        %v471 = vld [vmem:[%s3 + $0x2e8] sm:$0xff]
        %v472 = vld [vmem:[%s3 + $0x2f0] sm:$0xff]
        %v473 = vld [vmem:[%s3 + $0x2f8] sm:$0xff]
        %v474 = vld [vmem:[%s3 + $0x300] sm:$0xff]
        %v475 = vld [vmem:[%s3 + $0x308] sm:$0xff]
        %v476 = vld [vmem:[%s3 + $0x310] sm:$0xff]
        %v477 = vld [vmem:[%s3 + $0x318] sm:$0xff]
        %v478 = vld [vmem:[%s3 + $0x320] sm:$0xff]
        %v479 = vld [vmem:[%s3 + $0x328] sm:$0xff]
        %v480 = vld [vmem:[%s3 + $0x330] sm:$0xff]
        %v481 = vld [vmem:[%s3 + $0x338] sm:$0xff]
        %v482 = vld [vmem:[%s3 + $0x340] sm:$0xff]
        %v483 = vld [vmem:[%s3 + $0x348] sm:$0xff]
        %v484 = vld [vmem:[%s3 + $0x350] sm:$0xff]
        %v485 = vld [vmem:[%s3 + $0x358] sm:$0xff]
        %v486 = vld [vmem:[%s3 + $0x360] sm:$0xff]
        %v487 = vld [vmem:[%s3 + $0x368] sm:$0xff]
        %v488 = vld [vmem:[%s3 + $0x370] sm:$0xff]
        %v489 = vld [vmem:[%s3 + $0x378] sm:$0xff]
        %v490 = vld [vmem:[%s3 + $0x380] sm:$0xff]
        %v491 = vld [vmem:[%s3 + $0x388] sm:$0xff]
        %v492 = vld [vmem:[%s3 + $0x390] sm:$0xff]
        %v493 = vld [vmem:[%s3 + $0x398] sm:$0xff]
        %v494 = vld [vmem:[%s3 + $0x3a0] sm:$0xff]
        %v495 = vld [vmem:[%s3 + $0x3a8] sm:$0xff]
        %v496 = vld [vmem:[%s3 + $0x3b0] sm:$0xff]
        %v497 = vld [vmem:[%s3 + $0x3b8] sm:$0xff]
        %v498 = vld [vmem:[%s3 + $0x3c0] sm:$0xff]
        %v499 = vld [vmem:[%s3 + $0x3c8] sm:$0xff]
        %v500 = vld [vmem:[%s3 + $0x3d0] sm:$0xff]
        %v501 = vld [vmem:[%s3 + $0x3d8] sm:$0xff]
        %v502 = vld [vmem:[%s3 + $0x3e0] sm:$0xff]
        %v503 = vld [vmem:[%s3 + $0x3e8] sm:$0xff]
        %v504 = vld [vmem:[%s3 + $0x3f0] sm:$0xff]
        %v505 = vld [vmem:[%s3 + $0x3f8] sm:$0xff]
        %v506 = vld [vmem:[#allocation8] sm:$0xff]
        %v507 = vld [vmem:[#allocation8 + $0x8] sm:$0xff]
        %v508 = vld [vmem:[#allocation8 + $0x10] sm:$0xff]
        %v509 = vld [vmem:[#allocation8 + $0x18] sm:$0xff]
        %v510 = vld [vmem:[#allocation8 + $0x20] sm:$0xff]
        %v511 = vld [vmem:[#allocation8 + $0x28] sm:$0xff]
        %v512 = vld [vmem:[#allocation8 + $0x30] sm:$0xff]
        %v513 = vld [vmem:[#allocation8 + $0x38] sm:$0xff]
        %v514 = vld [vmem:[#allocation8 + $0x40] sm:$0xff]
        %v515 = vld [vmem:[#allocation8 + $0x48] sm:$0xff]
        %v516 = vld [vmem:[#allocation8 + $0x50] sm:$0xff]
        %v517 = vld [vmem:[#allocation8 + $0x58] sm:$0xff]
        %v518 = vld [vmem:[#allocation8 + $0x60] sm:$0xff]
        %v519 = vld [vmem:[#allocation8 + $0x68] sm:$0xff]
        %v520 = vld [vmem:[#allocation8 + $0x70] sm:$0xff]
        %v521 = vld [vmem:[#allocation8 + $0x78] sm:$0xff]
        %v522 = vld [vmem:[#allocation8 + $0x80] sm:$0xff]
        %v523 = vld [vmem:[#allocation8 + $0x88] sm:$0xff]
        %v524 = vld [vmem:[#allocation8 + $0x90] sm:$0xff]
        %v525 = vld [vmem:[#allocation8 + $0x98] sm:$0xff]
        %v526 = vld [vmem:[#allocation8 + $0xa0] sm:$0xff]
        %v527 = vld [vmem:[#allocation8 + $0xa8] sm:$0xff]
        %v528 = vld [vmem:[#allocation8 + $0xb0] sm:$0xff]
        %v529 = vld [vmem:[#allocation8 + $0xb8] sm:$0xff]
        %v530 = vld [vmem:[#allocation8 + $0xc0] sm:$0xff]
        %v531 = vld [vmem:[#allocation8 + $0xc8] sm:$0xff]
        %v532 = vld [vmem:[#allocation8 + $0xd0] sm:$0xff]
        %v533 = vld [vmem:[#allocation8 + $0xd8] sm:$0xff]
        %v534 = vld [vmem:[#allocation8 + $0xe0] sm:$0xff]
        %v535 = vld [vmem:[#allocation8 + $0xe8] sm:$0xff]
        %v536 = vld [vmem:[#allocation8 + $0xf0] sm:$0xff]
        %v537 = vld [vmem:[#allocation8 + $0xf8] sm:$0xff]
        %v538 = vld [vmem:[#allocation8 + $0x100] sm:$0xff]
        %v539 = vld [vmem:[#allocation8 + $0x108] sm:$0xff]
        %v540 = vld [vmem:[#allocation8 + $0x110] sm:$0xff]
        %v541 = vld [vmem:[#allocation8 + $0x118] sm:$0xff]
        %v542 = vld [vmem:[#allocation8 + $0x120] sm:$0xff]
        %v543 = vld [vmem:[#allocation8 + $0x128] sm:$0xff]
        %v544 = vld [vmem:[#allocation8 + $0x130] sm:$0xff]
        %v545 = vld [vmem:[#allocation8 + $0x138] sm:$0xff]
        %v546 = vld [vmem:[#allocation8 + $0x140] sm:$0xff]
        %v547 = vld [vmem:[#allocation8 + $0x148] sm:$0xff]
        %v548 = vld [vmem:[#allocation8 + $0x150] sm:$0xff]
        %v549 = vld [vmem:[#allocation8 + $0x158] sm:$0xff]
        %v550 = vld [vmem:[#allocation8 + $0x160] sm:$0xff]
        %v551 = vld [vmem:[#allocation8 + $0x168] sm:$0xff]
        %v552 = vld [vmem:[#allocation8 + $0x170] sm:$0xff]
        %v553 = vld [vmem:[#allocation8 + $0x178] sm:$0xff]
        %v554 = vld [vmem:[#allocation8 + $0x180] sm:$0xff]
        %v555 = vld [vmem:[#allocation8 + $0x188] sm:$0xff]
        %v556 = vld [vmem:[#allocation8 + $0x190] sm:$0xff]
        %v557 = vld [vmem:[#allocation8 + $0x198] sm:$0xff]
        %v558 = vld [vmem:[#allocation8 + $0x1a0] sm:$0xff]
        %v559 = vld [vmem:[#allocation8 + $0x1a8] sm:$0xff]
        %v560 = vld [vmem:[#allocation8 + $0x1b0] sm:$0xff]
        %v561 = vld [vmem:[#allocation8 + $0x1b8] sm:$0xff]
        %v562 = vld [vmem:[#allocation8 + $0x1c0] sm:$0xff]
        %v563 = vld [vmem:[#allocation8 + $0x1c8] sm:$0xff]
        %v564 = vld [vmem:[#allocation8 + $0x1d0] sm:$0xff]
        %v565 = vld [vmem:[#allocation8 + $0x1d8] sm:$0xff]
        %v566 = vld [vmem:[#allocation8 + $0x1e0] sm:$0xff]
        %v567 = vld [vmem:[#allocation8 + $0x1e8] sm:$0xff]
        %v568 = vld [vmem:[#allocation8 + $0x1f0] sm:$0xff]
        %v569 = vld [vmem:[#allocation8 + $0x1f8] sm:$0xff]
        %v570 = vld [vmem:[#allocation8 + $0x200] sm:$0xff]
        %v571 = vld [vmem:[#allocation8 + $0x208] sm:$0xff]
        %v572 = vld [vmem:[#allocation8 + $0x210] sm:$0xff]
        %v573 = vld [vmem:[#allocation8 + $0x218] sm:$0xff]
        %v574 = vld [vmem:[#allocation8 + $0x220] sm:$0xff]
        %v575 = vld [vmem:[#allocation8 + $0x228] sm:$0xff]
        %v576 = vld [vmem:[#allocation8 + $0x230] sm:$0xff]
        %v577 = vld [vmem:[#allocation8 + $0x238] sm:$0xff]
        %v578 = vld [vmem:[#allocation8 + $0x240] sm:$0xff]
        %v579 = vld [vmem:[#allocation8 + $0x248] sm:$0xff]
        %v580 = vld [vmem:[#allocation8 + $0x250] sm:$0xff]
        %v581 = vld [vmem:[#allocation8 + $0x258] sm:$0xff]
        %v582 = vld [vmem:[#allocation8 + $0x260] sm:$0xff]
        %v583 = vld [vmem:[#allocation8 + $0x268] sm:$0xff]
        %v584 = vld [vmem:[#allocation8 + $0x270] sm:$0xff]
        %v585 = vld [vmem:[#allocation8 + $0x278] sm:$0xff]
        %v586 = vld [vmem:[#allocation8 + $0x280] sm:$0xff]
        %v587 = vld [vmem:[#allocation8 + $0x288] sm:$0xff]
        %v588 = vld [vmem:[#allocation8 + $0x290] sm:$0xff]
        %v589 = vld [vmem:[#allocation8 + $0x298] sm:$0xff]
        %v590 = vld [vmem:[#allocation8 + $0x2a0] sm:$0xff]
        %v591 = vld [vmem:[#allocation8 + $0x2a8] sm:$0xff]
        %v592 = vld [vmem:[#allocation8 + $0x2b0] sm:$0xff]
        %v593 = vld [vmem:[#allocation8 + $0x2b8] sm:$0xff]
        %v594 = vld [vmem:[#allocation8 + $0x2c0] sm:$0xff]
        %v595 = vld [vmem:[#allocation8 + $0x2c8] sm:$0xff]
        %v596 = vld [vmem:[#allocation8 + $0x2d0] sm:$0xff]
        %v597 = vld [vmem:[#allocation8 + $0x2d8] sm:$0xff]
        %v598 = vld [vmem:[#allocation8 + $0x2e0] sm:$0xff]
        %v599 = vld [vmem:[#allocation8 + $0x2e8] sm:$0xff]
        %v600 = vld [vmem:[#allocation8 + $0x2f0] sm:$0xff]
        %v601 = vld [vmem:[#allocation8 + $0x2f8] sm:$0xff]
        %v602 = vld [vmem:[#allocation8 + $0x300] sm:$0xff]
        %v603 = vld [vmem:[#allocation8 + $0x308] sm:$0xff]
        %v604 = vld [vmem:[#allocation8 + $0x310] sm:$0xff]
        %v605 = vld [vmem:[#allocation8 + $0x318] sm:$0xff]
        %v606 = vld [vmem:[#allocation8 + $0x320] sm:$0xff]
        %v607 = vld [vmem:[#allocation8 + $0x328] sm:$0xff]
        %v608 = vld [vmem:[#allocation8 + $0x330] sm:$0xff]
        %v609 = vld [vmem:[#allocation8 + $0x338] sm:$0xff]
        %v610 = vld [vmem:[#allocation8 + $0x340] sm:$0xff]
        %v611 = vld [vmem:[#allocation8 + $0x348] sm:$0xff]
        %v612 = vld [vmem:[#allocation8 + $0x350] sm:$0xff]
        %v613 = vld [vmem:[#allocation8 + $0x358] sm:$0xff]
        %v614 = vld [vmem:[#allocation8 + $0x360] sm:$0xff]
        %v615 = vld [vmem:[#allocation8 + $0x368] sm:$0xff]
        %v616 = vld [vmem:[#allocation8 + $0x370] sm:$0xff]
        %v617 = vld [vmem:[#allocation8 + $0x378] sm:$0xff]
        %v618 = vld [vmem:[#allocation8 + $0x380] sm:$0xff]
        %v619 = vld [vmem:[#allocation8 + $0x388] sm:$0xff]
        %v620 = vld [vmem:[#allocation8 + $0x390] sm:$0xff]
        %v621 = vld [vmem:[#allocation8 + $0x398] sm:$0xff]
        %v622 = vld [vmem:[#allocation8 + $0x3a0] sm:$0xff]
        %v623 = vld [vmem:[#allocation8 + $0x3a8] sm:$0xff]
        %v624 = vld [vmem:[#allocation8 + $0x3b0] sm:$0xff]
        %v625 = vld [vmem:[#allocation8 + $0x3b8] sm:$0xff]
        %v626 = vld [vmem:[#allocation8 + $0x3c0] sm:$0xff]
        %v627 = vld [vmem:[#allocation8 + $0x3c8] sm:$0xff]
        %v628 = vld [vmem:[#allocation8 + $0x3d0] sm:$0xff]
        %v629 = vld [vmem:[#allocation8 + $0x3d8] sm:$0xff]
        %v630 = vld [vmem:[#allocation8 + $0x3e0] sm:$0xff]
        %v631 = vld [vmem:[#allocation8 + $0x3e8] sm:$0xff]
        %v632 = vld [vmem:[#allocation8 + $0x3f0] sm:$0xff]
        %v633 = vld [vmem:[#allocation8 + $0x3f8] sm:$0xff]
        %v634 = vld [vmem:[%s4] sm:$0xf]
        %v635 = vld [vmem:[%s6] sm:$0xf]
        %v636 = vld [vmem:[%s8] sm:$0xff]
        %v637 = vld [vmem:[%s8 + $0x8] sm:$0xff]
        %v638 = vld [vmem:[%s8 + $0x10] sm:$0xff]
        %v639 = vld [vmem:[%s8 + $0x18] sm:$0xff]
        %v640 = vld [vmem:[%s8 + $0x20] sm:$0xff]
        %v641 = vld [vmem:[%s8 + $0x28] sm:$0xff]
        %v642 = vld [vmem:[%s8 + $0x30] sm:$0xff]
        %v643 = vld [vmem:[%s8 + $0x38] sm:$0xff]
        %v644 = vld [vmem:[%s8 + $0x40] sm:$0xff]
        %v645 = vld [vmem:[%s8 + $0x48] sm:$0xff]
        %v646 = vld [vmem:[%s8 + $0x50] sm:$0xff]
        %v647 = vld [vmem:[%s8 + $0x58] sm:$0xff]
        %v648 = vld [vmem:[%s8 + $0x60] sm:$0xff]
        %v649 = vld [vmem:[%s8 + $0x68] sm:$0xff]
        %v650 = vld [vmem:[%s8 + $0x70] sm:$0xff]
        %v651 = vld [vmem:[%s8 + $0x78] sm:$0xff]
        %v652 = vld [vmem:[%s8 + $0x80] sm:$0xff]
        %v653 = vld [vmem:[%s8 + $0x88] sm:$0xff]
        %v654 = vld [vmem:[%s8 + $0x90] sm:$0xff]
        %v655 = vld [vmem:[%s8 + $0x98] sm:$0xff]
        %v656 = vld [vmem:[%s8 + $0xa0] sm:$0xff]
        %v657 = vld [vmem:[%s8 + $0xa8] sm:$0xff]
        %v658 = vld [vmem:[%s8 + $0xb0] sm:$0xff]
        %v659 = vld [vmem:[%s8 + $0xb8] sm:$0xff]
        %v660 = vld [vmem:[%s8 + $0xc0] sm:$0xff]
        %v661 = vld [vmem:[%s8 + $0xc8] sm:$0xff]
        %v662 = vld [vmem:[%s8 + $0xd0] sm:$0xff]
        %v663 = vld [vmem:[%s8 + $0xd8] sm:$0xff]
        %v664 = vld [vmem:[%s8 + $0xe0] sm:$0xff]
        %v665 = vld [vmem:[%s8 + $0xe8] sm:$0xff]
        %v666 = vld [vmem:[%s8 + $0xf0] sm:$0xff]
        %v667 = vld [vmem:[%s8 + $0xf8] sm:$0xff]
        %v668 = vld [vmem:[#allocation2] sm:$0xff]
        %v669 = vld [vmem:[#allocation3] sm:$0xff]
        %v670 = vld [vmem:[#allocation4] sm:$0xff]
        %v671 = vld [vmem:[#allocation5] sm:$0xff]
        %v672 = vld [vmem:[#allocation6] sm:$0xff]
        %v673 = vld [vmem:[#allocation7] sm:$0xff]
        %v674 = vld [vmem:[%s2] sm:$0xff]
        %v675 = vld [vmem:[%s352] sm:$0xff]
        %v677 = vperm.slane %v634, 0
        %v678 = vperm.slane %v634, 1
        %v679 = vperm.slane %v634, 2
        %v680 = vperm.slane %v634, 3
        %685 = vmatpush.msra.mxu0 %v438
        %686 = vmatpush.msra.mxu0 %v434
        %687 = vmatpush.msra.mxu0 %v430
        %688 = vmatpush.msra.mxu0 %v426
        %689 = vmatpush.msra.mxu0 %v422
        %690 = vmatpush.msra.mxu0 %v418
        %691 = vmatpush.msra.mxu0 %v414
        %692 = vmatpush.msra.mxu0 %v410
        %693 = vmatpush.msra.mxu0 %v406
        %694 = vmatpush.msra.mxu0 %v402
        %695 = vmatpush.msra.mxu0 %v398
        %696 = vmatpush.msra.mxu0 %v394
        %697 = vmatpush.msra.mxu0 %v390
        %698 = vmatpush.msra.mxu0 %v386
        %699 = vmatpush.msra.mxu0 %v382
        %700 = vmatpush.msra.mxu0 %v378
        %701 = vmatmul.f32.gmra.mxu0 %v675
        %v702 = vpop.f32.mrf.mxu0
        %v703 = vadd.f32 %v677, %v702
        %704 = vdwg.mxu0
        %705 = vmatpush.msra.mxu0 %v502
        %706 = vmatpush.msra.mxu0 %v498
        %707 = vmatpush.msra.mxu0 %v494
        %708 = vmatpush.msra.mxu0 %v490
        %709 = vmatpush.msra.mxu0 %v486
        %710 = vmatpush.msra.mxu0 %v482
        %711 = vmatpush.msra.mxu0 %v478
        %712 = vmatpush.msra.mxu0 %v474
        %713 = vmatpush.msra.mxu0 %v470
        %714 = vmatpush.msra.mxu0 %v466
        %715 = vmatpush.msra.mxu0 %v462
        %716 = vmatpush.msra.mxu0 %v458
        %717 = vmatpush.msra.mxu0 %v454
        %718 = vmatpush.msra.mxu0 %v450
        %719 = vmatpush.msra.mxu0 %v446
        %720 = vmatpush.msra.mxu0 %v442
        %721 = vmatmul.f32.gmra.mxu0 %v668
        %v722 = vpop.f32.mrf.mxu0
        %v723 = vadd.f32 %v703, %v722
        %724 = vdwg.mxu0
        %725 = vmatpush.msra.mxu0 %v439
        %726 = vmatpush.msra.mxu0 %v435
        %727 = vmatpush.msra.mxu0 %v431
        %728 = vmatpush.msra.mxu0 %v427
        %729 = vmatpush.msra.mxu0 %v423
        %730 = vmatpush.msra.mxu0 %v419
        %731 = vmatpush.msra.mxu0 %v415
        %732 = vmatpush.msra.mxu0 %v411
        %733 = vmatpush.msra.mxu0 %v407
        %734 = vmatpush.msra.mxu0 %v403
        %735 = vmatpush.msra.mxu0 %v399
        %736 = vmatpush.msra.mxu0 %v395
        %737 = vmatpush.msra.mxu0 %v391
        %738 = vmatpush.msra.mxu0 %v387
        %739 = vmatpush.msra.mxu0 %v383
        %740 = vmatpush.msra.mxu0 %v379
        %741 = vmatmul.f32.gmra.mxu0 %v675
        %v742 = vpop.f32.mrf.mxu0
        %v743 = vadd.f32 %v678, %v742
        %744 = vdwg.mxu0
        %745 = vmatpush.msra.mxu0 %v503
        %746 = vmatpush.msra.mxu0 %v499
        %747 = vmatpush.msra.mxu0 %v495
        %748 = vmatpush.msra.mxu0 %v491
        %749 = vmatpush.msra.mxu0 %v487
        %750 = vmatpush.msra.mxu0 %v483
        %751 = vmatpush.msra.mxu0 %v479
        %752 = vmatpush.msra.mxu0 %v475
        %753 = vmatpush.msra.mxu0 %v471
        %754 = vmatpush.msra.mxu0 %v467
        %755 = vmatpush.msra.mxu0 %v463
        %756 = vmatpush.msra.mxu0 %v459
        %757 = vmatpush.msra.mxu0 %v455
        %758 = vmatpush.msra.mxu0 %v451
        %759 = vmatpush.msra.mxu0 %v447
        %760 = vmatpush.msra.mxu0 %v443
        %761 = vmatmul.f32.gmra.mxu0 %v668
        %v762 = vpop.f32.mrf.mxu0
        %v763 = vadd.f32 %v743, %v762
        %764 = vdwg.mxu0
        %765 = vmatpush.msra.mxu0 %v440
        %766 = vmatpush.msra.mxu0 %v436
        %767 = vmatpush.msra.mxu0 %v432
        %768 = vmatpush.msra.mxu0 %v428
        %769 = vmatpush.msra.mxu0 %v424
        %770 = vmatpush.msra.mxu0 %v420
        %771 = vmatpush.msra.mxu0 %v416
        %772 = vmatpush.msra.mxu0 %v412
        %773 = vmatpush.msra.mxu0 %v408
        %774 = vmatpush.msra.mxu0 %v404
        %775 = vmatpush.msra.mxu0 %v400
        %776 = vmatpush.msra.mxu0 %v396
        %777 = vmatpush.msra.mxu0 %v392
        %778 = vmatpush.msra.mxu0 %v388
        %779 = vmatpush.msra.mxu0 %v384
        %780 = vmatpush.msra.mxu0 %v380
        %781 = vmatmul.f32.gmra.mxu0 %v675
        %v782 = vpop.f32.mrf.mxu0
        %v783 = vadd.f32 %v679, %v782
        %784 = vdwg.mxu0
        %785 = vmatpush.msra.mxu0 %v504
        %786 = vmatpush.msra.mxu0 %v500
        %787 = vmatpush.msra.mxu0 %v496
        %788 = vmatpush.msra.mxu0 %v492
        %789 = vmatpush.msra.mxu0 %v488
        %790 = vmatpush.msra.mxu0 %v484
        %791 = vmatpush.msra.mxu0 %v480
        %792 = vmatpush.msra.mxu0 %v476
        %793 = vmatpush.msra.mxu0 %v472
        %794 = vmatpush.msra.mxu0 %v468
        %795 = vmatpush.msra.mxu0 %v464
        %796 = vmatpush.msra.mxu0 %v460
        %797 = vmatpush.msra.mxu0 %v456
        %798 = vmatpush.msra.mxu0 %v452
        %799 = vmatpush.msra.mxu0 %v448
        %800 = vmatpush.msra.mxu0 %v444
        %801 = vmatmul.f32.gmra.mxu0 %v668
        %v802 = vpop.f32.mrf.mxu0
        %v803 = vadd.f32 %v783, %v802
        %804 = vdwg.mxu0
        %805 = vmatpush.msra.mxu0 %v441
        %806 = vmatpush.msra.mxu0 %v437
        %807 = vmatpush.msra.mxu0 %v433
        %808 = vmatpush.msra.mxu0 %v429
        %809 = vmatpush.msra.mxu0 %v425
        %810 = vmatpush.msra.mxu0 %v421
        %811 = vmatpush.msra.mxu0 %v417
        %812 = vmatpush.msra.mxu0 %v413
        %813 = vmatpush.msra.mxu0 %v409
        %814 = vmatpush.msra.mxu0 %v405
        %815 = vmatpush.msra.mxu0 %v401
        %816 = vmatpush.msra.mxu0 %v397
        %817 = vmatpush.msra.mxu0 %v393
        %818 = vmatpush.msra.mxu0 %v389
        %819 = vmatpush.msra.mxu0 %v385
        %820 = vmatpush.msra.mxu0 %v381
        %821 = vmatmul.f32.gmra.mxu0 %v675
        %v822 = vpop.f32.mrf.mxu0
        %v823 = vadd.f32 %v680, %v822
        %824 = vdwg.mxu0
        %825 = vmatpush.msra.mxu0 %v505
        %826 = vmatpush.msra.mxu0 %v501
        %827 = vmatpush.msra.mxu0 %v497
        %828 = vmatpush.msra.mxu0 %v493
        %829 = vmatpush.msra.mxu0 %v489
        %830 = vmatpush.msra.mxu0 %v485
        %831 = vmatpush.msra.mxu0 %v481
        %832 = vmatpush.msra.mxu0 %v477
        %833 = vmatpush.msra.mxu0 %v473
        %834 = vmatpush.msra.mxu0 %v469
        %835 = vmatpush.msra.mxu0 %v465
        %836 = vmatpush.msra.mxu0 %v461
        %837 = vmatpush.msra.mxu0 %v457
        %838 = vmatpush.msra.mxu0 %v453
        %839 = vmatpush.msra.mxu0 %v449
        %840 = vmatpush.msra.mxu0 %v445
        %841 = vmatmul.f32.gmra.mxu0 %v668
        %v842 = vpop.f32.mrf.mxu0
        %v843 = vadd.f32 %v823, %v842
        %844 = vdwg.mxu0
        %v845 = vsub.f32 0.0, %v723
        %v846 = vmul.f32 %v845, 1.442695
        %v847 = vpow.pop %v846
        %v848 = vadd.f32 %v847, 1.0
        %v849 = vrcp.pop %v848
        %v850 = vsub.f32 0.0, %v763
        %v851 = vmul.f32 %v850, 1.442695
        %v852 = vpow.pop %v851
        %v853 = vadd.f32 %v852, 1.0
        %v854 = vrcp.pop %v853
        %v855 = vtanh.pop %v803
        %v856 = vsub.f32 0.0, %v843
        %v857 = vmul.f32 %v856, 1.442695
        %v858 = vpow.pop %v857
        %v859 = vadd.f32 %v858, 1.0
        %v860 = vrcp.pop %v859
        %v861 = vmul.f32 %v854, %v669
        %v862 = vmul.f32 %v849, %v855
        %v863 = vadd.f32 %v861, %v862
        %v864 = vtanh.pop %v863
        %v865 = vmul.f32 %v860, %v864
        %v866 = vld [vmem:[%s358] sm:$0xff]
        %v868 = vperm.slane %v635, 0
        %v869 = vperm.slane %v635, 1
        %v870 = vperm.slane %v635, 2
        %v871 = vperm.slane %v635, 3
        %876 = vmatpush.msra.mxu0 %v566
        %877 = vmatpush.msra.mxu0 %v562
        %878 = vmatpush.msra.mxu0 %v558
        %879 = vmatpush.msra.mxu0 %v554
        %880 = vmatpush.msra.mxu0 %v550
        %881 = vmatpush.msra.mxu0 %v546
        %882 = vmatpush.msra.mxu0 %v542
        %883 = vmatpush.msra.mxu0 %v538
        %884 = vmatpush.msra.mxu0 %v534
        %885 = vmatpush.msra.mxu0 %v530
        %886 = vmatpush.msra.mxu0 %v526
        %887 = vmatpush.msra.mxu0 %v522
        %888 = vmatpush.msra.mxu0 %v518
        %889 = vmatpush.msra.mxu0 %v514
        %890 = vmatpush.msra.mxu0 %v510
        %891 = vmatpush.msra.mxu0 %v506
        %892 = vmatmul.f32.gmra.mxu0 %v866
        %v893 = vpop.f32.mrf.mxu0
        %v894 = vadd.f32 %v868, %v893
        %895 = vdwg.mxu0
        %896 = vmatpush.msra.mxu0 %v630
        %897 = vmatpush.msra.mxu0 %v626
        %898 = vmatpush.msra.mxu0 %v622
        %899 = vmatpush.msra.mxu0 %v618
        %900 = vmatpush.msra.mxu0 %v614
        %901 = vmatpush.msra.mxu0 %v610
        %902 = vmatpush.msra.mxu0 %v606
        %903 = vmatpush.msra.mxu0 %v602
        %904 = vmatpush.msra.mxu0 %v598
        %905 = vmatpush.msra.mxu0 %v594
        %906 = vmatpush.msra.mxu0 %v590
        %907 = vmatpush.msra.mxu0 %v586
        %908 = vmatpush.msra.mxu0 %v582
        %909 = vmatpush.msra.mxu0 %v578
        %910 = vmatpush.msra.mxu0 %v574
        %911 = vmatpush.msra.mxu0 %v570
        %912 = vmatmul.f32.gmra.mxu0 %v670
        %v913 = vpop.f32.mrf.mxu0
        %v914 = vadd.f32 %v894, %v913
        %915 = vdwg.mxu0
        %916 = vmatpush.msra.mxu0 %v567
        %917 = vmatpush.msra.mxu0 %v563
        %918 = vmatpush.msra.mxu0 %v559
        %919 = vmatpush.msra.mxu0 %v555
        %920 = vmatpush.msra.mxu0 %v551
        %921 = vmatpush.msra.mxu0 %v547
        %922 = vmatpush.msra.mxu0 %v543
        %923 = vmatpush.msra.mxu0 %v539
        %924 = vmatpush.msra.mxu0 %v535
        %925 = vmatpush.msra.mxu0 %v531
        %926 = vmatpush.msra.mxu0 %v527
        %927 = vmatpush.msra.mxu0 %v523
        %928 = vmatpush.msra.mxu0 %v519
        %929 = vmatpush.msra.mxu0 %v515
        %930 = vmatpush.msra.mxu0 %v511
        %931 = vmatpush.msra.mxu0 %v507
        %932 = vmatmul.f32.gmra.mxu0 %v866
        %v933 = vpop.f32.mrf.mxu0
        %v934 = vadd.f32 %v869, %v933
        %935 = vdwg.mxu0
        %936 = vmatpush.msra.mxu0 %v631
        %937 = vmatpush.msra.mxu0 %v627
        %938 = vmatpush.msra.mxu0 %v623
        %939 = vmatpush.msra.mxu0 %v619
        %940 = vmatpush.msra.mxu0 %v615
        %941 = vmatpush.msra.mxu0 %v611
        %942 = vmatpush.msra.mxu0 %v607
        %943 = vmatpush.msra.mxu0 %v603
        %944 = vmatpush.msra.mxu0 %v599
        %945 = vmatpush.msra.mxu0 %v595
        %946 = vmatpush.msra.mxu0 %v591
        %947 = vmatpush.msra.mxu0 %v587
        %948 = vmatpush.msra.mxu0 %v583
        %949 = vmatpush.msra.mxu0 %v579
        %950 = vmatpush.msra.mxu0 %v575
        %951 = vmatpush.msra.mxu0 %v571
        %952 = vmatmul.f32.gmra.mxu0 %v670
        %v953 = vpop.f32.mrf.mxu0
        %v954 = vadd.f32 %v934, %v953
        %955 = vdwg.mxu0
        %956 = vmatpush.msra.mxu0 %v568
        %957 = vmatpush.msra.mxu0 %v564
        %958 = vmatpush.msra.mxu0 %v560
        %959 = vmatpush.msra.mxu0 %v556
        %960 = vmatpush.msra.mxu0 %v552
        %961 = vmatpush.msra.mxu0 %v548
        %962 = vmatpush.msra.mxu0 %v544
        %963 = vmatpush.msra.mxu0 %v540
        %964 = vmatpush.msra.mxu0 %v536
        %965 = vmatpush.msra.mxu0 %v532
        %966 = vmatpush.msra.mxu0 %v528
        %967 = vmatpush.msra.mxu0 %v524
        %968 = vmatpush.msra.mxu0 %v520
        %969 = vmatpush.msra.mxu0 %v516
        %970 = vmatpush.msra.mxu0 %v512
        %971 = vmatpush.msra.mxu0 %v508
        %972 = vmatmul.f32.gmra.mxu0 %v866
        %v973 = vpop.f32.mrf.mxu0
        %v974 = vadd.f32 %v870, %v973
        %975 = vdwg.mxu0
        %976 = vmatpush.msra.mxu0 %v632
        %977 = vmatpush.msra.mxu0 %v628
        %978 = vmatpush.msra.mxu0 %v624
        %979 = vmatpush.msra.mxu0 %v620
        %980 = vmatpush.msra.mxu0 %v616
        %981 = vmatpush.msra.mxu0 %v612
        %982 = vmatpush.msra.mxu0 %v608
        %983 = vmatpush.msra.mxu0 %v604
        %984 = vmatpush.msra.mxu0 %v600
        %985 = vmatpush.msra.mxu0 %v596
        %986 = vmatpush.msra.mxu0 %v592
        %987 = vmatpush.msra.mxu0 %v588
        %988 = vmatpush.msra.mxu0 %v584
        %989 = vmatpush.msra.mxu0 %v580
        %990 = vmatpush.msra.mxu0 %v576
        %991 = vmatpush.msra.mxu0 %v572
        %992 = vmatmul.f32.gmra.mxu0 %v670
        %v993 = vpop.f32.mrf.mxu0
        %v994 = vadd.f32 %v974, %v993
        %995 = vdwg.mxu0
        %996 = vmatpush.msra.mxu0 %v569
        %997 = vmatpush.msra.mxu0 %v565
        %998 = vmatpush.msra.mxu0 %v561
        %999 = vmatpush.msra.mxu0 %v557
        %1000 = vmatpush.msra.mxu0 %v553
        %1001 = vmatpush.msra.mxu0 %v549
        %1002 = vmatpush.msra.mxu0 %v545
        %1003 = vmatpush.msra.mxu0 %v541
        %1004 = vmatpush.msra.mxu0 %v537
        %1005 = vmatpush.msra.mxu0 %v533
        %1006 = vmatpush.msra.mxu0 %v529
        %1007 = vmatpush.msra.mxu0 %v525
        %1008 = vmatpush.msra.mxu0 %v521
        %1009 = vmatpush.msra.mxu0 %v517
        %1010 = vmatpush.msra.mxu0 %v513
        %1011 = vmatpush.msra.mxu0 %v509
        %1012 = vmatmul.f32.gmra.mxu0 %v866
        %v1013 = vpop.f32.mrf.mxu0
        %v1014 = vadd.f32 %v871, %v1013
        %1015 = vdwg.mxu0
        %1016 = vmatpush.msra.mxu0 %v633
        %1017 = vmatpush.msra.mxu0 %v629
        %1018 = vmatpush.msra.mxu0 %v625
        %1019 = vmatpush.msra.mxu0 %v621
        %1020 = vmatpush.msra.mxu0 %v617
        %1021 = vmatpush.msra.mxu0 %v613
        %1022 = vmatpush.msra.mxu0 %v609
        %1023 = vmatpush.msra.mxu0 %v605
        %1024 = vmatpush.msra.mxu0 %v601
        %1025 = vmatpush.msra.mxu0 %v597
        %1026 = vmatpush.msra.mxu0 %v593
        %1027 = vmatpush.msra.mxu0 %v589
        %1028 = vmatpush.msra.mxu0 %v585
        %1029 = vmatpush.msra.mxu0 %v581
        %1030 = vmatpush.msra.mxu0 %v577
        %1031 = vmatpush.msra.mxu0 %v573
        %1032 = vmatmul.f32.gmra.mxu0 %v670
        %v1033 = vpop.f32.mrf.mxu0
        %v1034 = vadd.f32 %v1014, %v1033
        %1035 = vdwg.mxu0
        %v1036 = vsub.f32 0.0, %v914
        %v1037 = vmul.f32 %v1036, 1.442695
        %v1038 = vpow.pop %v1037
        %v1039 = vadd.f32 %v1038, 1.0
        %v1040 = vrcp.pop %v1039
        %v1041 = vsub.f32 0.0, %v954
        %v1042 = vmul.f32 %v1041, 1.442695
        %v1043 = vpow.pop %v1042
        %v1044 = vadd.f32 %v1043, 1.0
        %v1045 = vrcp.pop %v1044
        %v1046 = vtanh.pop %v994
        %v1047 = vsub.f32 0.0, %v1034
        %v1048 = vmul.f32 %v1047, 1.442695
        %v1049 = vpow.pop %v1048
        %v1050 = vadd.f32 %v1049, 1.0
        %v1051 = vrcp.pop %v1050
        %v1052 = vmul.f32 %v1045, %v671
        %v1053 = vmul.f32 %v1040, %v1046
        %v1054 = vadd.f32 %v1052, %v1053
        %v1055 = vtanh.pop %v1054
        %v1056 = vmul.f32 %v1051, %v1055
        %s1057 = smul.u32 %s22, 8
        %s1058 = sadd.s32 %s1057, 1
        %v1059 = vstv %s1058
        %vm1060 = vcmp.eq.s32.totalorder %v674, %v1059
        %v1061 = vsel %vm1060, 1, 0
        %1062 = vset.pattern.permute.xlu0 0
        %1063 = vperm.xlu0 %1062, %v1061
        %v1064 = vpop.permute.xlu0 %1063
        %vm1065 = vcmp.eq.s32.totalorder %v1064, 1
        %v1066 = vsel %vm1065, %v865, %v672
        %v1067 = vsel %vm1065, %v1056, %v673
        %s1068 = scalar_lea.vmem %s352, 8
        %v1069 = vld [vmem:[%s1068] sm:$0xff]
        %1070 = vmatpush.msra.mxu0 %v438
        %1071 = vmatpush.msra.mxu0 %v434
        %1072 = vmatpush.msra.mxu0 %v430
        %1073 = vmatpush.msra.mxu0 %v426
        %1074 = vmatpush.msra.mxu0 %v422
        %1075 = vmatpush.msra.mxu0 %v418
        %1076 = vmatpush.msra.mxu0 %v414
        %1077 = vmatpush.msra.mxu0 %v410
        %1078 = vmatpush.msra.mxu0 %v406
        %1079 = vmatpush.msra.mxu0 %v402
        %1080 = vmatpush.msra.mxu0 %v398
        %1081 = vmatpush.msra.mxu0 %v394
        %1082 = vmatpush.msra.mxu0 %v390
        %1083 = vmatpush.msra.mxu0 %v386
        %1084 = vmatpush.msra.mxu0 %v382
        %1085 = vmatpush.msra.mxu0 %v378
        %1086 = vmatmul.f32.gmra.mxu0 %v1069
        %v1087 = vpop.f32.mrf.mxu0
        %v1088 = vadd.f32 %v677, %v1087
        %1089 = vdwg.mxu0
        %1090 = vmatpush.msra.mxu0 %v502
        %1091 = vmatpush.msra.mxu0 %v498
        %1092 = vmatpush.msra.mxu0 %v494
        %1093 = vmatpush.msra.mxu0 %v490
        %1094 = vmatpush.msra.mxu0 %v486
        %1095 = vmatpush.msra.mxu0 %v482
        %1096 = vmatpush.msra.mxu0 %v478
        %1097 = vmatpush.msra.mxu0 %v474
        %1098 = vmatpush.msra.mxu0 %v470
        %1099 = vmatpush.msra.mxu0 %v466
        %1100 = vmatpush.msra.mxu0 %v462
        %1101 = vmatpush.msra.mxu0 %v458
        %1102 = vmatpush.msra.mxu0 %v454
        %1103 = vmatpush.msra.mxu0 %v450
        %1104 = vmatpush.msra.mxu0 %v446
        %1105 = vmatpush.msra.mxu0 %v442
        %1106 = vmatmul.f32.gmra.mxu0 %v865
        %v1107 = vpop.f32.mrf.mxu0
        %v1108 = vadd.f32 %v1088, %v1107
        %1109 = vdwg.mxu0
        %1110 = vmatpush.msra.mxu0 %v439
        %1111 = vmatpush.msra.mxu0 %v435
        %1112 = vmatpush.msra.mxu0 %v431
        %1113 = vmatpush.msra.mxu0 %v427
        %1114 = vmatpush.msra.mxu0 %v423
        %1115 = vmatpush.msra.mxu0 %v419
        %1116 = vmatpush.msra.mxu0 %v415
        %1117 = vmatpush.msra.mxu0 %v411
        %1118 = vmatpush.msra.mxu0 %v407
        %1119 = vmatpush.msra.mxu0 %v403
        %1120 = vmatpush.msra.mxu0 %v399
        %1121 = vmatpush.msra.mxu0 %v395
        %1122 = vmatpush.msra.mxu0 %v391
        %1123 = vmatpush.msra.mxu0 %v387
        %1124 = vmatpush.msra.mxu0 %v383
        %1125 = vmatpush.msra.mxu0 %v379
        %1126 = vmatmul.f32.gmra.mxu0 %v1069
        %v1127 = vpop.f32.mrf.mxu0
        %v1128 = vadd.f32 %v678, %v1127
        %1129 = vdwg.mxu0
        %1130 = vmatpush.msra.mxu0 %v503
        %1131 = vmatpush.msra.mxu0 %v499
        %1132 = vmatpush.msra.mxu0 %v495
        %1133 = vmatpush.msra.mxu0 %v491
        %1134 = vmatpush.msra.mxu0 %v487
        %1135 = vmatpush.msra.mxu0 %v483
        %1136 = vmatpush.msra.mxu0 %v479
        %1137 = vmatpush.msra.mxu0 %v475
        %1138 = vmatpush.msra.mxu0 %v471
        %1139 = vmatpush.msra.mxu0 %v467
        %1140 = vmatpush.msra.mxu0 %v463
        %1141 = vmatpush.msra.mxu0 %v459
        %1142 = vmatpush.msra.mxu0 %v455
        %1143 = vmatpush.msra.mxu0 %v451
        %1144 = vmatpush.msra.mxu0 %v447
        %1145 = vmatpush.msra.mxu0 %v443
        %1146 = vmatmul.f32.gmra.mxu0 %v865
        %v1147 = vpop.f32.mrf.mxu0
        %v1148 = vadd.f32 %v1128, %v1147
        %1149 = vdwg.mxu0
        %1150 = vmatpush.msra.mxu0 %v440
        %1151 = vmatpush.msra.mxu0 %v436
        %1152 = vmatpush.msra.mxu0 %v432
        %1153 = vmatpush.msra.mxu0 %v428
        %1154 = vmatpush.msra.mxu0 %v424
        %1155 = vmatpush.msra.mxu0 %v420
        %1156 = vmatpush.msra.mxu0 %v416
        %1157 = vmatpush.msra.mxu0 %v412
        %1158 = vmatpush.msra.mxu0 %v408
        %1159 = vmatpush.msra.mxu0 %v404
        %1160 = vmatpush.msra.mxu0 %v400
        %1161 = vmatpush.msra.mxu0 %v396
        %1162 = vmatpush.msra.mxu0 %v392
        %1163 = vmatpush.msra.mxu0 %v388
        %1164 = vmatpush.msra.mxu0 %v384
        %1165 = vmatpush.msra.mxu0 %v380
        %1166 = vmatmul.f32.gmra.mxu0 %v1069
        %v1167 = vpop.f32.mrf.mxu0
        %v1168 = vadd.f32 %v679, %v1167
        %1169 = vdwg.mxu0
        %1170 = vmatpush.msra.mxu0 %v504
        %1171 = vmatpush.msra.mxu0 %v500
        %1172 = vmatpush.msra.mxu0 %v496
        %1173 = vmatpush.msra.mxu0 %v492
        %1174 = vmatpush.msra.mxu0 %v488
        %1175 = vmatpush.msra.mxu0 %v484
        %1176 = vmatpush.msra.mxu0 %v480
        %1177 = vmatpush.msra.mxu0 %v476
        %1178 = vmatpush.msra.mxu0 %v472
        %1179 = vmatpush.msra.mxu0 %v468
        %1180 = vmatpush.msra.mxu0 %v464
        %1181 = vmatpush.msra.mxu0 %v460
        %1182 = vmatpush.msra.mxu0 %v456
        %1183 = vmatpush.msra.mxu0 %v452
        %1184 = vmatpush.msra.mxu0 %v448
        %1185 = vmatpush.msra.mxu0 %v444
        %1186 = vmatmul.f32.gmra.mxu0 %v865
        %v1187 = vpop.f32.mrf.mxu0
        %v1188 = vadd.f32 %v1168, %v1187
        %1189 = vdwg.mxu0
        %1190 = vmatpush.msra.mxu0 %v441
        %1191 = vmatpush.msra.mxu0 %v437
        %1192 = vmatpush.msra.mxu0 %v433
        %1193 = vmatpush.msra.mxu0 %v429
        %1194 = vmatpush.msra.mxu0 %v425
        %1195 = vmatpush.msra.mxu0 %v421
        %1196 = vmatpush.msra.mxu0 %v417
        %1197 = vmatpush.msra.mxu0 %v413
        %1198 = vmatpush.msra.mxu0 %v409
        %1199 = vmatpush.msra.mxu0 %v405
        %1200 = vmatpush.msra.mxu0 %v401
        %1201 = vmatpush.msra.mxu0 %v397
        %1202 = vmatpush.msra.mxu0 %v393
        %1203 = vmatpush.msra.mxu0 %v389
        %1204 = vmatpush.msra.mxu0 %v385
        %1205 = vmatpush.msra.mxu0 %v381
        %1206 = vmatmul.f32.gmra.mxu0 %v1069
        %v1207 = vpop.f32.mrf.mxu0
        %v1208 = vadd.f32 %v680, %v1207
        %1209 = vdwg.mxu0
        %1210 = vmatpush.msra.mxu0 %v505
        %1211 = vmatpush.msra.mxu0 %v501
        %1212 = vmatpush.msra.mxu0 %v497
        %1213 = vmatpush.msra.mxu0 %v493
        %1214 = vmatpush.msra.mxu0 %v489
        %1215 = vmatpush.msra.mxu0 %v485
        %1216 = vmatpush.msra.mxu0 %v481
        %1217 = vmatpush.msra.mxu0 %v477
        %1218 = vmatpush.msra.mxu0 %v473
        %1219 = vmatpush.msra.mxu0 %v469
        %1220 = vmatpush.msra.mxu0 %v465
        %1221 = vmatpush.msra.mxu0 %v461
        %1222 = vmatpush.msra.mxu0 %v457
        %1223 = vmatpush.msra.mxu0 %v453
        %1224 = vmatpush.msra.mxu0 %v449
        %1225 = vmatpush.msra.mxu0 %v445
        %1226 = vmatmul.f32.gmra.mxu0 %v865
        %v1227 = vpop.f32.mrf.mxu0
        %v1228 = vadd.f32 %v1208, %v1227
        %1229 = vdwg.mxu0
        %v1230 = vsub.f32 0.0, %v1108
        %v1231 = vmul.f32 %v1230, 1.442695
        %v1232 = vpow.pop %v1231
        %v1233 = vadd.f32 %v1232, 1.0
        %v1234 = vrcp.pop %v1233
        %v1235 = vsub.f32 0.0, %v1148
        %v1236 = vmul.f32 %v1235, 1.442695
        %v1237 = vpow.pop %v1236
        %v1238 = vadd.f32 %v1237, 1.0
        %v1239 = vrcp.pop %v1238
        %v1240 = vtanh.pop %v1188
        %v1241 = vsub.f32 0.0, %v1228
        %v1242 = vmul.f32 %v1241, 1.442695
        %v1243 = vpow.pop %v1242
        %v1244 = vadd.f32 %v1243, 1.0
        %v1245 = vrcp.pop %v1244
        %v1246 = vmul.f32 %v1239, %v863
        %v1247 = vmul.f32 %v1234, %v1240
        %v1248 = vadd.f32 %v1246, %v1247
        %v1249 = vtanh.pop %v1248
        %v1250 = vmul.f32 %v1245, %v1249
        %s1251 = scalar_lea.vmem %s358, 8
        %v1252 = vld [vmem:[%s1251] sm:$0xff]
        %1253 = vmatpush.msra.mxu0 %v566
        %1254 = vmatpush.msra.mxu0 %v562
        %1255 = vmatpush.msra.mxu0 %v558
        %1256 = vmatpush.msra.mxu0 %v554
        %1257 = vmatpush.msra.mxu0 %v550
        %1258 = vmatpush.msra.mxu0 %v546
        %1259 = vmatpush.msra.mxu0 %v542
        %1260 = vmatpush.msra.mxu0 %v538
        %1261 = vmatpush.msra.mxu0 %v534
        %1262 = vmatpush.msra.mxu0 %v530
        %1263 = vmatpush.msra.mxu0 %v526
        %1264 = vmatpush.msra.mxu0 %v522
        %1265 = vmatpush.msra.mxu0 %v518
        %1266 = vmatpush.msra.mxu0 %v514
        %1267 = vmatpush.msra.mxu0 %v510
        %1268 = vmatpush.msra.mxu0 %v506
        %1269 = vmatmul.f32.gmra.mxu0 %v1252
        %v1270 = vpop.f32.mrf.mxu0
        %v1271 = vadd.f32 %v868, %v1270
        %1272 = vdwg.mxu0
        %1273 = vmatpush.msra.mxu0 %v630
        %1274 = vmatpush.msra.mxu0 %v626
        %1275 = vmatpush.msra.mxu0 %v622
        %1276 = vmatpush.msra.mxu0 %v618
        %1277 = vmatpush.msra.mxu0 %v614
        %1278 = vmatpush.msra.mxu0 %v610
        %1279 = vmatpush.msra.mxu0 %v606
        %1280 = vmatpush.msra.mxu0 %v602
        %1281 = vmatpush.msra.mxu0 %v598
        %1282 = vmatpush.msra.mxu0 %v594
        %1283 = vmatpush.msra.mxu0 %v590
        %1284 = vmatpush.msra.mxu0 %v586
        %1285 = vmatpush.msra.mxu0 %v582
        %1286 = vmatpush.msra.mxu0 %v578
        %1287 = vmatpush.msra.mxu0 %v574
        %1288 = vmatpush.msra.mxu0 %v570
        %1289 = vmatmul.f32.gmra.mxu0 %v1056
        %v1290 = vpop.f32.mrf.mxu0
        %v1291 = vadd.f32 %v1271, %v1290
        %1292 = vdwg.mxu0
        %1293 = vmatpush.msra.mxu0 %v567
        %1294 = vmatpush.msra.mxu0 %v563
        %1295 = vmatpush.msra.mxu0 %v559
        %1296 = vmatpush.msra.mxu0 %v555
        %1297 = vmatpush.msra.mxu0 %v551
        %1298 = vmatpush.msra.mxu0 %v547
        %1299 = vmatpush.msra.mxu0 %v543
        %1300 = vmatpush.msra.mxu0 %v539
        %1301 = vmatpush.msra.mxu0 %v535
        %1302 = vmatpush.msra.mxu0 %v531
        %1303 = vmatpush.msra.mxu0 %v527
        %1304 = vmatpush.msra.mxu0 %v523
        %1305 = vmatpush.msra.mxu0 %v519
        %1306 = vmatpush.msra.mxu0 %v515
        %1307 = vmatpush.msra.mxu0 %v511
        %1308 = vmatpush.msra.mxu0 %v507
        %1309 = vmatmul.f32.gmra.mxu0 %v1252
        %v1310 = vpop.f32.mrf.mxu0
        %v1311 = vadd.f32 %v869, %v1310
        %1312 = vdwg.mxu0
        %1313 = vmatpush.msra.mxu0 %v631
        %1314 = vmatpush.msra.mxu0 %v627
        %1315 = vmatpush.msra.mxu0 %v623
        %1316 = vmatpush.msra.mxu0 %v619
        %1317 = vmatpush.msra.mxu0 %v615
        %1318 = vmatpush.msra.mxu0 %v611
        %1319 = vmatpush.msra.mxu0 %v607
        %1320 = vmatpush.msra.mxu0 %v603
        %1321 = vmatpush.msra.mxu0 %v599
        %1322 = vmatpush.msra.mxu0 %v595
        %1323 = vmatpush.msra.mxu0 %v591
        %1324 = vmatpush.msra.mxu0 %v587
        %1325 = vmatpush.msra.mxu0 %v583
        %1326 = vmatpush.msra.mxu0 %v579
        %1327 = vmatpush.msra.mxu0 %v575
        %1328 = vmatpush.msra.mxu0 %v571
        %1329 = vmatmul.f32.gmra.mxu0 %v1056
        %v1330 = vpop.f32.mrf.mxu0
        %v1331 = vadd.f32 %v1311, %v1330
        %1332 = vdwg.mxu0
        %1333 = vmatpush.msra.mxu0 %v568
        %1334 = vmatpush.msra.mxu0 %v564
        %1335 = vmatpush.msra.mxu0 %v560
        %1336 = vmatpush.msra.mxu0 %v556
        %1337 = vmatpush.msra.mxu0 %v552
        %1338 = vmatpush.msra.mxu0 %v548
        %1339 = vmatpush.msra.mxu0 %v544
        %1340 = vmatpush.msra.mxu0 %v540
        %1341 = vmatpush.msra.mxu0 %v536
        %1342 = vmatpush.msra.mxu0 %v532
        %1343 = vmatpush.msra.mxu0 %v528
        %1344 = vmatpush.msra.mxu0 %v524
        %1345 = vmatpush.msra.mxu0 %v520
        %1346 = vmatpush.msra.mxu0 %v516
        %1347 = vmatpush.msra.mxu0 %v512
        %1348 = vmatpush.msra.mxu0 %v508
        %1349 = vmatmul.f32.gmra.mxu0 %v1252
        %v1350 = vpop.f32.mrf.mxu0
        %v1351 = vadd.f32 %v870, %v1350
        %1352 = vdwg.mxu0
        %1353 = vmatpush.msra.mxu0 %v632
        %1354 = vmatpush.msra.mxu0 %v628
        %1355 = vmatpush.msra.mxu0 %v624
        %1356 = vmatpush.msra.mxu0 %v620
        %1357 = vmatpush.msra.mxu0 %v616
        %1358 = vmatpush.msra.mxu0 %v612
        %1359 = vmatpush.msra.mxu0 %v608
        %1360 = vmatpush.msra.mxu0 %v604
        %1361 = vmatpush.msra.mxu0 %v600
        %1362 = vmatpush.msra.mxu0 %v596
        %1363 = vmatpush.msra.mxu0 %v592
        %1364 = vmatpush.msra.mxu0 %v588
        %1365 = vmatpush.msra.mxu0 %v584
        %1366 = vmatpush.msra.mxu0 %v580
        %1367 = vmatpush.msra.mxu0 %v576
        %1368 = vmatpush.msra.mxu0 %v572
        %1369 = vmatmul.f32.gmra.mxu0 %v1056
        %v1370 = vpop.f32.mrf.mxu0
        %v1371 = vadd.f32 %v1351, %v1370
        %1372 = vdwg.mxu0
        %1373 = vmatpush.msra.mxu0 %v569
        %1374 = vmatpush.msra.mxu0 %v565
        %1375 = vmatpush.msra.mxu0 %v561
        %1376 = vmatpush.msra.mxu0 %v557
        %1377 = vmatpush.msra.mxu0 %v553
        %1378 = vmatpush.msra.mxu0 %v549
        %1379 = vmatpush.msra.mxu0 %v545
        %1380 = vmatpush.msra.mxu0 %v541
        %1381 = vmatpush.msra.mxu0 %v537
        %1382 = vmatpush.msra.mxu0 %v533
        %1383 = vmatpush.msra.mxu0 %v529
        %1384 = vmatpush.msra.mxu0 %v525
        %1385 = vmatpush.msra.mxu0 %v521
        %1386 = vmatpush.msra.mxu0 %v517
        %1387 = vmatpush.msra.mxu0 %v513
        %1388 = vmatpush.msra.mxu0 %v509
        %1389 = vmatmul.f32.gmra.mxu0 %v1252
        %v1390 = vpop.f32.mrf.mxu0
        %v1391 = vadd.f32 %v871, %v1390
        %1392 = vdwg.mxu0
        %1393 = vmatpush.msra.mxu0 %v633
        %1394 = vmatpush.msra.mxu0 %v629
        %1395 = vmatpush.msra.mxu0 %v625
        %1396 = vmatpush.msra.mxu0 %v621
        %1397 = vmatpush.msra.mxu0 %v617
        %1398 = vmatpush.msra.mxu0 %v613
        %1399 = vmatpush.msra.mxu0 %v609
        %1400 = vmatpush.msra.mxu0 %v605
        %1401 = vmatpush.msra.mxu0 %v601
        %1402 = vmatpush.msra.mxu0 %v597
        %1403 = vmatpush.msra.mxu0 %v593
        %1404 = vmatpush.msra.mxu0 %v589
        %1405 = vmatpush.msra.mxu0 %v585
        %1406 = vmatpush.msra.mxu0 %v581
        %1407 = vmatpush.msra.mxu0 %v577
        %1408 = vmatpush.msra.mxu0 %v573
        %1409 = vmatmul.f32.gmra.mxu0 %v1056
        %v1410 = vpop.f32.mrf.mxu0
        %v1411 = vadd.f32 %v1391, %v1410
        %1412 = vdwg.mxu0
        %v1413 = vsub.f32 0.0, %v1291
        %v1414 = vmul.f32 %v1413, 1.442695
        %v1415 = vpow.pop %v1414
        %v1416 = vadd.f32 %v1415, 1.0
        %v1417 = vrcp.pop %v1416
        %v1418 = vsub.f32 0.0, %v1331
        %v1419 = vmul.f32 %v1418, 1.442695
        %v1420 = vpow.pop %v1419
        %v1421 = vadd.f32 %v1420, 1.0
        %v1422 = vrcp.pop %v1421
        %v1423 = vtanh.pop %v1371
        %v1424 = vsub.f32 0.0, %v1411
        %v1425 = vmul.f32 %v1424, 1.442695
        %v1426 = vpow.pop %v1425
        %v1427 = vadd.f32 %v1426, 1.0
        %v1428 = vrcp.pop %v1427
        %v1429 = vmul.f32 %v1422, %v1054
        %v1430 = vmul.f32 %v1417, %v1423
        %v1431 = vadd.f32 %v1429, %v1430
        %v1432 = vtanh.pop %v1431
        %v1433 = vmul.f32 %v1428, %v1432
        %s1434 = sadd.s32 %s1057, 2
        %v1435 = vstv %s1434
        %vm1436 = vcmp.eq.s32.totalorder %v674, %v1435
        %v1437 = vsel %vm1436, 1, 0
        %1438 = vset.pattern.permute.xlu0 0
        %1439 = vperm.xlu0 %1438, %v1437
        %v1440 = vpop.permute.xlu0 %1439
        %vm1441 = vcmp.eq.s32.totalorder %v1440, 1
        %v1442 = vsel %vm1441, %v1250, %v1066
        %v1443 = vsel %vm1441, %v1433, %v1067
        %s1444 = scalar_lea.vmem %s352, 16
        %v1445 = vld [vmem:[%s1444] sm:$0xff]
        %1446 = vmatpush.msra.mxu0 %v438
        %1447 = vmatpush.msra.mxu0 %v434
        %1448 = vmatpush.msra.mxu0 %v430
        %1449 = vmatpush.msra.mxu0 %v426
        %1450 = vmatpush.msra.mxu0 %v422
        %1451 = vmatpush.msra.mxu0 %v418
        %1452 = vmatpush.msra.mxu0 %v414
        %1453 = vmatpush.msra.mxu0 %v410
        %1454 = vmatpush.msra.mxu0 %v406
        %1455 = vmatpush.msra.mxu0 %v402
        %1456 = vmatpush.msra.mxu0 %v398
        %1457 = vmatpush.msra.mxu0 %v394
        %1458 = vmatpush.msra.mxu0 %v390
        %1459 = vmatpush.msra.mxu0 %v386
        %1460 = vmatpush.msra.mxu0 %v382
        %1461 = vmatpush.msra.mxu0 %v378
        %1462 = vmatmul.f32.gmra.mxu0 %v1445
        %v1463 = vpop.f32.mrf.mxu0
        %v1464 = vadd.f32 %v677, %v1463
        %1465 = vdwg.mxu0
        %1466 = vmatpush.msra.mxu0 %v502
        %1467 = vmatpush.msra.mxu0 %v498
        %1468 = vmatpush.msra.mxu0 %v494
        %1469 = vmatpush.msra.mxu0 %v490
        %1470 = vmatpush.msra.mxu0 %v486
        %1471 = vmatpush.msra.mxu0 %v482
        %1472 = vmatpush.msra.mxu0 %v478
        %1473 = vmatpush.msra.mxu0 %v474
        %1474 = vmatpush.msra.mxu0 %v470
        %1475 = vmatpush.msra.mxu0 %v466
        %1476 = vmatpush.msra.mxu0 %v462
        %1477 = vmatpush.msra.mxu0 %v458
        %1478 = vmatpush.msra.mxu0 %v454
        %1479 = vmatpush.msra.mxu0 %v450
        %1480 = vmatpush.msra.mxu0 %v446
        %1481 = vmatpush.msra.mxu0 %v442
        %1482 = vmatmul.f32.gmra.mxu0 %v1250
        %v1483 = vpop.f32.mrf.mxu0
        %v1484 = vadd.f32 %v1464, %v1483
        %1485 = vdwg.mxu0
        %1486 = vmatpush.msra.mxu0 %v439
        %1487 = vmatpush.msra.mxu0 %v435
        %1488 = vmatpush.msra.mxu0 %v431
        %1489 = vmatpush.msra.mxu0 %v427
        %1490 = vmatpush.msra.mxu0 %v423
        %1491 = vmatpush.msra.mxu0 %v419
        %1492 = vmatpush.msra.mxu0 %v415
        %1493 = vmatpush.msra.mxu0 %v411
        %1494 = vmatpush.msra.mxu0 %v407
        %1495 = vmatpush.msra.mxu0 %v403
        %1496 = vmatpush.msra.mxu0 %v399
        %1497 = vmatpush.msra.mxu0 %v395
        %1498 = vmatpush.msra.mxu0 %v391
        %1499 = vmatpush.msra.mxu0 %v387
        %1500 = vmatpush.msra.mxu0 %v383
        %1501 = vmatpush.msra.mxu0 %v379
        %1502 = vmatmul.f32.gmra.mxu0 %v1445
        %v1503 = vpop.f32.mrf.mxu0
        %v1504 = vadd.f32 %v678, %v1503
        %1505 = vdwg.mxu0
        %1506 = vmatpush.msra.mxu0 %v503
        %1507 = vmatpush.msra.mxu0 %v499
        %1508 = vmatpush.msra.mxu0 %v495
        %1509 = vmatpush.msra.mxu0 %v491
        %1510 = vmatpush.msra.mxu0 %v487
        %1511 = vmatpush.msra.mxu0 %v483
        %1512 = vmatpush.msra.mxu0 %v479
        %1513 = vmatpush.msra.mxu0 %v475
        %1514 = vmatpush.msra.mxu0 %v471
        %1515 = vmatpush.msra.mxu0 %v467
        %1516 = vmatpush.msra.mxu0 %v463
        %1517 = vmatpush.msra.mxu0 %v459
        %1518 = vmatpush.msra.mxu0 %v455
        %1519 = vmatpush.msra.mxu0 %v451
        %1520 = vmatpush.msra.mxu0 %v447
        %1521 = vmatpush.msra.mxu0 %v443
        %1522 = vmatmul.f32.gmra.mxu0 %v1250
        %v1523 = vpop.f32.mrf.mxu0
        %v1524 = vadd.f32 %v1504, %v1523
        %1525 = vdwg.mxu0
        %1526 = vmatpush.msra.mxu0 %v440
        %1527 = vmatpush.msra.mxu0 %v436
        %1528 = vmatpush.msra.mxu0 %v432
        %1529 = vmatpush.msra.mxu0 %v428
        %1530 = vmatpush.msra.mxu0 %v424
        %1531 = vmatpush.msra.mxu0 %v420
        %1532 = vmatpush.msra.mxu0 %v416
        %1533 = vmatpush.msra.mxu0 %v412
        %1534 = vmatpush.msra.mxu0 %v408
        %1535 = vmatpush.msra.mxu0 %v404
        %1536 = vmatpush.msra.mxu0 %v400
        %1537 = vmatpush.msra.mxu0 %v396
        %1538 = vmatpush.msra.mxu0 %v392
        %1539 = vmatpush.msra.mxu0 %v388
        %1540 = vmatpush.msra.mxu0 %v384
        %1541 = vmatpush.msra.mxu0 %v380
        %1542 = vmatmul.f32.gmra.mxu0 %v1445
        %v1543 = vpop.f32.mrf.mxu0
        %v1544 = vadd.f32 %v679, %v1543
        %1545 = vdwg.mxu0
        %1546 = vmatpush.msra.mxu0 %v504
        %1547 = vmatpush.msra.mxu0 %v500
        %1548 = vmatpush.msra.mxu0 %v496
        %1549 = vmatpush.msra.mxu0 %v492
        %1550 = vmatpush.msra.mxu0 %v488
        %1551 = vmatpush.msra.mxu0 %v484
        %1552 = vmatpush.msra.mxu0 %v480
        %1553 = vmatpush.msra.mxu0 %v476
        %1554 = vmatpush.msra.mxu0 %v472
        %1555 = vmatpush.msra.mxu0 %v468
        %1556 = vmatpush.msra.mxu0 %v464
        %1557 = vmatpush.msra.mxu0 %v460
        %1558 = vmatpush.msra.mxu0 %v456
        %1559 = vmatpush.msra.mxu0 %v452
        %1560 = vmatpush.msra.mxu0 %v448
        %1561 = vmatpush.msra.mxu0 %v444
        %1562 = vmatmul.f32.gmra.mxu0 %v1250
        %v1563 = vpop.f32.mrf.mxu0
        %v1564 = vadd.f32 %v1544, %v1563
        %1565 = vdwg.mxu0
        %1566 = vmatpush.msra.mxu0 %v441
        %1567 = vmatpush.msra.mxu0 %v437
        %1568 = vmatpush.msra.mxu0 %v433
        %1569 = vmatpush.msra.mxu0 %v429
        %1570 = vmatpush.msra.mxu0 %v425
        %1571 = vmatpush.msra.mxu0 %v421
        %1572 = vmatpush.msra.mxu0 %v417
        %1573 = vmatpush.msra.mxu0 %v413
        %1574 = vmatpush.msra.mxu0 %v409
        %1575 = vmatpush.msra.mxu0 %v405
        %1576 = vmatpush.msra.mxu0 %v401
        %1577 = vmatpush.msra.mxu0 %v397
        %1578 = vmatpush.msra.mxu0 %v393
        %1579 = vmatpush.msra.mxu0 %v389
        %1580 = vmatpush.msra.mxu0 %v385
        %1581 = vmatpush.msra.mxu0 %v381
        %1582 = vmatmul.f32.gmra.mxu0 %v1445
        %v1583 = vpop.f32.mrf.mxu0
        %v1584 = vadd.f32 %v680, %v1583
        %1585 = vdwg.mxu0
        %1586 = vmatpush.msra.mxu0 %v505
        %1587 = vmatpush.msra.mxu0 %v501
        %1588 = vmatpush.msra.mxu0 %v497
        %1589 = vmatpush.msra.mxu0 %v493
        %1590 = vmatpush.msra.mxu0 %v489
        %1591 = vmatpush.msra.mxu0 %v485
        %1592 = vmatpush.msra.mxu0 %v481
        %1593 = vmatpush.msra.mxu0 %v477
        %1594 = vmatpush.msra.mxu0 %v473
        %1595 = vmatpush.msra.mxu0 %v469
        %1596 = vmatpush.msra.mxu0 %v465
        %1597 = vmatpush.msra.mxu0 %v461
        %1598 = vmatpush.msra.mxu0 %v457
        %1599 = vmatpush.msra.mxu0 %v453
        %1600 = vmatpush.msra.mxu0 %v449
        %1601 = vmatpush.msra.mxu0 %v445
        %1602 = vmatmul.f32.gmra.mxu0 %v1250
        %v1603 = vpop.f32.mrf.mxu0
        %v1604 = vadd.f32 %v1584, %v1603
        %1605 = vdwg.mxu0
        %v1606 = vsub.f32 0.0, %v1484
        %v1607 = vmul.f32 %v1606, 1.442695
        %v1608 = vpow.pop %v1607
        %v1609 = vadd.f32 %v1608, 1.0
        %v1610 = vrcp.pop %v1609
        %v1611 = vsub.f32 0.0, %v1524
        %v1612 = vmul.f32 %v1611, 1.442695
        %v1613 = vpow.pop %v1612
        %v1614 = vadd.f32 %v1613, 1.0
        %v1615 = vrcp.pop %v1614
        %v1616 = vtanh.pop %v1564
        %v1617 = vsub.f32 0.0, %v1604
        %v1618 = vmul.f32 %v1617, 1.442695
        %v1619 = vpow.pop %v1618
        %v1620 = vadd.f32 %v1619, 1.0
        %v1621 = vrcp.pop %v1620
        %v1622 = vmul.f32 %v1615, %v1248
        %v1623 = vmul.f32 %v1610, %v1616
        %v1624 = vadd.f32 %v1622, %v1623
        %v1625 = vtanh.pop %v1624
        %v1626 = vmul.f32 %v1621, %v1625
        %s1627 = scalar_lea.vmem %s358, 16
        %v1628 = vld [vmem:[%s1627] sm:$0xff]
        %1629 = vmatpush.msra.mxu0 %v566
        %1630 = vmatpush.msra.mxu0 %v562
        %1631 = vmatpush.msra.mxu0 %v558
        %1632 = vmatpush.msra.mxu0 %v554
        %1633 = vmatpush.msra.mxu0 %v550
        %1634 = vmatpush.msra.mxu0 %v546
        %1635 = vmatpush.msra.mxu0 %v542
        %1636 = vmatpush.msra.mxu0 %v538
        %1637 = vmatpush.msra.mxu0 %v534
        %1638 = vmatpush.msra.mxu0 %v530
        %1639 = vmatpush.msra.mxu0 %v526
        %1640 = vmatpush.msra.mxu0 %v522
        %1641 = vmatpush.msra.mxu0 %v518
        %1642 = vmatpush.msra.mxu0 %v514
        %1643 = vmatpush.msra.mxu0 %v510
        %1644 = vmatpush.msra.mxu0 %v506
        %1645 = vmatmul.f32.gmra.mxu0 %v1628
        %v1646 = vpop.f32.mrf.mxu0
        %v1647 = vadd.f32 %v868, %v1646
        %1648 = vdwg.mxu0
        %1649 = vmatpush.msra.mxu0 %v630
        %1650 = vmatpush.msra.mxu0 %v626
        %1651 = vmatpush.msra.mxu0 %v622
        %1652 = vmatpush.msra.mxu0 %v618
        %1653 = vmatpush.msra.mxu0 %v614
        %1654 = vmatpush.msra.mxu0 %v610
        %1655 = vmatpush.msra.mxu0 %v606
        %1656 = vmatpush.msra.mxu0 %v602
        %1657 = vmatpush.msra.mxu0 %v598
        %1658 = vmatpush.msra.mxu0 %v594
        %1659 = vmatpush.msra.mxu0 %v590
        %1660 = vmatpush.msra.mxu0 %v586
        %1661 = vmatpush.msra.mxu0 %v582
        %1662 = vmatpush.msra.mxu0 %v578
        %1663 = vmatpush.msra.mxu0 %v574
        %1664 = vmatpush.msra.mxu0 %v570
        %1665 = vmatmul.f32.gmra.mxu0 %v1433
        %v1666 = vpop.f32.mrf.mxu0
        %v1667 = vadd.f32 %v1647, %v1666
        %1668 = vdwg.mxu0
        %1669 = vmatpush.msra.mxu0 %v567
        %1670 = vmatpush.msra.mxu0 %v563
        %1671 = vmatpush.msra.mxu0 %v559
        %1672 = vmatpush.msra.mxu0 %v555
        %1673 = vmatpush.msra.mxu0 %v551
        %1674 = vmatpush.msra.mxu0 %v547
        %1675 = vmatpush.msra.mxu0 %v543
        %1676 = vmatpush.msra.mxu0 %v539
        %1677 = vmatpush.msra.mxu0 %v535
        %1678 = vmatpush.msra.mxu0 %v531
        %1679 = vmatpush.msra.mxu0 %v527
        %1680 = vmatpush.msra.mxu0 %v523
        %1681 = vmatpush.msra.mxu0 %v519
        %1682 = vmatpush.msra.mxu0 %v515
        %1683 = vmatpush.msra.mxu0 %v511
        %1684 = vmatpush.msra.mxu0 %v507
        %1685 = vmatmul.f32.gmra.mxu0 %v1628
        %v1686 = vpop.f32.mrf.mxu0
        %v1687 = vadd.f32 %v869, %v1686
        %1688 = vdwg.mxu0
        %1689 = vmatpush.msra.mxu0 %v631
        %1690 = vmatpush.msra.mxu0 %v627
        %1691 = vmatpush.msra.mxu0 %v623
        %1692 = vmatpush.msra.mxu0 %v619
        %1693 = vmatpush.msra.mxu0 %v615
        %1694 = vmatpush.msra.mxu0 %v611
        %1695 = vmatpush.msra.mxu0 %v607
        %1696 = vmatpush.msra.mxu0 %v603
        %1697 = vmatpush.msra.mxu0 %v599
        %1698 = vmatpush.msra.mxu0 %v595
        %1699 = vmatpush.msra.mxu0 %v591
        %1700 = vmatpush.msra.mxu0 %v587
        %1701 = vmatpush.msra.mxu0 %v583
        %1702 = vmatpush.msra.mxu0 %v579
        %1703 = vmatpush.msra.mxu0 %v575
        %1704 = vmatpush.msra.mxu0 %v571
        %1705 = vmatmul.f32.gmra.mxu0 %v1433
        %v1706 = vpop.f32.mrf.mxu0
        %v1707 = vadd.f32 %v1687, %v1706
        %1708 = vdwg.mxu0
        %1709 = vmatpush.msra.mxu0 %v568
        %1710 = vmatpush.msra.mxu0 %v564
        %1711 = vmatpush.msra.mxu0 %v560
        %1712 = vmatpush.msra.mxu0 %v556
        %1713 = vmatpush.msra.mxu0 %v552
        %1714 = vmatpush.msra.mxu0 %v548
        %1715 = vmatpush.msra.mxu0 %v544
        %1716 = vmatpush.msra.mxu0 %v540
        %1717 = vmatpush.msra.mxu0 %v536
        %1718 = vmatpush.msra.mxu0 %v532
        %1719 = vmatpush.msra.mxu0 %v528
        %1720 = vmatpush.msra.mxu0 %v524
        %1721 = vmatpush.msra.mxu0 %v520
        %1722 = vmatpush.msra.mxu0 %v516
        %1723 = vmatpush.msra.mxu0 %v512
        %1724 = vmatpush.msra.mxu0 %v508
        %1725 = vmatmul.f32.gmra.mxu0 %v1628
        %v1726 = vpop.f32.mrf.mxu0
        %v1727 = vadd.f32 %v870, %v1726
        %1728 = vdwg.mxu0
        %1729 = vmatpush.msra.mxu0 %v632
        %1730 = vmatpush.msra.mxu0 %v628
        %1731 = vmatpush.msra.mxu0 %v624
        %1732 = vmatpush.msra.mxu0 %v620
        %1733 = vmatpush.msra.mxu0 %v616
        %1734 = vmatpush.msra.mxu0 %v612
        %1735 = vmatpush.msra.mxu0 %v608
        %1736 = vmatpush.msra.mxu0 %v604
        %1737 = vmatpush.msra.mxu0 %v600
        %1738 = vmatpush.msra.mxu0 %v596
        %1739 = vmatpush.msra.mxu0 %v592
        %1740 = vmatpush.msra.mxu0 %v588
        %1741 = vmatpush.msra.mxu0 %v584
        %1742 = vmatpush.msra.mxu0 %v580
        %1743 = vmatpush.msra.mxu0 %v576
        %1744 = vmatpush.msra.mxu0 %v572
        %1745 = vmatmul.f32.gmra.mxu0 %v1433
        %v1746 = vpop.f32.mrf.mxu0
        %v1747 = vadd.f32 %v1727, %v1746
        %1748 = vdwg.mxu0
        %1749 = vmatpush.msra.mxu0 %v569
        %1750 = vmatpush.msra.mxu0 %v565
        %1751 = vmatpush.msra.mxu0 %v561
        %1752 = vmatpush.msra.mxu0 %v557
        %1753 = vmatpush.msra.mxu0 %v553
        %1754 = vmatpush.msra.mxu0 %v549
        %1755 = vmatpush.msra.mxu0 %v545
        %1756 = vmatpush.msra.mxu0 %v541
        %1757 = vmatpush.msra.mxu0 %v537
        %1758 = vmatpush.msra.mxu0 %v533
        %1759 = vmatpush.msra.mxu0 %v529
        %1760 = vmatpush.msra.mxu0 %v525
        %1761 = vmatpush.msra.mxu0 %v521
        %1762 = vmatpush.msra.mxu0 %v517
        %1763 = vmatpush.msra.mxu0 %v513
        %1764 = vmatpush.msra.mxu0 %v509
        %1765 = vmatmul.f32.gmra.mxu0 %v1628
        %v1766 = vpop.f32.mrf.mxu0
        %v1767 = vadd.f32 %v871, %v1766
        %1768 = vdwg.mxu0
        %1769 = vmatpush.msra.mxu0 %v633
        %1770 = vmatpush.msra.mxu0 %v629
        %1771 = vmatpush.msra.mxu0 %v625
        %1772 = vmatpush.msra.mxu0 %v621
        %1773 = vmatpush.msra.mxu0 %v617
        %1774 = vmatpush.msra.mxu0 %v613
        %1775 = vmatpush.msra.mxu0 %v609
        %1776 = vmatpush.msra.mxu0 %v605
        %1777 = vmatpush.msra.mxu0 %v601
        %1778 = vmatpush.msra.mxu0 %v597
        %1779 = vmatpush.msra.mxu0 %v593
        %1780 = vmatpush.msra.mxu0 %v589
        %1781 = vmatpush.msra.mxu0 %v585
        %1782 = vmatpush.msra.mxu0 %v581
        %1783 = vmatpush.msra.mxu0 %v577
        %1784 = vmatpush.msra.mxu0 %v573
        %1785 = vmatmul.f32.gmra.mxu0 %v1433
        %v1786 = vpop.f32.mrf.mxu0
        %v1787 = vadd.f32 %v1767, %v1786
        %1788 = vdwg.mxu0
        %v1789 = vsub.f32 0.0, %v1667
        %v1790 = vmul.f32 %v1789, 1.442695
        %v1791 = vpow.pop %v1790
        %v1792 = vadd.f32 %v1791, 1.0
        %v1793 = vrcp.pop %v1792
        %v1794 = vsub.f32 0.0, %v1707
        %v1795 = vmul.f32 %v1794, 1.442695
        %v1796 = vpow.pop %v1795
        %v1797 = vadd.f32 %v1796, 1.0
        %v1798 = vrcp.pop %v1797
        %v1799 = vtanh.pop %v1747
        %v1800 = vsub.f32 0.0, %v1787
        %v1801 = vmul.f32 %v1800, 1.442695
        %v1802 = vpow.pop %v1801
        %v1803 = vadd.f32 %v1802, 1.0
        %v1804 = vrcp.pop %v1803
        %v1805 = vmul.f32 %v1798, %v1431
        %v1806 = vmul.f32 %v1793, %v1799
        %v1807 = vadd.f32 %v1805, %v1806
        %v1808 = vtanh.pop %v1807
        %v1809 = vmul.f32 %v1804, %v1808
        %s1810 = sadd.s32 %s1057, 3
        %v1811 = vstv %s1810
        %vm1812 = vcmp.eq.s32.totalorder %v674, %v1811
        %v1813 = vsel %vm1812, 1, 0
        %1814 = vset.pattern.permute.xlu0 0
        %1815 = vperm.xlu0 %1814, %v1813
        %v1816 = vpop.permute.xlu0 %1815
        %vm1817 = vcmp.eq.s32.totalorder %v1816, 1
        %v1818 = vsel %vm1817, %v1626, %v1442
        %v1819 = vsel %vm1817, %v1809, %v1443
        %s1820 = scalar_lea.vmem %s352, 24
        %v1821 = vld [vmem:[%s1820] sm:$0xff]
        %1822 = vmatpush.msra.mxu0 %v438
        %1823 = vmatpush.msra.mxu0 %v434
        %1824 = vmatpush.msra.mxu0 %v430
        %1825 = vmatpush.msra.mxu0 %v426
        %1826 = vmatpush.msra.mxu0 %v422
        %1827 = vmatpush.msra.mxu0 %v418
        %1828 = vmatpush.msra.mxu0 %v414
        %1829 = vmatpush.msra.mxu0 %v410
        %1830 = vmatpush.msra.mxu0 %v406
        %1831 = vmatpush.msra.mxu0 %v402
        %1832 = vmatpush.msra.mxu0 %v398
        %1833 = vmatpush.msra.mxu0 %v394
        %1834 = vmatpush.msra.mxu0 %v390
        %1835 = vmatpush.msra.mxu0 %v386
        %1836 = vmatpush.msra.mxu0 %v382
        %1837 = vmatpush.msra.mxu0 %v378
        %1838 = vmatmul.f32.gmra.mxu0 %v1821
        %v1839 = vpop.f32.mrf.mxu0
        %v1840 = vadd.f32 %v677, %v1839
        %1841 = vdwg.mxu0
        %1842 = vmatpush.msra.mxu0 %v502
        %1843 = vmatpush.msra.mxu0 %v498
        %1844 = vmatpush.msra.mxu0 %v494
        %1845 = vmatpush.msra.mxu0 %v490
        %1846 = vmatpush.msra.mxu0 %v486
        %1847 = vmatpush.msra.mxu0 %v482
        %1848 = vmatpush.msra.mxu0 %v478
        %1849 = vmatpush.msra.mxu0 %v474
        %1850 = vmatpush.msra.mxu0 %v470
        %1851 = vmatpush.msra.mxu0 %v466
        %1852 = vmatpush.msra.mxu0 %v462
        %1853 = vmatpush.msra.mxu0 %v458
        %1854 = vmatpush.msra.mxu0 %v454
        %1855 = vmatpush.msra.mxu0 %v450
        %1856 = vmatpush.msra.mxu0 %v446
        %1857 = vmatpush.msra.mxu0 %v442
        %1858 = vmatmul.f32.gmra.mxu0 %v1626
        %v1859 = vpop.f32.mrf.mxu0
        %v1860 = vadd.f32 %v1840, %v1859
        %1861 = vdwg.mxu0
        %1862 = vmatpush.msra.mxu0 %v439
        %1863 = vmatpush.msra.mxu0 %v435
        %1864 = vmatpush.msra.mxu0 %v431
        %1865 = vmatpush.msra.mxu0 %v427
        %1866 = vmatpush.msra.mxu0 %v423
        %1867 = vmatpush.msra.mxu0 %v419
        %1868 = vmatpush.msra.mxu0 %v415
        %1869 = vmatpush.msra.mxu0 %v411
        %1870 = vmatpush.msra.mxu0 %v407
        %1871 = vmatpush.msra.mxu0 %v403
        %1872 = vmatpush.msra.mxu0 %v399
        %1873 = vmatpush.msra.mxu0 %v395
        %1874 = vmatpush.msra.mxu0 %v391
        %1875 = vmatpush.msra.mxu0 %v387
        %1876 = vmatpush.msra.mxu0 %v383
        %1877 = vmatpush.msra.mxu0 %v379
        %1878 = vmatmul.f32.gmra.mxu0 %v1821
        %v1879 = vpop.f32.mrf.mxu0
        %v1880 = vadd.f32 %v678, %v1879
        %1881 = vdwg.mxu0
        %1882 = vmatpush.msra.mxu0 %v503
        %1883 = vmatpush.msra.mxu0 %v499
        %1884 = vmatpush.msra.mxu0 %v495
        %1885 = vmatpush.msra.mxu0 %v491
        %1886 = vmatpush.msra.mxu0 %v487
        %1887 = vmatpush.msra.mxu0 %v483
        %1888 = vmatpush.msra.mxu0 %v479
        %1889 = vmatpush.msra.mxu0 %v475
        %1890 = vmatpush.msra.mxu0 %v471
        %1891 = vmatpush.msra.mxu0 %v467
        %1892 = vmatpush.msra.mxu0 %v463
        %1893 = vmatpush.msra.mxu0 %v459
        %1894 = vmatpush.msra.mxu0 %v455
        %1895 = vmatpush.msra.mxu0 %v451
        %1896 = vmatpush.msra.mxu0 %v447
        %1897 = vmatpush.msra.mxu0 %v443
        %1898 = vmatmul.f32.gmra.mxu0 %v1626
        %v1899 = vpop.f32.mrf.mxu0
        %v1900 = vadd.f32 %v1880, %v1899
        %1901 = vdwg.mxu0
        %1902 = vmatpush.msra.mxu0 %v440
        %1903 = vmatpush.msra.mxu0 %v436
        %1904 = vmatpush.msra.mxu0 %v432
        %1905 = vmatpush.msra.mxu0 %v428
        %1906 = vmatpush.msra.mxu0 %v424
        %1907 = vmatpush.msra.mxu0 %v420
        %1908 = vmatpush.msra.mxu0 %v416
        %1909 = vmatpush.msra.mxu0 %v412
        %1910 = vmatpush.msra.mxu0 %v408
        %1911 = vmatpush.msra.mxu0 %v404
        %1912 = vmatpush.msra.mxu0 %v400
        %1913 = vmatpush.msra.mxu0 %v396
        %1914 = vmatpush.msra.mxu0 %v392
        %1915 = vmatpush.msra.mxu0 %v388
        %1916 = vmatpush.msra.mxu0 %v384
        %1917 = vmatpush.msra.mxu0 %v380
        %1918 = vmatmul.f32.gmra.mxu0 %v1821
        %v1919 = vpop.f32.mrf.mxu0
        %v1920 = vadd.f32 %v679, %v1919
        %1921 = vdwg.mxu0
        %1922 = vmatpush.msra.mxu0 %v504
        %1923 = vmatpush.msra.mxu0 %v500
        %1924 = vmatpush.msra.mxu0 %v496
        %1925 = vmatpush.msra.mxu0 %v492
        %1926 = vmatpush.msra.mxu0 %v488
        %1927 = vmatpush.msra.mxu0 %v484
        %1928 = vmatpush.msra.mxu0 %v480
        %1929 = vmatpush.msra.mxu0 %v476
        %1930 = vmatpush.msra.mxu0 %v472
        %1931 = vmatpush.msra.mxu0 %v468
        %1932 = vmatpush.msra.mxu0 %v464
        %1933 = vmatpush.msra.mxu0 %v460
        %1934 = vmatpush.msra.mxu0 %v456
        %1935 = vmatpush.msra.mxu0 %v452
        %1936 = vmatpush.msra.mxu0 %v448
        %1937 = vmatpush.msra.mxu0 %v444
        %1938 = vmatmul.f32.gmra.mxu0 %v1626
        %v1939 = vpop.f32.mrf.mxu0
        %v1940 = vadd.f32 %v1920, %v1939
        %1941 = vdwg.mxu0
        %1942 = vmatpush.msra.mxu0 %v441
        %1943 = vmatpush.msra.mxu0 %v437
        %1944 = vmatpush.msra.mxu0 %v433
        %1945 = vmatpush.msra.mxu0 %v429
        %1946 = vmatpush.msra.mxu0 %v425
        %1947 = vmatpush.msra.mxu0 %v421
        %1948 = vmatpush.msra.mxu0 %v417
        %1949 = vmatpush.msra.mxu0 %v413
        %1950 = vmatpush.msra.mxu0 %v409
        %1951 = vmatpush.msra.mxu0 %v405
        %1952 = vmatpush.msra.mxu0 %v401
        %1953 = vmatpush.msra.mxu0 %v397
        %1954 = vmatpush.msra.mxu0 %v393
        %1955 = vmatpush.msra.mxu0 %v389
        %1956 = vmatpush.msra.mxu0 %v385
        %1957 = vmatpush.msra.mxu0 %v381
        %1958 = vmatmul.f32.gmra.mxu0 %v1821
        %v1959 = vpop.f32.mrf.mxu0
        %v1960 = vadd.f32 %v680, %v1959
        %1961 = vdwg.mxu0
        %1962 = vmatpush.msra.mxu0 %v505
        %1963 = vmatpush.msra.mxu0 %v501
        %1964 = vmatpush.msra.mxu0 %v497
        %1965 = vmatpush.msra.mxu0 %v493
        %1966 = vmatpush.msra.mxu0 %v489
        %1967 = vmatpush.msra.mxu0 %v485
        %1968 = vmatpush.msra.mxu0 %v481
        %1969 = vmatpush.msra.mxu0 %v477
        %1970 = vmatpush.msra.mxu0 %v473
        %1971 = vmatpush.msra.mxu0 %v469
        %1972 = vmatpush.msra.mxu0 %v465
        %1973 = vmatpush.msra.mxu0 %v461
        %1974 = vmatpush.msra.mxu0 %v457
        %1975 = vmatpush.msra.mxu0 %v453
        %1976 = vmatpush.msra.mxu0 %v449
        %1977 = vmatpush.msra.mxu0 %v445
        %1978 = vmatmul.f32.gmra.mxu0 %v1626
        %v1979 = vpop.f32.mrf.mxu0
        %v1980 = vadd.f32 %v1960, %v1979
        %1981 = vdwg.mxu0
        %v1982 = vsub.f32 0.0, %v1860
        %v1983 = vmul.f32 %v1982, 1.442695
        %v1984 = vpow.pop %v1983
        %v1985 = vadd.f32 %v1984, 1.0
        %v1986 = vrcp.pop %v1985
        %v1987 = vsub.f32 0.0, %v1900
        %v1988 = vmul.f32 %v1987, 1.442695
        %v1989 = vpow.pop %v1988
        %v1990 = vadd.f32 %v1989, 1.0
        %v1991 = vrcp.pop %v1990
        %v1992 = vtanh.pop %v1940
        %v1993 = vsub.f32 0.0, %v1980
        %v1994 = vmul.f32 %v1993, 1.442695
        %v1995 = vpow.pop %v1994
        %v1996 = vadd.f32 %v1995, 1.0
        %v1997 = vrcp.pop %v1996
        %v1998 = vmul.f32 %v1991, %v1624
        %v1999 = vmul.f32 %v1986, %v1992
        %v2000 = vadd.f32 %v1998, %v1999
        %v2001 = vtanh.pop %v2000
        %v2002 = vmul.f32 %v1997, %v2001
        %s2003 = scalar_lea.vmem %s358, 24
        %v2004 = vld [vmem:[%s2003] sm:$0xff]
        %2005 = vmatpush.msra.mxu0 %v566
        %2006 = vmatpush.msra.mxu0 %v562
        %2007 = vmatpush.msra.mxu0 %v558
        %2008 = vmatpush.msra.mxu0 %v554
        %2009 = vmatpush.msra.mxu0 %v550
        %2010 = vmatpush.msra.mxu0 %v546
        %2011 = vmatpush.msra.mxu0 %v542
        %2012 = vmatpush.msra.mxu0 %v538
        %2013 = vmatpush.msra.mxu0 %v534
        %2014 = vmatpush.msra.mxu0 %v530
        %2015 = vmatpush.msra.mxu0 %v526
        %2016 = vmatpush.msra.mxu0 %v522
        %2017 = vmatpush.msra.mxu0 %v518
        %2018 = vmatpush.msra.mxu0 %v514
        %2019 = vmatpush.msra.mxu0 %v510
        %2020 = vmatpush.msra.mxu0 %v506
        %2021 = vmatmul.f32.gmra.mxu0 %v2004
        %v2022 = vpop.f32.mrf.mxu0
        %v2023 = vadd.f32 %v868, %v2022
        %2024 = vdwg.mxu0
        %2025 = vmatpush.msra.mxu0 %v630
        %2026 = vmatpush.msra.mxu0 %v626
        %2027 = vmatpush.msra.mxu0 %v622
        %2028 = vmatpush.msra.mxu0 %v618
        %2029 = vmatpush.msra.mxu0 %v614
        %2030 = vmatpush.msra.mxu0 %v610
        %2031 = vmatpush.msra.mxu0 %v606
        %2032 = vmatpush.msra.mxu0 %v602
        %2033 = vmatpush.msra.mxu0 %v598
        %2034 = vmatpush.msra.mxu0 %v594
        %2035 = vmatpush.msra.mxu0 %v590
        %2036 = vmatpush.msra.mxu0 %v586
        %2037 = vmatpush.msra.mxu0 %v582
        %2038 = vmatpush.msra.mxu0 %v578
        %2039 = vmatpush.msra.mxu0 %v574
        %2040 = vmatpush.msra.mxu0 %v570
        %2041 = vmatmul.f32.gmra.mxu0 %v1809
        %v2042 = vpop.f32.mrf.mxu0
        %v2043 = vadd.f32 %v2023, %v2042
        %2044 = vdwg.mxu0
        %2045 = vmatpush.msra.mxu0 %v567
        %2046 = vmatpush.msra.mxu0 %v563
        %2047 = vmatpush.msra.mxu0 %v559
        %2048 = vmatpush.msra.mxu0 %v555
        %2049 = vmatpush.msra.mxu0 %v551
        %2050 = vmatpush.msra.mxu0 %v547
        %2051 = vmatpush.msra.mxu0 %v543
        %2052 = vmatpush.msra.mxu0 %v539
        %2053 = vmatpush.msra.mxu0 %v535
        %2054 = vmatpush.msra.mxu0 %v531
        %2055 = vmatpush.msra.mxu0 %v527
        %2056 = vmatpush.msra.mxu0 %v523
        %2057 = vmatpush.msra.mxu0 %v519
        %2058 = vmatpush.msra.mxu0 %v515
        %2059 = vmatpush.msra.mxu0 %v511
        %2060 = vmatpush.msra.mxu0 %v507
        %2061 = vmatmul.f32.gmra.mxu0 %v2004
        %v2062 = vpop.f32.mrf.mxu0
        %v2063 = vadd.f32 %v869, %v2062
        %2064 = vdwg.mxu0
        %2065 = vmatpush.msra.mxu0 %v631
        %2066 = vmatpush.msra.mxu0 %v627
        %2067 = vmatpush.msra.mxu0 %v623
        %2068 = vmatpush.msra.mxu0 %v619
        %2069 = vmatpush.msra.mxu0 %v615
        %2070 = vmatpush.msra.mxu0 %v611
        %2071 = vmatpush.msra.mxu0 %v607
        %2072 = vmatpush.msra.mxu0 %v603
        %2073 = vmatpush.msra.mxu0 %v599
        %2074 = vmatpush.msra.mxu0 %v595
        %2075 = vmatpush.msra.mxu0 %v591
        %2076 = vmatpush.msra.mxu0 %v587
        %2077 = vmatpush.msra.mxu0 %v583
        %2078 = vmatpush.msra.mxu0 %v579
        %2079 = vmatpush.msra.mxu0 %v575
        %2080 = vmatpush.msra.mxu0 %v571
        %2081 = vmatmul.f32.gmra.mxu0 %v1809
        %v2082 = vpop.f32.mrf.mxu0
        %v2083 = vadd.f32 %v2063, %v2082
        %2084 = vdwg.mxu0
        %2085 = vmatpush.msra.mxu0 %v568
        %2086 = vmatpush.msra.mxu0 %v564
        %2087 = vmatpush.msra.mxu0 %v560
        %2088 = vmatpush.msra.mxu0 %v556
        %2089 = vmatpush.msra.mxu0 %v552
        %2090 = vmatpush.msra.mxu0 %v548
        %2091 = vmatpush.msra.mxu0 %v544
        %2092 = vmatpush.msra.mxu0 %v540
        %2093 = vmatpush.msra.mxu0 %v536
        %2094 = vmatpush.msra.mxu0 %v532
        %2095 = vmatpush.msra.mxu0 %v528
        %2096 = vmatpush.msra.mxu0 %v524
        %2097 = vmatpush.msra.mxu0 %v520
        %2098 = vmatpush.msra.mxu0 %v516
        %2099 = vmatpush.msra.mxu0 %v512
        %2100 = vmatpush.msra.mxu0 %v508
        %2101 = vmatmul.f32.gmra.mxu0 %v2004
        %v2102 = vpop.f32.mrf.mxu0
        %v2103 = vadd.f32 %v870, %v2102
        %2104 = vdwg.mxu0
        %2105 = vmatpush.msra.mxu0 %v632
        %2106 = vmatpush.msra.mxu0 %v628
        %2107 = vmatpush.msra.mxu0 %v624
        %2108 = vmatpush.msra.mxu0 %v620
        %2109 = vmatpush.msra.mxu0 %v616
        %2110 = vmatpush.msra.mxu0 %v612
        %2111 = vmatpush.msra.mxu0 %v608
        %2112 = vmatpush.msra.mxu0 %v604
        %2113 = vmatpush.msra.mxu0 %v600
        %2114 = vmatpush.msra.mxu0 %v596
        %2115 = vmatpush.msra.mxu0 %v592
        %2116 = vmatpush.msra.mxu0 %v588
        %2117 = vmatpush.msra.mxu0 %v584
        %2118 = vmatpush.msra.mxu0 %v580
        %2119 = vmatpush.msra.mxu0 %v576
        %2120 = vmatpush.msra.mxu0 %v572
        %2121 = vmatmul.f32.gmra.mxu0 %v1809
        %v2122 = vpop.f32.mrf.mxu0
        %v2123 = vadd.f32 %v2103, %v2122
        %2124 = vdwg.mxu0
        %2125 = vmatpush.msra.mxu0 %v569
        %2126 = vmatpush.msra.mxu0 %v565
        %2127 = vmatpush.msra.mxu0 %v561
        %2128 = vmatpush.msra.mxu0 %v557
        %2129 = vmatpush.msra.mxu0 %v553
        %2130 = vmatpush.msra.mxu0 %v549
        %2131 = vmatpush.msra.mxu0 %v545
        %2132 = vmatpush.msra.mxu0 %v541
        %2133 = vmatpush.msra.mxu0 %v537
        %2134 = vmatpush.msra.mxu0 %v533
        %2135 = vmatpush.msra.mxu0 %v529
        %2136 = vmatpush.msra.mxu0 %v525
        %2137 = vmatpush.msra.mxu0 %v521
        %2138 = vmatpush.msra.mxu0 %v517
        %2139 = vmatpush.msra.mxu0 %v513
        %2140 = vmatpush.msra.mxu0 %v509
        %2141 = vmatmul.f32.gmra.mxu0 %v2004
        %v2142 = vpop.f32.mrf.mxu0
        %v2143 = vadd.f32 %v871, %v2142
        %2144 = vdwg.mxu0
        %2145 = vmatpush.msra.mxu0 %v633
        %2146 = vmatpush.msra.mxu0 %v629
        %2147 = vmatpush.msra.mxu0 %v625
        %2148 = vmatpush.msra.mxu0 %v621
        %2149 = vmatpush.msra.mxu0 %v617
        %2150 = vmatpush.msra.mxu0 %v613
        %2151 = vmatpush.msra.mxu0 %v609
        %2152 = vmatpush.msra.mxu0 %v605
        %2153 = vmatpush.msra.mxu0 %v601
        %2154 = vmatpush.msra.mxu0 %v597
        %2155 = vmatpush.msra.mxu0 %v593
        %2156 = vmatpush.msra.mxu0 %v589
        %2157 = vmatpush.msra.mxu0 %v585
        %2158 = vmatpush.msra.mxu0 %v581
        %2159 = vmatpush.msra.mxu0 %v577
        %2160 = vmatpush.msra.mxu0 %v573
        %2161 = vmatmul.f32.gmra.mxu0 %v1809
        %v2162 = vpop.f32.mrf.mxu0
        %v2163 = vadd.f32 %v2143, %v2162
        %2164 = vdwg.mxu0
        %v2165 = vsub.f32 0.0, %v2043
        %v2166 = vmul.f32 %v2165, 1.442695
        %v2167 = vpow.pop %v2166
        %v2168 = vadd.f32 %v2167, 1.0
        %v2169 = vrcp.pop %v2168
        %v2170 = vsub.f32 0.0, %v2083
        %v2171 = vmul.f32 %v2170, 1.442695
        %v2172 = vpow.pop %v2171
        %v2173 = vadd.f32 %v2172, 1.0
        %v2174 = vrcp.pop %v2173
        %v2175 = vtanh.pop %v2123
        %v2176 = vsub.f32 0.0, %v2163
        %v2177 = vmul.f32 %v2176, 1.442695
        %v2178 = vpow.pop %v2177
        %v2179 = vadd.f32 %v2178, 1.0
        %v2180 = vrcp.pop %v2179
        %v2181 = vmul.f32 %v2174, %v1807
        %v2182 = vmul.f32 %v2169, %v2175
        %v2183 = vadd.f32 %v2181, %v2182
        %v2184 = vtanh.pop %v2183
        %v2185 = vmul.f32 %v2180, %v2184
        %s2186 = sadd.s32 %s1057, 4
        %v2187 = vstv %s2186
        %vm2188 = vcmp.eq.s32.totalorder %v674, %v2187
        %v2189 = vsel %vm2188, 1, 0
        %2190 = vset.pattern.permute.xlu0 0
        %2191 = vperm.xlu0 %2190, %v2189
        %v2192 = vpop.permute.xlu0 %2191
        %vm2193 = vcmp.eq.s32.totalorder %v2192, 1
        %v2194 = vsel %vm2193, %v2002, %v1818
        %v2195 = vsel %vm2193, %v2185, %v1819
        %s2196 = scalar_lea.vmem %s352, 32
        %v2197 = vld [vmem:[%s2196] sm:$0xff]
        %2198 = vmatpush.msra.mxu0 %v438
        %2199 = vmatpush.msra.mxu0 %v434
        %2200 = vmatpush.msra.mxu0 %v430
        %2201 = vmatpush.msra.mxu0 %v426
        %2202 = vmatpush.msra.mxu0 %v422
        %2203 = vmatpush.msra.mxu0 %v418
        %2204 = vmatpush.msra.mxu0 %v414
        %2205 = vmatpush.msra.mxu0 %v410
        %2206 = vmatpush.msra.mxu0 %v406
        %2207 = vmatpush.msra.mxu0 %v402
        %2208 = vmatpush.msra.mxu0 %v398
        %2209 = vmatpush.msra.mxu0 %v394
        %2210 = vmatpush.msra.mxu0 %v390
        %2211 = vmatpush.msra.mxu0 %v386
        %2212 = vmatpush.msra.mxu0 %v382
        %2213 = vmatpush.msra.mxu0 %v378
        %2214 = vmatmul.f32.gmra.mxu0 %v2197
        %v2215 = vpop.f32.mrf.mxu0
        %v2216 = vadd.f32 %v677, %v2215
        %2217 = vdwg.mxu0
        %2218 = vmatpush.msra.mxu0 %v502
        %2219 = vmatpush.msra.mxu0 %v498
        %2220 = vmatpush.msra.mxu0 %v494
        %2221 = vmatpush.msra.mxu0 %v490
        %2222 = vmatpush.msra.mxu0 %v486
        %2223 = vmatpush.msra.mxu0 %v482
        %2224 = vmatpush.msra.mxu0 %v478
        %2225 = vmatpush.msra.mxu0 %v474
        %2226 = vmatpush.msra.mxu0 %v470
        %2227 = vmatpush.msra.mxu0 %v466
        %2228 = vmatpush.msra.mxu0 %v462
        %2229 = vmatpush.msra.mxu0 %v458
        %2230 = vmatpush.msra.mxu0 %v454
        %2231 = vmatpush.msra.mxu0 %v450
        %2232 = vmatpush.msra.mxu0 %v446
        %2233 = vmatpush.msra.mxu0 %v442
        %2234 = vmatmul.f32.gmra.mxu0 %v2002
        %v2235 = vpop.f32.mrf.mxu0
        %v2236 = vadd.f32 %v2216, %v2235
        %2237 = vdwg.mxu0
        %2238 = vmatpush.msra.mxu0 %v439
        %2239 = vmatpush.msra.mxu0 %v435
        %2240 = vmatpush.msra.mxu0 %v431
        %2241 = vmatpush.msra.mxu0 %v427
        %2242 = vmatpush.msra.mxu0 %v423
        %2243 = vmatpush.msra.mxu0 %v419
        %2244 = vmatpush.msra.mxu0 %v415
        %2245 = vmatpush.msra.mxu0 %v411
        %2246 = vmatpush.msra.mxu0 %v407
        %2247 = vmatpush.msra.mxu0 %v403
        %2248 = vmatpush.msra.mxu0 %v399
        %2249 = vmatpush.msra.mxu0 %v395
        %2250 = vmatpush.msra.mxu0 %v391
        %2251 = vmatpush.msra.mxu0 %v387
        %2252 = vmatpush.msra.mxu0 %v383
        %2253 = vmatpush.msra.mxu0 %v379
        %2254 = vmatmul.f32.gmra.mxu0 %v2197
        %v2255 = vpop.f32.mrf.mxu0
        %v2256 = vadd.f32 %v678, %v2255
        %2257 = vdwg.mxu0
        %2258 = vmatpush.msra.mxu0 %v503
        %2259 = vmatpush.msra.mxu0 %v499
        %2260 = vmatpush.msra.mxu0 %v495
        %2261 = vmatpush.msra.mxu0 %v491
        %2262 = vmatpush.msra.mxu0 %v487
        %2263 = vmatpush.msra.mxu0 %v483
        %2264 = vmatpush.msra.mxu0 %v479
        %2265 = vmatpush.msra.mxu0 %v475
        %2266 = vmatpush.msra.mxu0 %v471
        %2267 = vmatpush.msra.mxu0 %v467
        %2268 = vmatpush.msra.mxu0 %v463
        %2269 = vmatpush.msra.mxu0 %v459
        %2270 = vmatpush.msra.mxu0 %v455
        %2271 = vmatpush.msra.mxu0 %v451
        %2272 = vmatpush.msra.mxu0 %v447
        %2273 = vmatpush.msra.mxu0 %v443
        %2274 = vmatmul.f32.gmra.mxu0 %v2002
        %v2275 = vpop.f32.mrf.mxu0
        %v2276 = vadd.f32 %v2256, %v2275
        %2277 = vdwg.mxu0
        %2278 = vmatpush.msra.mxu0 %v440
        %2279 = vmatpush.msra.mxu0 %v436
        %2280 = vmatpush.msra.mxu0 %v432
        %2281 = vmatpush.msra.mxu0 %v428
        %2282 = vmatpush.msra.mxu0 %v424
        %2283 = vmatpush.msra.mxu0 %v420
        %2284 = vmatpush.msra.mxu0 %v416
        %2285 = vmatpush.msra.mxu0 %v412
        %2286 = vmatpush.msra.mxu0 %v408
        %2287 = vmatpush.msra.mxu0 %v404
        %2288 = vmatpush.msra.mxu0 %v400
        %2289 = vmatpush.msra.mxu0 %v396
        %2290 = vmatpush.msra.mxu0 %v392
        %2291 = vmatpush.msra.mxu0 %v388
        %2292 = vmatpush.msra.mxu0 %v384
        %2293 = vmatpush.msra.mxu0 %v380
        %2294 = vmatmul.f32.gmra.mxu0 %v2197
        %v2295 = vpop.f32.mrf.mxu0
        %v2296 = vadd.f32 %v679, %v2295
        %2297 = vdwg.mxu0
        %2298 = vmatpush.msra.mxu0 %v504
        %2299 = vmatpush.msra.mxu0 %v500
        %2300 = vmatpush.msra.mxu0 %v496
        %2301 = vmatpush.msra.mxu0 %v492
        %2302 = vmatpush.msra.mxu0 %v488
        %2303 = vmatpush.msra.mxu0 %v484
        %2304 = vmatpush.msra.mxu0 %v480
        %2305 = vmatpush.msra.mxu0 %v476
        %2306 = vmatpush.msra.mxu0 %v472
        %2307 = vmatpush.msra.mxu0 %v468
        %2308 = vmatpush.msra.mxu0 %v464
        %2309 = vmatpush.msra.mxu0 %v460
        %2310 = vmatpush.msra.mxu0 %v456
        %2311 = vmatpush.msra.mxu0 %v452
        %2312 = vmatpush.msra.mxu0 %v448
        %2313 = vmatpush.msra.mxu0 %v444
        %2314 = vmatmul.f32.gmra.mxu0 %v2002
        %v2315 = vpop.f32.mrf.mxu0
        %v2316 = vadd.f32 %v2296, %v2315
        %2317 = vdwg.mxu0
        %2318 = vmatpush.msra.mxu0 %v441
        %2319 = vmatpush.msra.mxu0 %v437
        %2320 = vmatpush.msra.mxu0 %v433
        %2321 = vmatpush.msra.mxu0 %v429
        %2322 = vmatpush.msra.mxu0 %v425
        %2323 = vmatpush.msra.mxu0 %v421
        %2324 = vmatpush.msra.mxu0 %v417
        %2325 = vmatpush.msra.mxu0 %v413
        %2326 = vmatpush.msra.mxu0 %v409
        %2327 = vmatpush.msra.mxu0 %v405
        %2328 = vmatpush.msra.mxu0 %v401
        %2329 = vmatpush.msra.mxu0 %v397
        %2330 = vmatpush.msra.mxu0 %v393
        %2331 = vmatpush.msra.mxu0 %v389
        %2332 = vmatpush.msra.mxu0 %v385
        %2333 = vmatpush.msra.mxu0 %v381
        %2334 = vmatmul.f32.gmra.mxu0 %v2197
        %v2335 = vpop.f32.mrf.mxu0
        %v2336 = vadd.f32 %v680, %v2335
        %2337 = vdwg.mxu0
        %2338 = vmatpush.msra.mxu0 %v505
        %2339 = vmatpush.msra.mxu0 %v501
        %2340 = vmatpush.msra.mxu0 %v497
        %2341 = vmatpush.msra.mxu0 %v493
        %2342 = vmatpush.msra.mxu0 %v489
        %2343 = vmatpush.msra.mxu0 %v485
        %2344 = vmatpush.msra.mxu0 %v481
        %2345 = vmatpush.msra.mxu0 %v477
        %2346 = vmatpush.msra.mxu0 %v473
        %2347 = vmatpush.msra.mxu0 %v469
        %2348 = vmatpush.msra.mxu0 %v465
        %2349 = vmatpush.msra.mxu0 %v461
        %2350 = vmatpush.msra.mxu0 %v457
        %2351 = vmatpush.msra.mxu0 %v453
        %2352 = vmatpush.msra.mxu0 %v449
        %2353 = vmatpush.msra.mxu0 %v445
        %2354 = vmatmul.f32.gmra.mxu0 %v2002
        %v2355 = vpop.f32.mrf.mxu0
        %v2356 = vadd.f32 %v2336, %v2355
        %2357 = vdwg.mxu0
        %v2358 = vsub.f32 0.0, %v2236
        %v2359 = vmul.f32 %v2358, 1.442695
        %v2360 = vpow.pop %v2359
        %v2361 = vadd.f32 %v2360, 1.0
        %v2362 = vrcp.pop %v2361
        %v2363 = vsub.f32 0.0, %v2276
        %v2364 = vmul.f32 %v2363, 1.442695
        %v2365 = vpow.pop %v2364
        %v2366 = vadd.f32 %v2365, 1.0
        %v2367 = vrcp.pop %v2366
        %v2368 = vtanh.pop %v2316
        %v2369 = vsub.f32 0.0, %v2356
        %v2370 = vmul.f32 %v2369, 1.442695
        %v2371 = vpow.pop %v2370
        %v2372 = vadd.f32 %v2371, 1.0
        %v2373 = vrcp.pop %v2372
        %v2374 = vmul.f32 %v2367, %v2000
        %v2375 = vmul.f32 %v2362, %v2368
        %v2376 = vadd.f32 %v2374, %v2375
        %v2377 = vtanh.pop %v2376
        %v2378 = vmul.f32 %v2373, %v2377
        %s2379 = scalar_lea.vmem %s358, 32
        %v2380 = vld [vmem:[%s2379] sm:$0xff]
        %2381 = vmatpush.msra.mxu0 %v566
        %2382 = vmatpush.msra.mxu0 %v562
        %2383 = vmatpush.msra.mxu0 %v558
        %2384 = vmatpush.msra.mxu0 %v554
        %2385 = vmatpush.msra.mxu0 %v550
        %2386 = vmatpush.msra.mxu0 %v546
        %2387 = vmatpush.msra.mxu0 %v542
        %2388 = vmatpush.msra.mxu0 %v538
        %2389 = vmatpush.msra.mxu0 %v534
        %2390 = vmatpush.msra.mxu0 %v530
        %2391 = vmatpush.msra.mxu0 %v526
        %2392 = vmatpush.msra.mxu0 %v522
        %2393 = vmatpush.msra.mxu0 %v518
        %2394 = vmatpush.msra.mxu0 %v514
        %2395 = vmatpush.msra.mxu0 %v510
        %2396 = vmatpush.msra.mxu0 %v506
        %2397 = vmatmul.f32.gmra.mxu0 %v2380
        %v2398 = vpop.f32.mrf.mxu0
        %v2399 = vadd.f32 %v868, %v2398
        %2400 = vdwg.mxu0
        %2401 = vmatpush.msra.mxu0 %v630
        %2402 = vmatpush.msra.mxu0 %v626
        %2403 = vmatpush.msra.mxu0 %v622
        %2404 = vmatpush.msra.mxu0 %v618
        %2405 = vmatpush.msra.mxu0 %v614
        %2406 = vmatpush.msra.mxu0 %v610
        %2407 = vmatpush.msra.mxu0 %v606
        %2408 = vmatpush.msra.mxu0 %v602
        %2409 = vmatpush.msra.mxu0 %v598
        %2410 = vmatpush.msra.mxu0 %v594
        %2411 = vmatpush.msra.mxu0 %v590
        %2412 = vmatpush.msra.mxu0 %v586
        %2413 = vmatpush.msra.mxu0 %v582
        %2414 = vmatpush.msra.mxu0 %v578
        %2415 = vmatpush.msra.mxu0 %v574
        %2416 = vmatpush.msra.mxu0 %v570
        %2417 = vmatmul.f32.gmra.mxu0 %v2185
        %v2418 = vpop.f32.mrf.mxu0
        %v2419 = vadd.f32 %v2399, %v2418
        %2420 = vdwg.mxu0
        %2421 = vmatpush.msra.mxu0 %v567
        %2422 = vmatpush.msra.mxu0 %v563
        %2423 = vmatpush.msra.mxu0 %v559
        %2424 = vmatpush.msra.mxu0 %v555
        %2425 = vmatpush.msra.mxu0 %v551
        %2426 = vmatpush.msra.mxu0 %v547
        %2427 = vmatpush.msra.mxu0 %v543
        %2428 = vmatpush.msra.mxu0 %v539
        %2429 = vmatpush.msra.mxu0 %v535
        %2430 = vmatpush.msra.mxu0 %v531
        %2431 = vmatpush.msra.mxu0 %v527
        %2432 = vmatpush.msra.mxu0 %v523
        %2433 = vmatpush.msra.mxu0 %v519
        %2434 = vmatpush.msra.mxu0 %v515
        %2435 = vmatpush.msra.mxu0 %v511
        %2436 = vmatpush.msra.mxu0 %v507
        %2437 = vmatmul.f32.gmra.mxu0 %v2380
        %v2438 = vpop.f32.mrf.mxu0
        %v2439 = vadd.f32 %v869, %v2438
        %2440 = vdwg.mxu0
        %2441 = vmatpush.msra.mxu0 %v631
        %2442 = vmatpush.msra.mxu0 %v627
        %2443 = vmatpush.msra.mxu0 %v623
        %2444 = vmatpush.msra.mxu0 %v619
        %2445 = vmatpush.msra.mxu0 %v615
        %2446 = vmatpush.msra.mxu0 %v611
        %2447 = vmatpush.msra.mxu0 %v607
        %2448 = vmatpush.msra.mxu0 %v603
        %2449 = vmatpush.msra.mxu0 %v599
        %2450 = vmatpush.msra.mxu0 %v595
        %2451 = vmatpush.msra.mxu0 %v591
        %2452 = vmatpush.msra.mxu0 %v587
        %2453 = vmatpush.msra.mxu0 %v583
        %2454 = vmatpush.msra.mxu0 %v579
        %2455 = vmatpush.msra.mxu0 %v575
        %2456 = vmatpush.msra.mxu0 %v571
        %2457 = vmatmul.f32.gmra.mxu0 %v2185
        %v2458 = vpop.f32.mrf.mxu0
        %v2459 = vadd.f32 %v2439, %v2458
        %2460 = vdwg.mxu0
        %2461 = vmatpush.msra.mxu0 %v568
        %2462 = vmatpush.msra.mxu0 %v564
        %2463 = vmatpush.msra.mxu0 %v560
        %2464 = vmatpush.msra.mxu0 %v556
        %2465 = vmatpush.msra.mxu0 %v552
        %2466 = vmatpush.msra.mxu0 %v548
        %2467 = vmatpush.msra.mxu0 %v544
        %2468 = vmatpush.msra.mxu0 %v540
        %2469 = vmatpush.msra.mxu0 %v536
        %2470 = vmatpush.msra.mxu0 %v532
        %2471 = vmatpush.msra.mxu0 %v528
        %2472 = vmatpush.msra.mxu0 %v524
        %2473 = vmatpush.msra.mxu0 %v520
        %2474 = vmatpush.msra.mxu0 %v516
        %2475 = vmatpush.msra.mxu0 %v512
        %2476 = vmatpush.msra.mxu0 %v508
        %2477 = vmatmul.f32.gmra.mxu0 %v2380
        %v2478 = vpop.f32.mrf.mxu0
        %v2479 = vadd.f32 %v870, %v2478
        %2480 = vdwg.mxu0
        %2481 = vmatpush.msra.mxu0 %v632
        %2482 = vmatpush.msra.mxu0 %v628
        %2483 = vmatpush.msra.mxu0 %v624
        %2484 = vmatpush.msra.mxu0 %v620
        %2485 = vmatpush.msra.mxu0 %v616
        %2486 = vmatpush.msra.mxu0 %v612
        %2487 = vmatpush.msra.mxu0 %v608
        %2488 = vmatpush.msra.mxu0 %v604
        %2489 = vmatpush.msra.mxu0 %v600
        %2490 = vmatpush.msra.mxu0 %v596
        %2491 = vmatpush.msra.mxu0 %v592
        %2492 = vmatpush.msra.mxu0 %v588
        %2493 = vmatpush.msra.mxu0 %v584
        %2494 = vmatpush.msra.mxu0 %v580
        %2495 = vmatpush.msra.mxu0 %v576
        %2496 = vmatpush.msra.mxu0 %v572
        %2497 = vmatmul.f32.gmra.mxu0 %v2185
        %v2498 = vpop.f32.mrf.mxu0
        %v2499 = vadd.f32 %v2479, %v2498
        %2500 = vdwg.mxu0
        %2501 = vmatpush.msra.mxu0 %v569
        %2502 = vmatpush.msra.mxu0 %v565
        %2503 = vmatpush.msra.mxu0 %v561
        %2504 = vmatpush.msra.mxu0 %v557
        %2505 = vmatpush.msra.mxu0 %v553
        %2506 = vmatpush.msra.mxu0 %v549
        %2507 = vmatpush.msra.mxu0 %v545
        %2508 = vmatpush.msra.mxu0 %v541
        %2509 = vmatpush.msra.mxu0 %v537
        %2510 = vmatpush.msra.mxu0 %v533
        %2511 = vmatpush.msra.mxu0 %v529
        %2512 = vmatpush.msra.mxu0 %v525
        %2513 = vmatpush.msra.mxu0 %v521
        %2514 = vmatpush.msra.mxu0 %v517
        %2515 = vmatpush.msra.mxu0 %v513
        %2516 = vmatpush.msra.mxu0 %v509
        %2517 = vmatmul.f32.gmra.mxu0 %v2380
        %v2518 = vpop.f32.mrf.mxu0
        %v2519 = vadd.f32 %v871, %v2518
        %2520 = vdwg.mxu0
        %2521 = vmatpush.msra.mxu0 %v633
        %2522 = vmatpush.msra.mxu0 %v629
        %2523 = vmatpush.msra.mxu0 %v625
        %2524 = vmatpush.msra.mxu0 %v621
        %2525 = vmatpush.msra.mxu0 %v617
        %2526 = vmatpush.msra.mxu0 %v613
        %2527 = vmatpush.msra.mxu0 %v609
        %2528 = vmatpush.msra.mxu0 %v605
        %2529 = vmatpush.msra.mxu0 %v601
        %2530 = vmatpush.msra.mxu0 %v597
        %2531 = vmatpush.msra.mxu0 %v593
        %2532 = vmatpush.msra.mxu0 %v589
        %2533 = vmatpush.msra.mxu0 %v585
        %2534 = vmatpush.msra.mxu0 %v581
        %2535 = vmatpush.msra.mxu0 %v577
        %2536 = vmatpush.msra.mxu0 %v573
        %2537 = vmatmul.f32.gmra.mxu0 %v2185
        %v2538 = vpop.f32.mrf.mxu0
        %v2539 = vadd.f32 %v2519, %v2538
        %2540 = vdwg.mxu0
        %v2541 = vsub.f32 0.0, %v2419
        %v2542 = vmul.f32 %v2541, 1.442695
        %v2543 = vpow.pop %v2542
        %v2544 = vadd.f32 %v2543, 1.0
        %v2545 = vrcp.pop %v2544
        %v2546 = vsub.f32 0.0, %v2459
        %v2547 = vmul.f32 %v2546, 1.442695
        %v2548 = vpow.pop %v2547
        %v2549 = vadd.f32 %v2548, 1.0
        %v2550 = vrcp.pop %v2549
        %v2551 = vtanh.pop %v2499
        %v2552 = vsub.f32 0.0, %v2539
        %v2553 = vmul.f32 %v2552, 1.442695
        %v2554 = vpow.pop %v2553
        %v2555 = vadd.f32 %v2554, 1.0
        %v2556 = vrcp.pop %v2555
        %v2557 = vmul.f32 %v2550, %v2183
        %v2558 = vmul.f32 %v2545, %v2551
        %v2559 = vadd.f32 %v2557, %v2558
        %v2560 = vtanh.pop %v2559
        %v2561 = vmul.f32 %v2556, %v2560
        %s2562 = sadd.s32 %s1057, 5
        %v2563 = vstv %s2562
        %vm2564 = vcmp.eq.s32.totalorder %v674, %v2563
        %v2565 = vsel %vm2564, 1, 0
        %2566 = vset.pattern.permute.xlu0 0
        %2567 = vperm.xlu0 %2566, %v2565
        %v2568 = vpop.permute.xlu0 %2567
        %vm2569 = vcmp.eq.s32.totalorder %v2568, 1
        %v2570 = vsel %vm2569, %v2378, %v2194
        %v2571 = vsel %vm2569, %v2561, %v2195
        %s2572 = scalar_lea.vmem %s352, 40
        %v2573 = vld [vmem:[%s2572] sm:$0xff]
        %2574 = vmatpush.msra.mxu0 %v438
        %2575 = vmatpush.msra.mxu0 %v434
        %2576 = vmatpush.msra.mxu0 %v430
        %2577 = vmatpush.msra.mxu0 %v426
        %2578 = vmatpush.msra.mxu0 %v422
        %2579 = vmatpush.msra.mxu0 %v418
        %2580 = vmatpush.msra.mxu0 %v414
        %2581 = vmatpush.msra.mxu0 %v410
        %2582 = vmatpush.msra.mxu0 %v406
        %2583 = vmatpush.msra.mxu0 %v402
        %2584 = vmatpush.msra.mxu0 %v398
        %2585 = vmatpush.msra.mxu0 %v394
        %2586 = vmatpush.msra.mxu0 %v390
        %2587 = vmatpush.msra.mxu0 %v386
        %2588 = vmatpush.msra.mxu0 %v382
        %2589 = vmatpush.msra.mxu0 %v378
        %2590 = vmatmul.f32.gmra.mxu0 %v2573
        %v2591 = vpop.f32.mrf.mxu0
        %v2592 = vadd.f32 %v677, %v2591
        %2593 = vdwg.mxu0
        %2594 = vmatpush.msra.mxu0 %v502
        %2595 = vmatpush.msra.mxu0 %v498
        %2596 = vmatpush.msra.mxu0 %v494
        %2597 = vmatpush.msra.mxu0 %v490
        %2598 = vmatpush.msra.mxu0 %v486
        %2599 = vmatpush.msra.mxu0 %v482
        %2600 = vmatpush.msra.mxu0 %v478
        %2601 = vmatpush.msra.mxu0 %v474
        %2602 = vmatpush.msra.mxu0 %v470
        %2603 = vmatpush.msra.mxu0 %v466
        %2604 = vmatpush.msra.mxu0 %v462
        %2605 = vmatpush.msra.mxu0 %v458
        %2606 = vmatpush.msra.mxu0 %v454
        %2607 = vmatpush.msra.mxu0 %v450
        %2608 = vmatpush.msra.mxu0 %v446
        %2609 = vmatpush.msra.mxu0 %v442
        %2610 = vmatmul.f32.gmra.mxu0 %v2378
        %v2611 = vpop.f32.mrf.mxu0
        %v2612 = vadd.f32 %v2592, %v2611
        %2613 = vdwg.mxu0
        %2614 = vmatpush.msra.mxu0 %v439
        %2615 = vmatpush.msra.mxu0 %v435
        %2616 = vmatpush.msra.mxu0 %v431
        %2617 = vmatpush.msra.mxu0 %v427
        %2618 = vmatpush.msra.mxu0 %v423
        %2619 = vmatpush.msra.mxu0 %v419
        %2620 = vmatpush.msra.mxu0 %v415
        %2621 = vmatpush.msra.mxu0 %v411
        %2622 = vmatpush.msra.mxu0 %v407
        %2623 = vmatpush.msra.mxu0 %v403
        %2624 = vmatpush.msra.mxu0 %v399
        %2625 = vmatpush.msra.mxu0 %v395
        %2626 = vmatpush.msra.mxu0 %v391
        %2627 = vmatpush.msra.mxu0 %v387
        %2628 = vmatpush.msra.mxu0 %v383
        %2629 = vmatpush.msra.mxu0 %v379
        %2630 = vmatmul.f32.gmra.mxu0 %v2573
        %v2631 = vpop.f32.mrf.mxu0
        %v2632 = vadd.f32 %v678, %v2631
        %2633 = vdwg.mxu0
        %2634 = vmatpush.msra.mxu0 %v503
        %2635 = vmatpush.msra.mxu0 %v499
        %2636 = vmatpush.msra.mxu0 %v495
        %2637 = vmatpush.msra.mxu0 %v491
        %2638 = vmatpush.msra.mxu0 %v487
        %2639 = vmatpush.msra.mxu0 %v483
        %2640 = vmatpush.msra.mxu0 %v479
        %2641 = vmatpush.msra.mxu0 %v475
        %2642 = vmatpush.msra.mxu0 %v471
        %2643 = vmatpush.msra.mxu0 %v467
        %2644 = vmatpush.msra.mxu0 %v463
        %2645 = vmatpush.msra.mxu0 %v459
        %2646 = vmatpush.msra.mxu0 %v455
        %2647 = vmatpush.msra.mxu0 %v451
        %2648 = vmatpush.msra.mxu0 %v447
        %2649 = vmatpush.msra.mxu0 %v443
        %2650 = vmatmul.f32.gmra.mxu0 %v2378
        %v2651 = vpop.f32.mrf.mxu0
        %v2652 = vadd.f32 %v2632, %v2651
        %2653 = vdwg.mxu0
        %2654 = vmatpush.msra.mxu0 %v440
        %2655 = vmatpush.msra.mxu0 %v436
        %2656 = vmatpush.msra.mxu0 %v432
        %2657 = vmatpush.msra.mxu0 %v428
        %2658 = vmatpush.msra.mxu0 %v424
        %2659 = vmatpush.msra.mxu0 %v420
        %2660 = vmatpush.msra.mxu0 %v416
        %2661 = vmatpush.msra.mxu0 %v412
        %2662 = vmatpush.msra.mxu0 %v408
        %2663 = vmatpush.msra.mxu0 %v404
        %2664 = vmatpush.msra.mxu0 %v400
        %2665 = vmatpush.msra.mxu0 %v396
        %2666 = vmatpush.msra.mxu0 %v392
        %2667 = vmatpush.msra.mxu0 %v388
        %2668 = vmatpush.msra.mxu0 %v384
        %2669 = vmatpush.msra.mxu0 %v380
        %2670 = vmatmul.f32.gmra.mxu0 %v2573
        %v2671 = vpop.f32.mrf.mxu0
        %v2672 = vadd.f32 %v679, %v2671
        %2673 = vdwg.mxu0
        %2674 = vmatpush.msra.mxu0 %v504
        %2675 = vmatpush.msra.mxu0 %v500
        %2676 = vmatpush.msra.mxu0 %v496
        %2677 = vmatpush.msra.mxu0 %v492
        %2678 = vmatpush.msra.mxu0 %v488
        %2679 = vmatpush.msra.mxu0 %v484
        %2680 = vmatpush.msra.mxu0 %v480
        %2681 = vmatpush.msra.mxu0 %v476
        %2682 = vmatpush.msra.mxu0 %v472
        %2683 = vmatpush.msra.mxu0 %v468
        %2684 = vmatpush.msra.mxu0 %v464
        %2685 = vmatpush.msra.mxu0 %v460
        %2686 = vmatpush.msra.mxu0 %v456
        %2687 = vmatpush.msra.mxu0 %v452
        %2688 = vmatpush.msra.mxu0 %v448
        %2689 = vmatpush.msra.mxu0 %v444
        %2690 = vmatmul.f32.gmra.mxu0 %v2378
        %v2691 = vpop.f32.mrf.mxu0
        %v2692 = vadd.f32 %v2672, %v2691
        %2693 = vdwg.mxu0
        %2694 = vmatpush.msra.mxu0 %v441
        %2695 = vmatpush.msra.mxu0 %v437
        %2696 = vmatpush.msra.mxu0 %v433
        %2697 = vmatpush.msra.mxu0 %v429
        %2698 = vmatpush.msra.mxu0 %v425
        %2699 = vmatpush.msra.mxu0 %v421
        %2700 = vmatpush.msra.mxu0 %v417
        %2701 = vmatpush.msra.mxu0 %v413
        %2702 = vmatpush.msra.mxu0 %v409
        %2703 = vmatpush.msra.mxu0 %v405
        %2704 = vmatpush.msra.mxu0 %v401
        %2705 = vmatpush.msra.mxu0 %v397
        %2706 = vmatpush.msra.mxu0 %v393
        %2707 = vmatpush.msra.mxu0 %v389
        %2708 = vmatpush.msra.mxu0 %v385
        %2709 = vmatpush.msra.mxu0 %v381
        %2710 = vmatmul.f32.gmra.mxu0 %v2573
        %v2711 = vpop.f32.mrf.mxu0
        %v2712 = vadd.f32 %v680, %v2711
        %2713 = vdwg.mxu0
        %2714 = vmatpush.msra.mxu0 %v505
        %2715 = vmatpush.msra.mxu0 %v501
        %2716 = vmatpush.msra.mxu0 %v497
        %2717 = vmatpush.msra.mxu0 %v493
        %2718 = vmatpush.msra.mxu0 %v489
        %2719 = vmatpush.msra.mxu0 %v485
        %2720 = vmatpush.msra.mxu0 %v481
        %2721 = vmatpush.msra.mxu0 %v477
        %2722 = vmatpush.msra.mxu0 %v473
        %2723 = vmatpush.msra.mxu0 %v469
        %2724 = vmatpush.msra.mxu0 %v465
        %2725 = vmatpush.msra.mxu0 %v461
        %2726 = vmatpush.msra.mxu0 %v457
        %2727 = vmatpush.msra.mxu0 %v453
        %2728 = vmatpush.msra.mxu0 %v449
        %2729 = vmatpush.msra.mxu0 %v445
        %2730 = vmatmul.f32.gmra.mxu0 %v2378
        %v2731 = vpop.f32.mrf.mxu0
        %v2732 = vadd.f32 %v2712, %v2731
        %2733 = vdwg.mxu0
        %v2734 = vsub.f32 0.0, %v2612
        %v2735 = vmul.f32 %v2734, 1.442695
        %v2736 = vpow.pop %v2735
        %v2737 = vadd.f32 %v2736, 1.0
        %v2738 = vrcp.pop %v2737
        %v2739 = vsub.f32 0.0, %v2652
        %v2740 = vmul.f32 %v2739, 1.442695
        %v2741 = vpow.pop %v2740
        %v2742 = vadd.f32 %v2741, 1.0
        %v2743 = vrcp.pop %v2742
        %v2744 = vtanh.pop %v2692
        %v2745 = vsub.f32 0.0, %v2732
        %v2746 = vmul.f32 %v2745, 1.442695
        %v2747 = vpow.pop %v2746
        %v2748 = vadd.f32 %v2747, 1.0
        %v2749 = vrcp.pop %v2748
        %v2750 = vmul.f32 %v2743, %v2376
        %v2751 = vmul.f32 %v2738, %v2744
        %v2752 = vadd.f32 %v2750, %v2751
        %v2753 = vtanh.pop %v2752
        %v2754 = vmul.f32 %v2749, %v2753
        %s2755 = scalar_lea.vmem %s358, 40
        %v2756 = vld [vmem:[%s2755] sm:$0xff]
        %2757 = vmatpush.msra.mxu0 %v566
        %2758 = vmatpush.msra.mxu0 %v562
        %2759 = vmatpush.msra.mxu0 %v558
        %2760 = vmatpush.msra.mxu0 %v554
        %2761 = vmatpush.msra.mxu0 %v550
        %2762 = vmatpush.msra.mxu0 %v546
        %2763 = vmatpush.msra.mxu0 %v542
        %2764 = vmatpush.msra.mxu0 %v538
        %2765 = vmatpush.msra.mxu0 %v534
        %2766 = vmatpush.msra.mxu0 %v530
        %2767 = vmatpush.msra.mxu0 %v526
        %2768 = vmatpush.msra.mxu0 %v522
        %2769 = vmatpush.msra.mxu0 %v518
        %2770 = vmatpush.msra.mxu0 %v514
        %2771 = vmatpush.msra.mxu0 %v510
        %2772 = vmatpush.msra.mxu0 %v506
        %2773 = vmatmul.f32.gmra.mxu0 %v2756
        %v2774 = vpop.f32.mrf.mxu0
        %v2775 = vadd.f32 %v868, %v2774
        %2776 = vdwg.mxu0
        %2777 = vmatpush.msra.mxu0 %v630
        %2778 = vmatpush.msra.mxu0 %v626
        %2779 = vmatpush.msra.mxu0 %v622
        %2780 = vmatpush.msra.mxu0 %v618
        %2781 = vmatpush.msra.mxu0 %v614
        %2782 = vmatpush.msra.mxu0 %v610
        %2783 = vmatpush.msra.mxu0 %v606
        %2784 = vmatpush.msra.mxu0 %v602
        %2785 = vmatpush.msra.mxu0 %v598
        %2786 = vmatpush.msra.mxu0 %v594
        %2787 = vmatpush.msra.mxu0 %v590
        %2788 = vmatpush.msra.mxu0 %v586
        %2789 = vmatpush.msra.mxu0 %v582
        %2790 = vmatpush.msra.mxu0 %v578
        %2791 = vmatpush.msra.mxu0 %v574
        %2792 = vmatpush.msra.mxu0 %v570
        %2793 = vmatmul.f32.gmra.mxu0 %v2561
        %v2794 = vpop.f32.mrf.mxu0
        %v2795 = vadd.f32 %v2775, %v2794
        %2796 = vdwg.mxu0
        %2797 = vmatpush.msra.mxu0 %v567
        %2798 = vmatpush.msra.mxu0 %v563
        %2799 = vmatpush.msra.mxu0 %v559
        %2800 = vmatpush.msra.mxu0 %v555
        %2801 = vmatpush.msra.mxu0 %v551
        %2802 = vmatpush.msra.mxu0 %v547
        %2803 = vmatpush.msra.mxu0 %v543
        %2804 = vmatpush.msra.mxu0 %v539
        %2805 = vmatpush.msra.mxu0 %v535
        %2806 = vmatpush.msra.mxu0 %v531
        %2807 = vmatpush.msra.mxu0 %v527
        %2808 = vmatpush.msra.mxu0 %v523
        %2809 = vmatpush.msra.mxu0 %v519
        %2810 = vmatpush.msra.mxu0 %v515
        %2811 = vmatpush.msra.mxu0 %v511
        %2812 = vmatpush.msra.mxu0 %v507
        %2813 = vmatmul.f32.gmra.mxu0 %v2756
        %v2814 = vpop.f32.mrf.mxu0
        %v2815 = vadd.f32 %v869, %v2814
        %2816 = vdwg.mxu0
        %2817 = vmatpush.msra.mxu0 %v631
        %2818 = vmatpush.msra.mxu0 %v627
        %2819 = vmatpush.msra.mxu0 %v623
        %2820 = vmatpush.msra.mxu0 %v619
        %2821 = vmatpush.msra.mxu0 %v615
        %2822 = vmatpush.msra.mxu0 %v611
        %2823 = vmatpush.msra.mxu0 %v607
        %2824 = vmatpush.msra.mxu0 %v603
        %2825 = vmatpush.msra.mxu0 %v599
        %2826 = vmatpush.msra.mxu0 %v595
        %2827 = vmatpush.msra.mxu0 %v591
        %2828 = vmatpush.msra.mxu0 %v587
        %2829 = vmatpush.msra.mxu0 %v583
        %2830 = vmatpush.msra.mxu0 %v579
        %2831 = vmatpush.msra.mxu0 %v575
        %2832 = vmatpush.msra.mxu0 %v571
        %2833 = vmatmul.f32.gmra.mxu0 %v2561
        %v2834 = vpop.f32.mrf.mxu0
        %v2835 = vadd.f32 %v2815, %v2834
        %2836 = vdwg.mxu0
        %2837 = vmatpush.msra.mxu0 %v568
        %2838 = vmatpush.msra.mxu0 %v564
        %2839 = vmatpush.msra.mxu0 %v560
        %2840 = vmatpush.msra.mxu0 %v556
        %2841 = vmatpush.msra.mxu0 %v552
        %2842 = vmatpush.msra.mxu0 %v548
        %2843 = vmatpush.msra.mxu0 %v544
        %2844 = vmatpush.msra.mxu0 %v540
        %2845 = vmatpush.msra.mxu0 %v536
        %2846 = vmatpush.msra.mxu0 %v532
        %2847 = vmatpush.msra.mxu0 %v528
        %2848 = vmatpush.msra.mxu0 %v524
        %2849 = vmatpush.msra.mxu0 %v520
        %2850 = vmatpush.msra.mxu0 %v516
        %2851 = vmatpush.msra.mxu0 %v512
        %2852 = vmatpush.msra.mxu0 %v508
        %2853 = vmatmul.f32.gmra.mxu0 %v2756
        %v2854 = vpop.f32.mrf.mxu0
        %v2855 = vadd.f32 %v870, %v2854
        %2856 = vdwg.mxu0
        %2857 = vmatpush.msra.mxu0 %v632
        %2858 = vmatpush.msra.mxu0 %v628
        %2859 = vmatpush.msra.mxu0 %v624
        %2860 = vmatpush.msra.mxu0 %v620
        %2861 = vmatpush.msra.mxu0 %v616
        %2862 = vmatpush.msra.mxu0 %v612
        %2863 = vmatpush.msra.mxu0 %v608
        %2864 = vmatpush.msra.mxu0 %v604
        %2865 = vmatpush.msra.mxu0 %v600
        %2866 = vmatpush.msra.mxu0 %v596
        %2867 = vmatpush.msra.mxu0 %v592
        %2868 = vmatpush.msra.mxu0 %v588
        %2869 = vmatpush.msra.mxu0 %v584
        %2870 = vmatpush.msra.mxu0 %v580
        %2871 = vmatpush.msra.mxu0 %v576
        %2872 = vmatpush.msra.mxu0 %v572
        %2873 = vmatmul.f32.gmra.mxu0 %v2561
        %v2874 = vpop.f32.mrf.mxu0
        %v2875 = vadd.f32 %v2855, %v2874
        %2876 = vdwg.mxu0
        %2877 = vmatpush.msra.mxu0 %v569
        %2878 = vmatpush.msra.mxu0 %v565
        %2879 = vmatpush.msra.mxu0 %v561
        %2880 = vmatpush.msra.mxu0 %v557
        %2881 = vmatpush.msra.mxu0 %v553
        %2882 = vmatpush.msra.mxu0 %v549
        %2883 = vmatpush.msra.mxu0 %v545
        %2884 = vmatpush.msra.mxu0 %v541
        %2885 = vmatpush.msra.mxu0 %v537
        %2886 = vmatpush.msra.mxu0 %v533
        %2887 = vmatpush.msra.mxu0 %v529
        %2888 = vmatpush.msra.mxu0 %v525
        %2889 = vmatpush.msra.mxu0 %v521
        %2890 = vmatpush.msra.mxu0 %v517
        %2891 = vmatpush.msra.mxu0 %v513
        %2892 = vmatpush.msra.mxu0 %v509
        %2893 = vmatmul.f32.gmra.mxu0 %v2756
        %v2894 = vpop.f32.mrf.mxu0
        %v2895 = vadd.f32 %v871, %v2894
        %2896 = vdwg.mxu0
        %2897 = vmatpush.msra.mxu0 %v633
        %2898 = vmatpush.msra.mxu0 %v629
        %2899 = vmatpush.msra.mxu0 %v625
        %2900 = vmatpush.msra.mxu0 %v621
        %2901 = vmatpush.msra.mxu0 %v617
        %2902 = vmatpush.msra.mxu0 %v613
        %2903 = vmatpush.msra.mxu0 %v609
        %2904 = vmatpush.msra.mxu0 %v605
        %2905 = vmatpush.msra.mxu0 %v601
        %2906 = vmatpush.msra.mxu0 %v597
        %2907 = vmatpush.msra.mxu0 %v593
        %2908 = vmatpush.msra.mxu0 %v589
        %2909 = vmatpush.msra.mxu0 %v585
        %2910 = vmatpush.msra.mxu0 %v581
        %2911 = vmatpush.msra.mxu0 %v577
        %2912 = vmatpush.msra.mxu0 %v573
        %2913 = vmatmul.f32.gmra.mxu0 %v2561
        %v2914 = vpop.f32.mrf.mxu0
        %v2915 = vadd.f32 %v2895, %v2914
        %2916 = vdwg.mxu0
        %v2917 = vsub.f32 0.0, %v2795
        %v2918 = vmul.f32 %v2917, 1.442695
        %v2919 = vpow.pop %v2918
        %v2920 = vadd.f32 %v2919, 1.0
        %v2921 = vrcp.pop %v2920
        %v2922 = vsub.f32 0.0, %v2835
        %v2923 = vmul.f32 %v2922, 1.442695
        %v2924 = vpow.pop %v2923
        %v2925 = vadd.f32 %v2924, 1.0
        %v2926 = vrcp.pop %v2925
        %v2927 = vtanh.pop %v2875
        %v2928 = vsub.f32 0.0, %v2915
        %v2929 = vmul.f32 %v2928, 1.442695
        %v2930 = vpow.pop %v2929
        %v2931 = vadd.f32 %v2930, 1.0
        %v2932 = vrcp.pop %v2931
        %v2933 = vmul.f32 %v2926, %v2559
        %v2934 = vmul.f32 %v2921, %v2927
        %v2935 = vadd.f32 %v2933, %v2934
        %v2936 = vtanh.pop %v2935
        %v2937 = vmul.f32 %v2932, %v2936
        %s2938 = sadd.s32 %s1057, 6
        %v2939 = vstv %s2938
        %vm2940 = vcmp.eq.s32.totalorder %v674, %v2939
        %v2941 = vsel %vm2940, 1, 0
        %2942 = vset.pattern.permute.xlu0 0
        %2943 = vperm.xlu0 %2942, %v2941
        %v2944 = vpop.permute.xlu0 %2943
        %vm2945 = vcmp.eq.s32.totalorder %v2944, 1
        %v2946 = vsel %vm2945, %v2754, %v2570
        %v2947 = vsel %vm2945, %v2937, %v2571
        %s2948 = scalar_lea.vmem %s352, 48
        %v2949 = vld [vmem:[%s2948] sm:$0xff]
        %2950 = vmatpush.msra.mxu0 %v438
        %2951 = vmatpush.msra.mxu0 %v434
        %2952 = vmatpush.msra.mxu0 %v430
        %2953 = vmatpush.msra.mxu0 %v426
        %2954 = vmatpush.msra.mxu0 %v422
        %2955 = vmatpush.msra.mxu0 %v418
        %2956 = vmatpush.msra.mxu0 %v414
        %2957 = vmatpush.msra.mxu0 %v410
        %2958 = vmatpush.msra.mxu0 %v406
        %2959 = vmatpush.msra.mxu0 %v402
        %2960 = vmatpush.msra.mxu0 %v398
        %2961 = vmatpush.msra.mxu0 %v394
        %2962 = vmatpush.msra.mxu0 %v390
        %2963 = vmatpush.msra.mxu0 %v386
        %2964 = vmatpush.msra.mxu0 %v382
        %2965 = vmatpush.msra.mxu0 %v378
        %2966 = vmatmul.f32.gmra.mxu0 %v2949
        %v2967 = vpop.f32.mrf.mxu0
        %v2968 = vadd.f32 %v677, %v2967
        %2969 = vdwg.mxu0
        %2970 = vmatpush.msra.mxu0 %v502
        %2971 = vmatpush.msra.mxu0 %v498
        %2972 = vmatpush.msra.mxu0 %v494
        %2973 = vmatpush.msra.mxu0 %v490
        %2974 = vmatpush.msra.mxu0 %v486
        %2975 = vmatpush.msra.mxu0 %v482
        %2976 = vmatpush.msra.mxu0 %v478
        %2977 = vmatpush.msra.mxu0 %v474
        %2978 = vmatpush.msra.mxu0 %v470
        %2979 = vmatpush.msra.mxu0 %v466
        %2980 = vmatpush.msra.mxu0 %v462
        %2981 = vmatpush.msra.mxu0 %v458
        %2982 = vmatpush.msra.mxu0 %v454
        %2983 = vmatpush.msra.mxu0 %v450
        %2984 = vmatpush.msra.mxu0 %v446
        %2985 = vmatpush.msra.mxu0 %v442
        %2986 = vmatmul.f32.gmra.mxu0 %v2754
        %v2987 = vpop.f32.mrf.mxu0
        %v2988 = vadd.f32 %v2968, %v2987
        %2989 = vdwg.mxu0
        %2990 = vmatpush.msra.mxu0 %v439
        %2991 = vmatpush.msra.mxu0 %v435
        %2992 = vmatpush.msra.mxu0 %v431
        %2993 = vmatpush.msra.mxu0 %v427
        %2994 = vmatpush.msra.mxu0 %v423
        %2995 = vmatpush.msra.mxu0 %v419
        %2996 = vmatpush.msra.mxu0 %v415
        %2997 = vmatpush.msra.mxu0 %v411
        %2998 = vmatpush.msra.mxu0 %v407
        %2999 = vmatpush.msra.mxu0 %v403
        %3000 = vmatpush.msra.mxu0 %v399
        %3001 = vmatpush.msra.mxu0 %v395
        %3002 = vmatpush.msra.mxu0 %v391
        %3003 = vmatpush.msra.mxu0 %v387
        %3004 = vmatpush.msra.mxu0 %v383
        %3005 = vmatpush.msra.mxu0 %v379
        %3006 = vmatmul.f32.gmra.mxu0 %v2949
        %v3007 = vpop.f32.mrf.mxu0
        %v3008 = vadd.f32 %v678, %v3007
        %3009 = vdwg.mxu0
        %3010 = vmatpush.msra.mxu0 %v503
        %3011 = vmatpush.msra.mxu0 %v499
        %3012 = vmatpush.msra.mxu0 %v495
        %3013 = vmatpush.msra.mxu0 %v491
        %3014 = vmatpush.msra.mxu0 %v487
        %3015 = vmatpush.msra.mxu0 %v483
        %3016 = vmatpush.msra.mxu0 %v479
        %3017 = vmatpush.msra.mxu0 %v475
        %3018 = vmatpush.msra.mxu0 %v471
        %3019 = vmatpush.msra.mxu0 %v467
        %3020 = vmatpush.msra.mxu0 %v463
        %3021 = vmatpush.msra.mxu0 %v459
        %3022 = vmatpush.msra.mxu0 %v455
        %3023 = vmatpush.msra.mxu0 %v451
        %3024 = vmatpush.msra.mxu0 %v447
        %3025 = vmatpush.msra.mxu0 %v443
        %3026 = vmatmul.f32.gmra.mxu0 %v2754
        %v3027 = vpop.f32.mrf.mxu0
        %v3028 = vadd.f32 %v3008, %v3027
        %3029 = vdwg.mxu0
        %3030 = vmatpush.msra.mxu0 %v440
        %3031 = vmatpush.msra.mxu0 %v436
        %3032 = vmatpush.msra.mxu0 %v432
        %3033 = vmatpush.msra.mxu0 %v428
        %3034 = vmatpush.msra.mxu0 %v424
        %3035 = vmatpush.msra.mxu0 %v420
        %3036 = vmatpush.msra.mxu0 %v416
        %3037 = vmatpush.msra.mxu0 %v412
        %3038 = vmatpush.msra.mxu0 %v408
        %3039 = vmatpush.msra.mxu0 %v404
        %3040 = vmatpush.msra.mxu0 %v400
        %3041 = vmatpush.msra.mxu0 %v396
        %3042 = vmatpush.msra.mxu0 %v392
        %3043 = vmatpush.msra.mxu0 %v388
        %3044 = vmatpush.msra.mxu0 %v384
        %3045 = vmatpush.msra.mxu0 %v380
        %3046 = vmatmul.f32.gmra.mxu0 %v2949
        %v3047 = vpop.f32.mrf.mxu0
        %v3048 = vadd.f32 %v679, %v3047
        %3049 = vdwg.mxu0
        %3050 = vmatpush.msra.mxu0 %v504
        %3051 = vmatpush.msra.mxu0 %v500
        %3052 = vmatpush.msra.mxu0 %v496
        %3053 = vmatpush.msra.mxu0 %v492
        %3054 = vmatpush.msra.mxu0 %v488
        %3055 = vmatpush.msra.mxu0 %v484
        %3056 = vmatpush.msra.mxu0 %v480
        %3057 = vmatpush.msra.mxu0 %v476
        %3058 = vmatpush.msra.mxu0 %v472
        %3059 = vmatpush.msra.mxu0 %v468
        %3060 = vmatpush.msra.mxu0 %v464
        %3061 = vmatpush.msra.mxu0 %v460
        %3062 = vmatpush.msra.mxu0 %v456
        %3063 = vmatpush.msra.mxu0 %v452
        %3064 = vmatpush.msra.mxu0 %v448
        %3065 = vmatpush.msra.mxu0 %v444
        %3066 = vmatmul.f32.gmra.mxu0 %v2754
        %v3067 = vpop.f32.mrf.mxu0
        %v3068 = vadd.f32 %v3048, %v3067
        %3069 = vdwg.mxu0
        %3070 = vmatpush.msra.mxu0 %v441
        %3071 = vmatpush.msra.mxu0 %v437
        %3072 = vmatpush.msra.mxu0 %v433
        %3073 = vmatpush.msra.mxu0 %v429
        %3074 = vmatpush.msra.mxu0 %v425
        %3075 = vmatpush.msra.mxu0 %v421
        %3076 = vmatpush.msra.mxu0 %v417
        %3077 = vmatpush.msra.mxu0 %v413
        %3078 = vmatpush.msra.mxu0 %v409
        %3079 = vmatpush.msra.mxu0 %v405
        %3080 = vmatpush.msra.mxu0 %v401
        %3081 = vmatpush.msra.mxu0 %v397
        %3082 = vmatpush.msra.mxu0 %v393
        %3083 = vmatpush.msra.mxu0 %v389
        %3084 = vmatpush.msra.mxu0 %v385
        %3085 = vmatpush.msra.mxu0 %v381
        %3086 = vmatmul.f32.gmra.mxu0 %v2949
        %v3087 = vpop.f32.mrf.mxu0
        %v3088 = vadd.f32 %v680, %v3087
        %3089 = vdwg.mxu0
        %3090 = vmatpush.msra.mxu0 %v505
        %3091 = vmatpush.msra.mxu0 %v501
        %3092 = vmatpush.msra.mxu0 %v497
        %3093 = vmatpush.msra.mxu0 %v493
        %3094 = vmatpush.msra.mxu0 %v489
        %3095 = vmatpush.msra.mxu0 %v485
        %3096 = vmatpush.msra.mxu0 %v481
        %3097 = vmatpush.msra.mxu0 %v477
        %3098 = vmatpush.msra.mxu0 %v473
        %3099 = vmatpush.msra.mxu0 %v469
        %3100 = vmatpush.msra.mxu0 %v465
        %3101 = vmatpush.msra.mxu0 %v461
        %3102 = vmatpush.msra.mxu0 %v457
        %3103 = vmatpush.msra.mxu0 %v453
        %3104 = vmatpush.msra.mxu0 %v449
        %3105 = vmatpush.msra.mxu0 %v445
        %3106 = vmatmul.f32.gmra.mxu0 %v2754
        %v3107 = vpop.f32.mrf.mxu0
        %v3108 = vadd.f32 %v3088, %v3107
        %3109 = vdwg.mxu0
        %v3110 = vsub.f32 0.0, %v2988
        %v3111 = vmul.f32 %v3110, 1.442695
        %v3112 = vpow.pop %v3111
        %v3113 = vadd.f32 %v3112, 1.0
        %v3114 = vrcp.pop %v3113
        %v3115 = vsub.f32 0.0, %v3028
        %v3116 = vmul.f32 %v3115, 1.442695
        %v3117 = vpow.pop %v3116
        %v3118 = vadd.f32 %v3117, 1.0
        %v3119 = vrcp.pop %v3118
        %v3120 = vtanh.pop %v3068
        %v3121 = vsub.f32 0.0, %v3108
        %v3122 = vmul.f32 %v3121, 1.442695
        %v3123 = vpow.pop %v3122
        %v3124 = vadd.f32 %v3123, 1.0
        %v3125 = vrcp.pop %v3124
        %v3126 = vmul.f32 %v3119, %v2752
        %v3127 = vmul.f32 %v3114, %v3120
        %v3128 = vadd.f32 %v3126, %v3127
        %v3129 = vtanh.pop %v3128
        %v3130 = vmul.f32 %v3125, %v3129
        %s3131 = scalar_lea.vmem %s358, 48
        %v3132 = vld [vmem:[%s3131] sm:$0xff]
        %3133 = vmatpush.msra.mxu0 %v566
        %3134 = vmatpush.msra.mxu0 %v562
        %3135 = vmatpush.msra.mxu0 %v558
        %3136 = vmatpush.msra.mxu0 %v554
        %3137 = vmatpush.msra.mxu0 %v550
        %3138 = vmatpush.msra.mxu0 %v546
        %3139 = vmatpush.msra.mxu0 %v542
        %3140 = vmatpush.msra.mxu0 %v538
        %3141 = vmatpush.msra.mxu0 %v534
        %3142 = vmatpush.msra.mxu0 %v530
        %3143 = vmatpush.msra.mxu0 %v526
        %3144 = vmatpush.msra.mxu0 %v522
        %3145 = vmatpush.msra.mxu0 %v518
        %3146 = vmatpush.msra.mxu0 %v514
        %3147 = vmatpush.msra.mxu0 %v510
        %3148 = vmatpush.msra.mxu0 %v506
        %3149 = vmatmul.f32.gmra.mxu0 %v3132
        %v3150 = vpop.f32.mrf.mxu0
        %v3151 = vadd.f32 %v868, %v3150
        %3152 = vdwg.mxu0
        %3153 = vmatpush.msra.mxu0 %v630
        %3154 = vmatpush.msra.mxu0 %v626
        %3155 = vmatpush.msra.mxu0 %v622
        %3156 = vmatpush.msra.mxu0 %v618
        %3157 = vmatpush.msra.mxu0 %v614
        %3158 = vmatpush.msra.mxu0 %v610
        %3159 = vmatpush.msra.mxu0 %v606
        %3160 = vmatpush.msra.mxu0 %v602
        %3161 = vmatpush.msra.mxu0 %v598
        %3162 = vmatpush.msra.mxu0 %v594
        %3163 = vmatpush.msra.mxu0 %v590
        %3164 = vmatpush.msra.mxu0 %v586
        %3165 = vmatpush.msra.mxu0 %v582
        %3166 = vmatpush.msra.mxu0 %v578
        %3167 = vmatpush.msra.mxu0 %v574
        %3168 = vmatpush.msra.mxu0 %v570
        %3169 = vmatmul.f32.gmra.mxu0 %v2937
        %v3170 = vpop.f32.mrf.mxu0
        %v3171 = vadd.f32 %v3151, %v3170
        %3172 = vdwg.mxu0
        %3173 = vmatpush.msra.mxu0 %v567
        %3174 = vmatpush.msra.mxu0 %v563
        %3175 = vmatpush.msra.mxu0 %v559
        %3176 = vmatpush.msra.mxu0 %v555
        %3177 = vmatpush.msra.mxu0 %v551
        %3178 = vmatpush.msra.mxu0 %v547
        %3179 = vmatpush.msra.mxu0 %v543
        %3180 = vmatpush.msra.mxu0 %v539
        %3181 = vmatpush.msra.mxu0 %v535
        %3182 = vmatpush.msra.mxu0 %v531
        %3183 = vmatpush.msra.mxu0 %v527
        %3184 = vmatpush.msra.mxu0 %v523
        %3185 = vmatpush.msra.mxu0 %v519
        %3186 = vmatpush.msra.mxu0 %v515
        %3187 = vmatpush.msra.mxu0 %v511
        %3188 = vmatpush.msra.mxu0 %v507
        %3189 = vmatmul.f32.gmra.mxu0 %v3132
        %v3190 = vpop.f32.mrf.mxu0
        %v3191 = vadd.f32 %v869, %v3190
        %3192 = vdwg.mxu0
        %3193 = vmatpush.msra.mxu0 %v631
        %3194 = vmatpush.msra.mxu0 %v627
        %3195 = vmatpush.msra.mxu0 %v623
        %3196 = vmatpush.msra.mxu0 %v619
        %3197 = vmatpush.msra.mxu0 %v615
        %3198 = vmatpush.msra.mxu0 %v611
        %3199 = vmatpush.msra.mxu0 %v607
        %3200 = vmatpush.msra.mxu0 %v603
        %3201 = vmatpush.msra.mxu0 %v599
        %3202 = vmatpush.msra.mxu0 %v595
        %3203 = vmatpush.msra.mxu0 %v591
        %3204 = vmatpush.msra.mxu0 %v587
        %3205 = vmatpush.msra.mxu0 %v583
        %3206 = vmatpush.msra.mxu0 %v579
        %3207 = vmatpush.msra.mxu0 %v575
        %3208 = vmatpush.msra.mxu0 %v571
        %3209 = vmatmul.f32.gmra.mxu0 %v2937
        %v3210 = vpop.f32.mrf.mxu0
        %v3211 = vadd.f32 %v3191, %v3210
        %3212 = vdwg.mxu0
        %3213 = vmatpush.msra.mxu0 %v568
        %3214 = vmatpush.msra.mxu0 %v564
        %3215 = vmatpush.msra.mxu0 %v560
        %3216 = vmatpush.msra.mxu0 %v556
        %3217 = vmatpush.msra.mxu0 %v552
        %3218 = vmatpush.msra.mxu0 %v548
        %3219 = vmatpush.msra.mxu0 %v544
        %3220 = vmatpush.msra.mxu0 %v540
        %3221 = vmatpush.msra.mxu0 %v536
        %3222 = vmatpush.msra.mxu0 %v532
        %3223 = vmatpush.msra.mxu0 %v528
        %3224 = vmatpush.msra.mxu0 %v524
        %3225 = vmatpush.msra.mxu0 %v520
        %3226 = vmatpush.msra.mxu0 %v516
        %3227 = vmatpush.msra.mxu0 %v512
        %3228 = vmatpush.msra.mxu0 %v508
        %3229 = vmatmul.f32.gmra.mxu0 %v3132
        %v3230 = vpop.f32.mrf.mxu0
        %v3231 = vadd.f32 %v870, %v3230
        %3232 = vdwg.mxu0
        %3233 = vmatpush.msra.mxu0 %v632
        %3234 = vmatpush.msra.mxu0 %v628
        %3235 = vmatpush.msra.mxu0 %v624
        %3236 = vmatpush.msra.mxu0 %v620
        %3237 = vmatpush.msra.mxu0 %v616
        %3238 = vmatpush.msra.mxu0 %v612
        %3239 = vmatpush.msra.mxu0 %v608
        %3240 = vmatpush.msra.mxu0 %v604
        %3241 = vmatpush.msra.mxu0 %v600
        %3242 = vmatpush.msra.mxu0 %v596
        %3243 = vmatpush.msra.mxu0 %v592
        %3244 = vmatpush.msra.mxu0 %v588
        %3245 = vmatpush.msra.mxu0 %v584
        %3246 = vmatpush.msra.mxu0 %v580
        %3247 = vmatpush.msra.mxu0 %v576
        %3248 = vmatpush.msra.mxu0 %v572
        %3249 = vmatmul.f32.gmra.mxu0 %v2937
        %v3250 = vpop.f32.mrf.mxu0
        %v3251 = vadd.f32 %v3231, %v3250
        %3252 = vdwg.mxu0
        %3253 = vmatpush.msra.mxu0 %v569
        %3254 = vmatpush.msra.mxu0 %v565
        %3255 = vmatpush.msra.mxu0 %v561
        %3256 = vmatpush.msra.mxu0 %v557
        %3257 = vmatpush.msra.mxu0 %v553
        %3258 = vmatpush.msra.mxu0 %v549
        %3259 = vmatpush.msra.mxu0 %v545
        %3260 = vmatpush.msra.mxu0 %v541
        %3261 = vmatpush.msra.mxu0 %v537
        %3262 = vmatpush.msra.mxu0 %v533
        %3263 = vmatpush.msra.mxu0 %v529
        %3264 = vmatpush.msra.mxu0 %v525
        %3265 = vmatpush.msra.mxu0 %v521
        %3266 = vmatpush.msra.mxu0 %v517
        %3267 = vmatpush.msra.mxu0 %v513
        %3268 = vmatpush.msra.mxu0 %v509
        %3269 = vmatmul.f32.gmra.mxu0 %v3132
        %v3270 = vpop.f32.mrf.mxu0
        %v3271 = vadd.f32 %v871, %v3270
        %3272 = vdwg.mxu0
        %3273 = vmatpush.msra.mxu0 %v633
        %3274 = vmatpush.msra.mxu0 %v629
        %3275 = vmatpush.msra.mxu0 %v625
        %3276 = vmatpush.msra.mxu0 %v621
        %3277 = vmatpush.msra.mxu0 %v617
        %3278 = vmatpush.msra.mxu0 %v613
        %3279 = vmatpush.msra.mxu0 %v609
        %3280 = vmatpush.msra.mxu0 %v605
        %3281 = vmatpush.msra.mxu0 %v601
        %3282 = vmatpush.msra.mxu0 %v597
        %3283 = vmatpush.msra.mxu0 %v593
        %3284 = vmatpush.msra.mxu0 %v589
        %3285 = vmatpush.msra.mxu0 %v585
        %3286 = vmatpush.msra.mxu0 %v581
        %3287 = vmatpush.msra.mxu0 %v577
        %3288 = vmatpush.msra.mxu0 %v573
        %3289 = vmatmul.f32.gmra.mxu0 %v2937
        %v3290 = vpop.f32.mrf.mxu0
        %v3291 = vadd.f32 %v3271, %v3290
        %3292 = vdwg.mxu0
        %v3293 = vsub.f32 0.0, %v3171
        %v3294 = vmul.f32 %v3293, 1.442695
        %v3295 = vpow.pop %v3294
        %v3296 = vadd.f32 %v3295, 1.0
        %v3297 = vrcp.pop %v3296
        %v3298 = vsub.f32 0.0, %v3211
        %v3299 = vmul.f32 %v3298, 1.442695
        %v3300 = vpow.pop %v3299
        %v3301 = vadd.f32 %v3300, 1.0
        %v3302 = vrcp.pop %v3301
        %v3303 = vtanh.pop %v3251
        %v3304 = vsub.f32 0.0, %v3291
        %v3305 = vmul.f32 %v3304, 1.442695
        %v3306 = vpow.pop %v3305
        %v3307 = vadd.f32 %v3306, 1.0
        %v3308 = vrcp.pop %v3307
        %v3309 = vmul.f32 %v3302, %v2935
        %v3310 = vmul.f32 %v3297, %v3303
        %v3311 = vadd.f32 %v3309, %v3310
        %v3312 = vtanh.pop %v3311
        %v3313 = vmul.f32 %v3308, %v3312
        %s3314 = sadd.s32 %s1057, 7
        %v3315 = vstv %s3314
        %vm3316 = vcmp.eq.s32.totalorder %v674, %v3315
        %v3317 = vsel %vm3316, 1, 0
        %3318 = vset.pattern.permute.xlu0 0
        %3319 = vperm.xlu0 %3318, %v3317
        %v3320 = vpop.permute.xlu0 %3319
        %vm3321 = vcmp.eq.s32.totalorder %v3320, 1
        %v3322 = vsel %vm3321, %v3130, %v2946
        %v3323 = vsel %vm3321, %v3313, %v2947
        %s3324 = scalar_lea.vmem %s352, 56
        %v3325 = vld [vmem:[%s3324] sm:$0xff]
        %3326 = vmatpush.msra.mxu0 %v438
        %3327 = vmatpush.msra.mxu0 %v434
        %3328 = vmatpush.msra.mxu0 %v430
        %3329 = vmatpush.msra.mxu0 %v426
        %3330 = vmatpush.msra.mxu0 %v422
        %3331 = vmatpush.msra.mxu0 %v418
        %3332 = vmatpush.msra.mxu0 %v414
        %3333 = vmatpush.msra.mxu0 %v410
        %3334 = vmatpush.msra.mxu0 %v406
        %3335 = vmatpush.msra.mxu0 %v402
        %3336 = vmatpush.msra.mxu0 %v398
        %3337 = vmatpush.msra.mxu0 %v394
        %3338 = vmatpush.msra.mxu0 %v390
        %3339 = vmatpush.msra.mxu0 %v386
        %3340 = vmatpush.msra.mxu0 %v382
        %3341 = vmatpush.msra.mxu0 %v378
        %3342 = vmatmul.f32.gmra.mxu0 %v3325
        %v3343 = vpop.f32.mrf.mxu0
        %v3344 = vadd.f32 %v677, %v3343
        %3345 = vdwg.mxu0
        %3346 = vmatpush.msra.mxu0 %v502
        %3347 = vmatpush.msra.mxu0 %v498
        %3348 = vmatpush.msra.mxu0 %v494
        %3349 = vmatpush.msra.mxu0 %v490
        %3350 = vmatpush.msra.mxu0 %v486
        %3351 = vmatpush.msra.mxu0 %v482
        %3352 = vmatpush.msra.mxu0 %v478
        %3353 = vmatpush.msra.mxu0 %v474
        %3354 = vmatpush.msra.mxu0 %v470
        %3355 = vmatpush.msra.mxu0 %v466
        %3356 = vmatpush.msra.mxu0 %v462
        %3357 = vmatpush.msra.mxu0 %v458
        %3358 = vmatpush.msra.mxu0 %v454
        %3359 = vmatpush.msra.mxu0 %v450
        %3360 = vmatpush.msra.mxu0 %v446
        %3361 = vmatpush.msra.mxu0 %v442
        %3362 = vmatmul.f32.gmra.mxu0 %v3130
        %v3363 = vpop.f32.mrf.mxu0
        %v3364 = vadd.f32 %v3344, %v3363
        %3365 = vdwg.mxu0
        %3366 = vmatpush.msra.mxu0 %v439
        %3367 = vmatpush.msra.mxu0 %v435
        %3368 = vmatpush.msra.mxu0 %v431
        %3369 = vmatpush.msra.mxu0 %v427
        %3370 = vmatpush.msra.mxu0 %v423
        %3371 = vmatpush.msra.mxu0 %v419
        %3372 = vmatpush.msra.mxu0 %v415
        %3373 = vmatpush.msra.mxu0 %v411
        %3374 = vmatpush.msra.mxu0 %v407
        %3375 = vmatpush.msra.mxu0 %v403
        %3376 = vmatpush.msra.mxu0 %v399
        %3377 = vmatpush.msra.mxu0 %v395
        %3378 = vmatpush.msra.mxu0 %v391
        %3379 = vmatpush.msra.mxu0 %v387
        %3380 = vmatpush.msra.mxu0 %v383
        %3381 = vmatpush.msra.mxu0 %v379
        %3382 = vmatmul.f32.gmra.mxu0 %v3325
        %v3383 = vpop.f32.mrf.mxu0
        %v3384 = vadd.f32 %v678, %v3383
        %3385 = vdwg.mxu0
        %3386 = vmatpush.msra.mxu0 %v503
        %3387 = vmatpush.msra.mxu0 %v499
        %3388 = vmatpush.msra.mxu0 %v495
        %3389 = vmatpush.msra.mxu0 %v491
        %3390 = vmatpush.msra.mxu0 %v487
        %3391 = vmatpush.msra.mxu0 %v483
        %3392 = vmatpush.msra.mxu0 %v479
        %3393 = vmatpush.msra.mxu0 %v475
        %3394 = vmatpush.msra.mxu0 %v471
        %3395 = vmatpush.msra.mxu0 %v467
        %3396 = vmatpush.msra.mxu0 %v463
        %3397 = vmatpush.msra.mxu0 %v459
        %3398 = vmatpush.msra.mxu0 %v455
        %3399 = vmatpush.msra.mxu0 %v451
        %3400 = vmatpush.msra.mxu0 %v447
        %3401 = vmatpush.msra.mxu0 %v443
        %3402 = vmatmul.f32.gmra.mxu0 %v3130
        %v3403 = vpop.f32.mrf.mxu0
        %v3404 = vadd.f32 %v3384, %v3403
        %3405 = vdwg.mxu0
        %3406 = vmatpush.msra.mxu0 %v440
        %3407 = vmatpush.msra.mxu0 %v436
        %3408 = vmatpush.msra.mxu0 %v432
        %3409 = vmatpush.msra.mxu0 %v428
        %3410 = vmatpush.msra.mxu0 %v424
        %3411 = vmatpush.msra.mxu0 %v420
        %3412 = vmatpush.msra.mxu0 %v416
        %3413 = vmatpush.msra.mxu0 %v412
        %3414 = vmatpush.msra.mxu0 %v408
        %3415 = vmatpush.msra.mxu0 %v404
        %3416 = vmatpush.msra.mxu0 %v400
        %3417 = vmatpush.msra.mxu0 %v396
        %3418 = vmatpush.msra.mxu0 %v392
        %3419 = vmatpush.msra.mxu0 %v388
        %3420 = vmatpush.msra.mxu0 %v384
        %3421 = vmatpush.msra.mxu0 %v380
        %3422 = vmatmul.f32.gmra.mxu0 %v3325
        %v3423 = vpop.f32.mrf.mxu0
        %v3424 = vadd.f32 %v679, %v3423
        %3425 = vdwg.mxu0
        %3426 = vmatpush.msra.mxu0 %v504
        %3427 = vmatpush.msra.mxu0 %v500
        %3428 = vmatpush.msra.mxu0 %v496
        %3429 = vmatpush.msra.mxu0 %v492
        %3430 = vmatpush.msra.mxu0 %v488
        %3431 = vmatpush.msra.mxu0 %v484
        %3432 = vmatpush.msra.mxu0 %v480
        %3433 = vmatpush.msra.mxu0 %v476
        %3434 = vmatpush.msra.mxu0 %v472
        %3435 = vmatpush.msra.mxu0 %v468
        %3436 = vmatpush.msra.mxu0 %v464
        %3437 = vmatpush.msra.mxu0 %v460
        %3438 = vmatpush.msra.mxu0 %v456
        %3439 = vmatpush.msra.mxu0 %v452
        %3440 = vmatpush.msra.mxu0 %v448
        %3441 = vmatpush.msra.mxu0 %v444
        %3442 = vmatmul.f32.gmra.mxu0 %v3130
        %v3443 = vpop.f32.mrf.mxu0
        %v3444 = vadd.f32 %v3424, %v3443
        %3445 = vdwg.mxu0
        %3446 = vmatpush.msra.mxu0 %v441
        %3447 = vmatpush.msra.mxu0 %v437
        %3448 = vmatpush.msra.mxu0 %v433
        %3449 = vmatpush.msra.mxu0 %v429
        %3450 = vmatpush.msra.mxu0 %v425
        %3451 = vmatpush.msra.mxu0 %v421
        %3452 = vmatpush.msra.mxu0 %v417
        %3453 = vmatpush.msra.mxu0 %v413
        %3454 = vmatpush.msra.mxu0 %v409
        %3455 = vmatpush.msra.mxu0 %v405
        %3456 = vmatpush.msra.mxu0 %v401
        %3457 = vmatpush.msra.mxu0 %v397
        %3458 = vmatpush.msra.mxu0 %v393
        %3459 = vmatpush.msra.mxu0 %v389
        %3460 = vmatpush.msra.mxu0 %v385
        %3461 = vmatpush.msra.mxu0 %v381
        %3462 = vmatmul.f32.gmra.mxu0 %v3325
        %v3463 = vpop.f32.mrf.mxu0
        %v3464 = vadd.f32 %v680, %v3463
        %3465 = vdwg.mxu0
        %3466 = vmatpush.msra.mxu0 %v505
        %3467 = vmatpush.msra.mxu0 %v501
        %3468 = vmatpush.msra.mxu0 %v497
        %3469 = vmatpush.msra.mxu0 %v493
        %3470 = vmatpush.msra.mxu0 %v489
        %3471 = vmatpush.msra.mxu0 %v485
        %3472 = vmatpush.msra.mxu0 %v481
        %3473 = vmatpush.msra.mxu0 %v477
        %3474 = vmatpush.msra.mxu0 %v473
        %3475 = vmatpush.msra.mxu0 %v469
        %3476 = vmatpush.msra.mxu0 %v465
        %3477 = vmatpush.msra.mxu0 %v461
        %3478 = vmatpush.msra.mxu0 %v457
        %3479 = vmatpush.msra.mxu0 %v453
        %3480 = vmatpush.msra.mxu0 %v449
        %3481 = vmatpush.msra.mxu0 %v445
        %3482 = vmatmul.f32.gmra.mxu0 %v3130
        %v3483 = vpop.f32.mrf.mxu0
        %v3484 = vadd.f32 %v3464, %v3483
        %3485 = vdwg.mxu0
        %v3486 = vsub.f32 0.0, %v3364
        %v3487 = vmul.f32 %v3486, 1.442695
        %v3488 = vpow.pop %v3487
        %v3489 = vadd.f32 %v3488, 1.0
        %v3490 = vrcp.pop %v3489
        %v3491 = vsub.f32 0.0, %v3404
        %v3492 = vmul.f32 %v3491, 1.442695
        %v3493 = vpow.pop %v3492
        %v3494 = vadd.f32 %v3493, 1.0
        %v3495 = vrcp.pop %v3494
        %v3496 = vtanh.pop %v3444
        %v3497 = vsub.f32 0.0, %v3484
        %v3498 = vmul.f32 %v3497, 1.442695
        %v3499 = vpow.pop %v3498
        %v3500 = vadd.f32 %v3499, 1.0
        %v3501 = vrcp.pop %v3500
        %v3502 = vmul.f32 %v3495, %v3128
        %v3503 = vmul.f32 %v3490, %v3496
        %v3504 = vadd.f32 %v3502, %v3503
        %v3505 = vtanh.pop %v3504
        %v3506 = vmul.f32 %v3501, %v3505
        %s3507 = scalar_lea.vmem %s358, 56
        %v3508 = vld [vmem:[%s3507] sm:$0xff]
        %3509 = vmatpush.msra.mxu0 %v566
        %3510 = vmatpush.msra.mxu0 %v562
        %3511 = vmatpush.msra.mxu0 %v558
        %3512 = vmatpush.msra.mxu0 %v554
        %3513 = vmatpush.msra.mxu0 %v550
        %3514 = vmatpush.msra.mxu0 %v546
        %3515 = vmatpush.msra.mxu0 %v542
        %3516 = vmatpush.msra.mxu0 %v538
        %3517 = vmatpush.msra.mxu0 %v534
        %3518 = vmatpush.msra.mxu0 %v530
        %3519 = vmatpush.msra.mxu0 %v526
        %3520 = vmatpush.msra.mxu0 %v522
        %3521 = vmatpush.msra.mxu0 %v518
        %3522 = vmatpush.msra.mxu0 %v514
        %3523 = vmatpush.msra.mxu0 %v510
        %3524 = vmatpush.msra.mxu0 %v506
        %3525 = vmatmul.f32.gmra.mxu0 %v3508
        %v3526 = vpop.f32.mrf.mxu0
        %v3527 = vadd.f32 %v868, %v3526
        %3528 = vdwg.mxu0
        %3529 = vmatpush.msra.mxu0 %v630
        %3530 = vmatpush.msra.mxu0 %v626
        %3531 = vmatpush.msra.mxu0 %v622
        %3532 = vmatpush.msra.mxu0 %v618
        %3533 = vmatpush.msra.mxu0 %v614
        %3534 = vmatpush.msra.mxu0 %v610
        %3535 = vmatpush.msra.mxu0 %v606
        %3536 = vmatpush.msra.mxu0 %v602
        %3537 = vmatpush.msra.mxu0 %v598
        %3538 = vmatpush.msra.mxu0 %v594
        %3539 = vmatpush.msra.mxu0 %v590
        %3540 = vmatpush.msra.mxu0 %v586
        %3541 = vmatpush.msra.mxu0 %v582
        %3542 = vmatpush.msra.mxu0 %v578
        %3543 = vmatpush.msra.mxu0 %v574
        %3544 = vmatpush.msra.mxu0 %v570
        %3545 = vmatmul.f32.gmra.mxu0 %v3313
        %v3546 = vpop.f32.mrf.mxu0
        %v3547 = vadd.f32 %v3527, %v3546
        %3548 = vdwg.mxu0
        %3549 = vmatpush.msra.mxu0 %v567
        %3550 = vmatpush.msra.mxu0 %v563
        %3551 = vmatpush.msra.mxu0 %v559
        %3552 = vmatpush.msra.mxu0 %v555
        %3553 = vmatpush.msra.mxu0 %v551
        %3554 = vmatpush.msra.mxu0 %v547
        %3555 = vmatpush.msra.mxu0 %v543
        %3556 = vmatpush.msra.mxu0 %v539
        %3557 = vmatpush.msra.mxu0 %v535
        %3558 = vmatpush.msra.mxu0 %v531
        %3559 = vmatpush.msra.mxu0 %v527
        %3560 = vmatpush.msra.mxu0 %v523
        %3561 = vmatpush.msra.mxu0 %v519
        %3562 = vmatpush.msra.mxu0 %v515
        %3563 = vmatpush.msra.mxu0 %v511
        %3564 = vmatpush.msra.mxu0 %v507
        %3565 = vmatmul.f32.gmra.mxu0 %v3508
        %v3566 = vpop.f32.mrf.mxu0
        %v3567 = vadd.f32 %v869, %v3566
        %3568 = vdwg.mxu0
        %3569 = vmatpush.msra.mxu0 %v631
        %3570 = vmatpush.msra.mxu0 %v627
        %3571 = vmatpush.msra.mxu0 %v623
        %3572 = vmatpush.msra.mxu0 %v619
        %3573 = vmatpush.msra.mxu0 %v615
        %3574 = vmatpush.msra.mxu0 %v611
        %3575 = vmatpush.msra.mxu0 %v607
        %3576 = vmatpush.msra.mxu0 %v603
        %3577 = vmatpush.msra.mxu0 %v599
        %3578 = vmatpush.msra.mxu0 %v595
        %3579 = vmatpush.msra.mxu0 %v591
        %3580 = vmatpush.msra.mxu0 %v587
        %3581 = vmatpush.msra.mxu0 %v583
        %3582 = vmatpush.msra.mxu0 %v579
        %3583 = vmatpush.msra.mxu0 %v575
        %3584 = vmatpush.msra.mxu0 %v571
        %3585 = vmatmul.f32.gmra.mxu0 %v3313
        %v3586 = vpop.f32.mrf.mxu0
        %v3587 = vadd.f32 %v3567, %v3586
        %3588 = vdwg.mxu0
        %3589 = vmatpush.msra.mxu0 %v568
        %3590 = vmatpush.msra.mxu0 %v564
        %3591 = vmatpush.msra.mxu0 %v560
        %3592 = vmatpush.msra.mxu0 %v556
        %3593 = vmatpush.msra.mxu0 %v552
        %3594 = vmatpush.msra.mxu0 %v548
        %3595 = vmatpush.msra.mxu0 %v544
        %3596 = vmatpush.msra.mxu0 %v540
        %3597 = vmatpush.msra.mxu0 %v536
        %3598 = vmatpush.msra.mxu0 %v532
        %3599 = vmatpush.msra.mxu0 %v528
        %3600 = vmatpush.msra.mxu0 %v524
        %3601 = vmatpush.msra.mxu0 %v520
        %3602 = vmatpush.msra.mxu0 %v516
        %3603 = vmatpush.msra.mxu0 %v512
        %3604 = vmatpush.msra.mxu0 %v508
        %3605 = vmatmul.f32.gmra.mxu0 %v3508
        %v3606 = vpop.f32.mrf.mxu0
        %v3607 = vadd.f32 %v870, %v3606
        %3608 = vdwg.mxu0
        %3609 = vmatpush.msra.mxu0 %v632
        %3610 = vmatpush.msra.mxu0 %v628
        %3611 = vmatpush.msra.mxu0 %v624
        %3612 = vmatpush.msra.mxu0 %v620
        %3613 = vmatpush.msra.mxu0 %v616
        %3614 = vmatpush.msra.mxu0 %v612
        %3615 = vmatpush.msra.mxu0 %v608
        %3616 = vmatpush.msra.mxu0 %v604
        %3617 = vmatpush.msra.mxu0 %v600
        %3618 = vmatpush.msra.mxu0 %v596
        %3619 = vmatpush.msra.mxu0 %v592
        %3620 = vmatpush.msra.mxu0 %v588
        %3621 = vmatpush.msra.mxu0 %v584
        %3622 = vmatpush.msra.mxu0 %v580
        %3623 = vmatpush.msra.mxu0 %v576
        %3624 = vmatpush.msra.mxu0 %v572
        %3625 = vmatmul.f32.gmra.mxu0 %v3313
        %v3626 = vpop.f32.mrf.mxu0
        %v3627 = vadd.f32 %v3607, %v3626
        %3628 = vdwg.mxu0
        %3629 = vmatpush.msra.mxu0 %v569
        %3630 = vmatpush.msra.mxu0 %v565
        %3631 = vmatpush.msra.mxu0 %v561
        %3632 = vmatpush.msra.mxu0 %v557
        %3633 = vmatpush.msra.mxu0 %v553
        %3634 = vmatpush.msra.mxu0 %v549
        %3635 = vmatpush.msra.mxu0 %v545
        %3636 = vmatpush.msra.mxu0 %v541
        %3637 = vmatpush.msra.mxu0 %v537
        %3638 = vmatpush.msra.mxu0 %v533
        %3639 = vmatpush.msra.mxu0 %v529
        %3640 = vmatpush.msra.mxu0 %v525
        %3641 = vmatpush.msra.mxu0 %v521
        %3642 = vmatpush.msra.mxu0 %v517
        %3643 = vmatpush.msra.mxu0 %v513
        %3644 = vmatpush.msra.mxu0 %v509
        %3645 = vmatmul.f32.gmra.mxu0 %v3508
        %v3646 = vpop.f32.mrf.mxu0
        %v3647 = vadd.f32 %v871, %v3646
        %3648 = vdwg.mxu0
        %3649 = vmatpush.msra.mxu0 %v633
        %3650 = vmatpush.msra.mxu0 %v629
        %3651 = vmatpush.msra.mxu0 %v625
        %3652 = vmatpush.msra.mxu0 %v621
        %3653 = vmatpush.msra.mxu0 %v617
        %3654 = vmatpush.msra.mxu0 %v613
        %3655 = vmatpush.msra.mxu0 %v609
        %3656 = vmatpush.msra.mxu0 %v605
        %3657 = vmatpush.msra.mxu0 %v601
        %3658 = vmatpush.msra.mxu0 %v597
        %3659 = vmatpush.msra.mxu0 %v593
        %3660 = vmatpush.msra.mxu0 %v589
        %3661 = vmatpush.msra.mxu0 %v585
        %3662 = vmatpush.msra.mxu0 %v581
        %3663 = vmatpush.msra.mxu0 %v577
        %3664 = vmatpush.msra.mxu0 %v573
        %3665 = vmatmul.f32.gmra.mxu0 %v3313
        %v3666 = vpop.f32.mrf.mxu0
        %v3667 = vadd.f32 %v3647, %v3666
        %3668 = vdwg.mxu0
        %v3669 = vsub.f32 0.0, %v3547
        %v3670 = vmul.f32 %v3669, 1.442695
        %v3671 = vpow.pop %v3670
        %v3672 = vadd.f32 %v3671, 1.0
        %v3673 = vrcp.pop %v3672
        %v3674 = vsub.f32 0.0, %v3587
        %v3675 = vmul.f32 %v3674, 1.442695
        %v3676 = vpow.pop %v3675
        %v3677 = vadd.f32 %v3676, 1.0
        %v3678 = vrcp.pop %v3677
        %v3679 = vtanh.pop %v3627
        %v3680 = vsub.f32 0.0, %v3667
        %v3681 = vmul.f32 %v3680, 1.442695
        %v3682 = vpow.pop %v3681
        %v3683 = vadd.f32 %v3682, 1.0
        %v3684 = vrcp.pop %v3683
        %v3685 = vmul.f32 %v3678, %v3311
        %v3686 = vmul.f32 %v3673, %v3679
        %v3687 = vadd.f32 %v3685, %v3686
        %v3688 = vtanh.pop %v3687
        %v3689 = vmul.f32 %v3684, %v3688
        %s3690 = sadd.s32 %s1057, 8
        %v3691 = vstv %s3690
        %vm3692 = vcmp.eq.s32.totalorder %v674, %v3691
        %v3693 = vsel %vm3692, 1, 0
        %3694 = vset.pattern.permute.xlu0 0
        %3695 = vperm.xlu0 %3694, %v3693
        %v3696 = vpop.permute.xlu0 %3695
        %vm3697 = vcmp.eq.s32.totalorder %v3696, 1
        %v3698 = vsel %vm3697, %v3506, %v3322
        %v3699 = vsel %vm3697, %v3689, %v3323
        %3700 = vst [vmem:[#allocation2] sm:$0xff] %v3506
        %3701 = vst [vmem:[#allocation3] sm:$0xff] %v3504
        %3702 = vst [vmem:[#allocation4] sm:$0xff] %v3689
        %3703 = vst [vmem:[#allocation5] sm:$0xff] %v3687
        %3704 = vst [vmem:[#allocation6] sm:$0xff] %v3698
        %3705 = vst [vmem:[#allocation7] sm:$0xff] %v3699
        %p3706 = scmp.eq.s32.totalorder %s22, 1
        // Predicated region
        $region65: #{bilstm_forward.1} parent=55 // pred_check
          %p3707 = pneg %p3706
        $region66: #{bilstm_forward.1} parent=55 // pred_check_branch
          %3709 = sbr.rel (%p3707) target = $region68
        $region67: #{bilstm_forward.1} parent=55 // pred_region
          %3710 = vmatpush.msra.mxu0 %v651
          %3711 = vmatpush.msra.mxu0 %v650
          %3712 = vmatpush.msra.mxu0 %v649
          %3713 = vmatpush.msra.mxu0 %v648
          %3714 = vmatpush.msra.mxu0 %v647
          %3715 = vmatpush.msra.mxu0 %v646
          %3716 = vmatpush.msra.mxu0 %v645
          %3717 = vmatpush.msra.mxu0 %v644
          %3718 = vmatpush.msra.mxu0 %v643
          %3719 = vmatpush.msra.mxu0 %v642
          %3720 = vmatpush.msra.mxu0 %v641
          %3721 = vmatpush.msra.mxu0 %v640
          %3722 = vmatpush.msra.mxu0 %v639
          %3723 = vmatpush.msra.mxu0 %v638
          %3724 = vmatpush.msra.mxu0 %v637
          %3725 = vmatpush.msra.mxu0 %v636
          %3726 = vmatmul.f32.gmra.mxu0 %v3698
          %v3727 = vpop.f32.mrf.mxu0
          %v3728 = vadd.f32 0.0, %v3727
          %3729 = vdwg.mxu0
          %3730 = vmatpush.msra.mxu0 %v667
          %3731 = vmatpush.msra.mxu0 %v666
          %3732 = vmatpush.msra.mxu0 %v665
          %3733 = vmatpush.msra.mxu0 %v664
          %3734 = vmatpush.msra.mxu0 %v663
          %3735 = vmatpush.msra.mxu0 %v662
          %3736 = vmatpush.msra.mxu0 %v661
          %3737 = vmatpush.msra.mxu0 %v660
          %3738 = vmatpush.msra.mxu0 %v659
          %3739 = vmatpush.msra.mxu0 %v658
          %3740 = vmatpush.msra.mxu0 %v657
          %3741 = vmatpush.msra.mxu0 %v656
          %3742 = vmatpush.msra.mxu0 %v655
          %3743 = vmatpush.msra.mxu0 %v654
          %3744 = vmatpush.msra.mxu0 %v653
          %3745 = vmatpush.msra.mxu0 %v652
          %3746 = vmatmul.f32.gmra.mxu0 %v3699
          %v3747 = vpop.f32.mrf.mxu0
          %v3748 = vadd.f32 %v3728, %v3747
          %3749 = vdwg.mxu0
          %3750 = vst [vmem:[#allocation11] sm:$0xff] %v3748
        $region68: #{bilstm_forward.1} parent=55 // pred_fallthru
          _
        // Predicated region
        $region69: #{bilstm_forward.1} parent=55 // pred_check
          %p3751 = pneg %p234
        $region70: #{bilstm_forward.1} parent=55 // pred_check_branch
          %3753 = sbr.rel (%p3751) target = $region72
        $region71: #{bilstm_forward.1} parent=55 // pred_region
          %3755 = vsyncadd [#allocation10], 0
          %s3757 = sshll.u32 [#allocation11], 4
          %s3758 = int_to_ptr.vmem [resolvable:$true] %s3757
          %s3759 = sshll.u32 %s9, 4
          %s3760 = int_to_ptr.hbm [resolvable:$true] %s3759
          %3762 = dma.vmem_to_hbm [thread:$0]  %s3758, 128, %s3760, [#allocation10]
        $region72: #{bilstm_forward.1} parent=55 // pred_fallthru
          _
        // Predicated region
        $region73: #{bilstm_forward.1} parent=55 // pred_check
          %p3763 = pneg %p234
        $region74: #{bilstm_forward.1} parent=55 // pred_check_branch
          %3765 = sbr.rel (%p3763) target = $region76
        $region75: #{bilstm_forward.1} parent=55 // pred_region
          %3767 = dma.done [#allocation10], 128
        $region76: #{bilstm_forward.1} parent=55 // pred_fallthru
          _
      $region56: #{bilstm_forward.1} parent=5 // pred_fallthru
        _
      %p3768 = scmp.le.s32.totalorder 2, %s17
      // Predicated region
      $region77: #{bilstm_forward.1} parent=5 // pred_check
        %p3769 = pneg %p3768
      $region78: #{bilstm_forward.1} parent=5 // pred_check_branch
        %3771 = sbr.rel (%p3769) target = $region80
      $region79: #{bilstm_forward.1} parent=5 // pred_region
        %s3772 = ssub.s32 %s17, 2
      $region80: #{bilstm_forward.1} parent=5 // pred_fallthru
        _
    $region6: #{bilstm_forward.1} parent=1 // loop_footer
      %s21 = sadd.s32 1, %s17
    $region7: #{bilstm_forward.1} parent=1 // loop_footer_branch
      %16 = sbr.rel target = $region3
    $region8: #{bilstm_forward.1} parent=1 // loop_exit
      _
    %3773 = vsyncpa [#allocation9], 1
    %s3774 = scalar_lea.sflag [#allocation9], 1
    %3775 = vsyncpa %s3774, 1
    %3776 = vsyncpa [#allocation10], 1
    %s3777 = scalar_lea.sflag [#allocation10], 1
    %3778 = vsyncpa %s3777, 1

</llo_original>
